<compile_context>
chip_gen: v7x
topology: tpu7x:2x2x1
jax: 0.10.0
libtpu: 0.0.40
codegen_flags: <defaults>
</compile_context>

<pallas_src>
import jax
import jax.numpy as jnp
from jax.experimental import pallas as pl
from jax.experimental.pallas import tpu as pltpu

BN_EPS = 1e-5
LANE_PAD = 128  # lane-padded channel width for conv weights / outputs

_PARALLEL_1D = pltpu.CompilerParams(dimension_semantics=("parallel",))


# ---------------------------------------------------------------------------
# In-kernel helpers
# ---------------------------------------------------------------------------
def _pad_lanes(v, cp):
    """Zero-pad the last (lane) dim of a value to `cp` channels."""
    c = v.shape[-1]
    if c == cp:
        return v
    pad = jnp.zeros(v.shape[:-1] + (cp - c,), v.dtype)
    return jnp.concatenate([v, pad], axis=-1)


def _im2col_slab(y):
    """(H, W, C) activation -> (H*W, 9*C) im2col slab for a 3x3 / stride-1 / pad-1 conv.

    Tap (dy, dx) of the slab holds y[i+dy-1, j+dx-1] (zero outside the image), so one matmul
    against the tap-major (9*C, Cout) weight slab computes the whole convolution.  The zero
    halo is built in-kernel (no wrapper-side jnp.pad / extra HBM pass); the 3 column-shifted
    variants are materialized once and reused across the 3 row shifts.
    """
    h, w, c = y.shape
    zr = jnp.zeros((1, w, c), y.dtype)
    zc = jnp.zeros((h + 2, 1, c), y.dtype)
    yp = jnp.concatenate([zr, y, zr], axis=0)            # zero halo along rows   -> (h+2, w, c)
    yp = jnp.concatenate([zc, yp, zc], axis=1)           # zero halo along cols   -> (h+2, w+2, c)
    cols = [yp[:, dx:dx + w, :] for dx in range(3)]      # 3 column-shifted variants (reused)
    parts = [cols[dx][dy:dy + h].reshape(h * w, c)       # row shifts are cheap axis-0 slices
             for dy in range(3) for dx in range(3)]
    return jnp.concatenate(parts, axis=-1)               # (h*w, 9c); 128-aligned lane concat


def _conv_core(y, w_ref, b_ref, pre_ref, sum_ref, ssq_ref):
    """Single-matmul conv3x3 + bias + one-pass BN batch-stat partials (f32 accumulation)."""
    slab = _im2col_slab(y).astype(jnp.bfloat16)                       # (H*W, 9*128) bf16
    acc = jnp.dot(slab, w_ref[...], preferred_element_type=jnp.float32) + b_ref[...]
    pre_ref[0] = acc                                                  # lane-dense (H*W, 128)
    sum_ref[0] = jnp.sum(acc, axis=0, keepdims=True)
    ssq_ref[0] = jnp.sum(acc * acc, axis=0, keepdims=True)


# ---------------------------------------------------------------------------
# Pallas kernels
# ---------------------------------------------------------------------------
def _conv_bias_stats_kernel(x_ref, w_ref, b_ref, pre_ref, sum_ref, ssq_ref):
    """conv3x3 + bias of one image + per-image BN batch-stat partials."""
    y = _pad_lanes(x_ref[0], w_ref.shape[-1])             # lane-pad Cin -> 128 in-kernel
    _conv_core(y, w_ref, b_ref, pre_ref, sum_ref, ssq_ref)


def _bnrelu_conv_bias_stats_kernel(p_ref, sc_ref, sh_ref, w_ref, b_ref,
                                   pre_ref, sum_ref, ssq_ref):
    """Previous ConvBlock's BN affine + ReLU (fused), then conv3x3 + bias + stats."""
    y = jnp.maximum(p_ref[0] * sc_ref[...] + sh_ref[...], 0.0)        # (H, W, 128)
    _conv_core(y, w_ref, b_ref, pre_ref, sum_ref, ssq_ref)


def _bnrelu_upsample_kernel(p_ref, sc_ref, sh_ref, o_ref):
    """BN affine + ReLU, then bilinear x2 upsample (align_corners=False), fully interleaved.

    Emits an (H, 2, W, 2*C) block: the wrapper reshape to (2H, 2W, C) is a free row-major
    reinterpretation, so no XLA interleave pass over the largest tensor is needed.
    """
    c = sc_ref.shape[-1]
    y = jnp.maximum(p_ref[0][:, :, :c] * sc_ref[...] + sh_ref[...], 0.0)   # (H, W, c)
    h, w, _ = y.shape
    # columns: out[2j] = .25*y[j-1] + .75*y[j]; out[2j+1] = .75*y[j] + .25*y[j+1] (edge-clamped)
    yl = jnp.concatenate([y[:, :1, :], y[:, :w - 1, :]], axis=1)
    yr = jnp.concatenate([y[:, 1:, :], y[:, w - 1:, :]], axis=1)
    u = jnp.concatenate([0.25 * yl + 0.75 * y, 0.75 * y + 0.25 * yr], axis=-1)  # (H, W, 2c)
    # rows: same stencil on the column-upsampled slab (separable bilinear)
    uu = jnp.concatenate([u[:1], u[:h - 1]], axis=0)
    ud = jnp.concatenate([u[1:], u[h - 1:]], axis=0)
    r_even = 0.25 * uu + 0.75 * u                         # output rows 2i
    r_odd = 0.75 * u + 0.25 * ud                          # output rows 2i + 1
    o_ref[0] = jnp.concatenate([r_even[:, None], r_odd[:, None]], axis=1)   # (H, 2, W, 2c)


# ---------------------------------------------------------------------------
# pallas_call wrappers
# ---------------------------------------------------------------------------
def _conv_block_pre(x, w9, bias, *, prev_scale=None, prev_shift=None):
    """Fused conv3x3(stride1,pad1)+bias + BN batch-stat partials over NHWC images.

    If prev_scale/prev_shift are given, the previous ConvBlock's BN + ReLU is applied in-kernel
    first.  grid=(N,) marked "parallel" so images shard across TensorCores (megacore / v7x).
    """
    n, h, w, cin = x.shape
    cp = w9.shape[-1]
    m = h * w
    out_shape = [
        jax.ShapeDtypeStruct((n, m, cp), jnp.float32),     # conv pre-activation (lane-dense)
        jax.ShapeDtypeStruct((n, 1, cp), jnp.float32),     # per-image sum
        jax.ShapeDtypeStruct((n, 1, cp), jnp.float32),     # per-image sum of squares
    ]
    out_specs = [
        pl.BlockSpec((1, m, cp), lambda i: (i, 0, 0)),
        pl.BlockSpec((1, 1, cp), lambda i: (i, 0, 0)),
        pl.BlockSpec((1, 1, cp), lambda i: (i, 0, 0)),
    ]
    x_spec = pl.BlockSpec((1, h, w, cin), lambda i: (i, 0, 0, 0))
    w_spec = pl.BlockSpec(w9.shape, lambda i: (0, 0))
    b_spec = pl.BlockSpec((1, cp), lambda i: (0, 0))

    if prev_scale is None:
        return pl.pallas_call(
            _conv_bias_stats_kernel, grid=(n,),
            in_specs=[x_spec, w_spec, b_spec],
            out_specs=out_specs, out_shape=out_shape,
            compiler_params=_PARALLEL_1D,
        )(x, w9, bias)

    s_spec = pl.BlockSpec((1, cp), lambda i: (0, 0))
    return pl.pallas_call(
        _bnrelu_conv_bias_stats_kernel, grid=(n,),
        in_specs=[x_spec, s_spec, s_spec, w_spec, b_spec],
        out_specs=out_specs, out_shape=out_shape,
        compiler_params=_PARALLEL_1D,
    )(x, prev_scale, prev_shift, w9, bias)


def _bnrelu_upsample(pre_img, scale, shift, c_out):
    n, h, w, cp = pre_img.shape
    out = pl.pallas_call(
        _bnrelu_upsample_kernel, grid=(n,),
        in_specs=[
            pl.BlockSpec((1, h, w, cp), lambda i: (i, 0, 0, 0)),
            pl.BlockSpec((1, c_out), lambda i: (0, 0)),
            pl.BlockSpec((1, c_out), lambda i: (0, 0)),
        ],
        out_specs=pl.BlockSpec((1, h, 2, w, 2 * c_out), lambda i: (i, 0, 0, 0, 0)),
        out_shape=jax.ShapeDtypeStruct((n, h, 2, w, 2 * c_out), jnp.float32),
        compiler_params=_PARALLEL_1D,
    )(pre_img, scale, shift)
    # (n, h, 2, w, 2, c_out) -> (n, 2h, 2w, c_out): pure row-major reinterpretation (free).
    return out.reshape(n, 2 * h, 2 * w, c_out)


# ---------------------------------------------------------------------------
# BN finalize (cross-image reduction of the one-pass partials) and full forward
# ---------------------------------------------------------------------------
def _bn_scale_shift(ssum, ssq, gamma, beta, count, pad_to=None):
    c = gamma.shape[0]
    s = jnp.sum(ssum, axis=0).reshape(-1)[:c]
    sq = jnp.sum(ssq, axis=0).reshape(-1)[:c]
    mean = s / count
    var = jnp.maximum(sq / count - mean * mean, 0.0)       # one-pass, f32, clamped
    scale = gamma * jax.lax.rsqrt(var + BN_EPS)
    shift = beta - mean * scale
    if pad_to is not None and pad_to > c:                  # padded channels stay exactly zero
        scale = jnp.pad(scale, (0, pad_to - c))
        shift = jnp.pad(shift, (0, pad_to - c))
    return scale.reshape(1, -1), shift.reshape(1, -1)


def decoder_block_forward(params, x_nchw):
    x = jnp.transpose(x_nchw, (0, 2, 3, 1)).astype(jnp.float32)       # NCHW -> NHWC
    n, h, w, cin = x.shape
    c1 = params["w1"].shape[-1]
    c2 = params["w2"].shape[-1]
    assert w % 8 == 0, "in-kernel im2col fold expects image width to be a multiple of 8"
    assert max(cin, c1, c2) <= LANE_PAD, "TODO(synk): channel tiling for >128 channels"

    def prep_w(wt):  # (3,3,ci,co) HWIO -> tap-major lane-padded (9*128, 128) bf16 slab
        _, _, ci, co = wt.shape
        wp = jnp.pad(wt, ((0, 0), (0, 0), (0, LANE_PAD - ci), (0, LANE_PAD - co)))
        return wp.reshape(9 * LANE_PAD, LANE_PAD).astype(jnp.bfloat16)

    w1p, w2p = prep_w(params["w1"]), prep_w(params["w2"])
    b1p = jnp.pad(params["b1"], (0, LANE_PAD - c1)).reshape(1, LANE_PAD)
    b2p = jnp.pad(params["b2"], (0, LANE_PAD - c2)).reshape(1, LANE_PAD)
    count = float(n * h * w)

    # ConvBlock 1: conv + bias (+ BN1 batch-stat partials); its BN+ReLU is fused into kernel 2.
    pre1, s1, q1 = _conv_block_pre(x, w1p, b1p)
    sc1, sh1 = _bn_scale_shift(s1, q1, params["g1"], params["be1"], count, pad_to=LANE_PAD)

    # ConvBlock 2: BN1 + ReLU applied in-kernel, then conv + bias (+ BN2 stat partials).
    pre2, s2, q2 = _conv_block_pre(pre1.reshape(n, h, w, LANE_PAD), w2p, b2p,
                                   prev_scale=sc1, prev_shift=sh1)
    sc2, sh2 = _bn_scale_shift(s2, q2, params["g2"], params["be2"], count)

    # BN2 + ReLU + bilinear x2 upsample (align_corners=False), fused in one kernel.
    up = _bnrelu_upsample(pre2.reshape(n, h, w, LANE_PAD), sc2, sh2, c2)
    return jnp.transpose(up, (0, 3, 1, 2))                            # NHWC -> NCHW


# ---------------------------------------------------------------------------
# Deterministic parameters and pure-JAX reference (sanity check)
# ---------------------------------------------------------------------------
def _bf16_round(x):
    return x.astype(jnp.bfloat16).astype(jnp.float32)


def init_params(key, in_channels, out_channels):
    c1 = in_channels // 4
    ks = jax.random.split(key, 8)
    w1 = _bf16_round(jax.random.normal(ks[0], (3, 3, in_channels, c1), jnp.float32)
                     * (2.0 / (9 * in_channels)) ** 0.5)
    w2 = _bf16_round(jax.random.normal(ks[4], (3, 3, c1, out_channels), jnp.float32)
                     * (2.0 / (9 * c1)) ** 0.5)
    return {
        "w1": w1,
        "b1": 0.1 * jax.random.normal(ks[1], (c1,), jnp.float32),
        "g1": 1.0 + 0.1 * jax.random.normal(ks[2], (c1,), jnp.float32),
        "be1": 0.1 * jax.random.normal(ks[3], (c1,), jnp.float32),
        "w2": w2,
        "b2": 0.1 * jax.random.normal(ks[5], (out_channels,), jnp.float32),
        "g2": 1.0 + 0.1 * jax.random.normal(ks[6], (out_channels,), jnp.float32),
        "be2": 0.1 * jax.random.normal(ks[7], (out_channels,), jnp.float32),
    }


def _reference_forward(params, x_nchw):
    """Pure-JAX reference (same bf16 operand rounding as the Pallas MXU path)."""
    x = _bf16_round(jnp.transpose(x_nchw, (0, 2, 3, 1)).astype(jnp.float32))

    def conv_block(y, w, b, g, be):
        pre = jax.lax.conv_general_dilated(
            y, w, window_strides=(1, 1), padding=((1, 1), (1, 1)),
            dimension_numbers=("NHWC", "HWIO", "NHWC"),
            precision=jax.lax.Precision.HIGHEST) + b
        mean = jnp.mean(pre, axis=(0, 1, 2))
        var = jnp.mean((pre - mean) ** 2, axis=(0, 1, 2))
        return jnp.maximum((pre - mean) * jax.lax.rsqrt(var + BN_EPS) * g + be, 0.0)

    y1 = conv_block(x, params["w1"], params["b1"], params["g1"], params["be1"])
    y2 = conv_block(_bf16_round(y1), params["w2"], params["b2"], params["g2"], params["be2"])

    def up2x(t):
        n_, hh, ww, cc = t.shape
        rp = jnp.concatenate([t[:, :1], t[:, :-1]], axis=1)
        rn = jnp.concatenate([t[:, 1:], t[:, -1:]], axis=1)
        t = jnp.stack([0.25 * rp + 0.75 * t, 0.75 * t + 0.25 * rn],
                      axis=2).reshape(n_, 2 * hh, ww, cc)
        cp = jnp.concatenate([t[:, :, :1], t[:, :, :-1]], axis=2)
        cn = jnp.concatenate([t[:, :, 1:], t[:, :, -1:]], axis=2)
        return jnp.stack([0.25 * cp + 0.75 * t, 0.75 * t + 0.25 * cn],
                         axis=3).reshape(n_, 2 * hh, 2 * ww, cc)

    return jnp.transpose(up2x(y2), (0, 3, 1, 2))


# ---------------------------------------------------------------------------
if __name__ == "__main__":
    key = jax.random.PRNGKey(0)
    k_param, k_input = jax.random.split(key)

    N, IN_C, OUT_C, H, W = 2, 64, 32, 16, 16
    x = jax.random.normal(k_input, (N, IN_C, H, W), jnp.float32)
    params = init_params(k_param, IN_C, OUT_C)

    fwd = jax.jit(decoder_block_forward)
    out = fwd(params, x)
    jax.block_until_ready(out)

    assert out.shape == (N, OUT_C, 2 * H, 2 * W), out.shape
    assert bool(jnp.isfinite(out).all())

    ref = _reference_forward(params, x)
    err = float(jnp.max(jnp.abs(out - ref)))
    tol = 2e-2 * max(1.0, float(jnp.max(jnp.abs(ref))))
    assert err <= tol, (err, tol)

    print("KERNEL_OK")
</pallas_src>

<mosaic_0001>
module attributes {stable_mosaic.version = 11 : i64} {
  func.func @_conv_bias_stats_kernel(%arg0: i32, %arg1: memref<1x16x16x64xf32, #tpu.memory_space<vmem>>, %arg2: memref<1152x128xbf16, #tpu.memory_space<vmem>>, %arg3: memref<1x128xf32, #tpu.memory_space<vmem>>, %arg4: memref<1x256x128xf32, #tpu.memory_space<vmem>>, %arg5: memref<1x1x128xf32, #tpu.memory_space<vmem>>, %arg6: memref<1x1x128xf32, #tpu.memory_space<vmem>>) attributes {dimension_semantics = [#tpu.dimension_semantics<parallel>], iteration_bounds = array<i64: 2>, scalar_prefetch = 0 : i64, scratch_operands = 0 : i64, tpu.core_type = #tpu.core_type<tc>, window_params = [{transform_indices = @transform_0, window_bounds = array<i64: 1, 16, 16, 64>}, {pipeline_mode = #tpu.pipeline_mode<synchronous>, transform_indices = @transform_1, window_bounds = array<i64: 1152, 128>}, {pipeline_mode = #tpu.pipeline_mode<synchronous>, transform_indices = @transform_2, window_bounds = array<i64: 1, 128>}, {transform_indices = @transform_3, window_bounds = array<i64: 1, 256, 128>}, {transform_indices = @transform_4, window_bounds = array<i64: 1, 1, 128>}, {transform_indices = @transform_5, window_bounds = array<i64: 1, 1, 128>}]} {
    %c0 = arith.constant 0 : index
    %c0_0 = arith.constant 0 : index
    %c0_1 = arith.constant 0 : index
    %c0_2 = arith.constant 0 : index
    %0 = vector.load %arg1[%c0, %c0_0, %c0_1, %c0_2] : memref<1x16x16x64xf32, #tpu.memory_space<vmem>>, vector<1x16x16x64xf32>
    %1 = vector.shape_cast %0 : vector<1x16x16x64xf32> to vector<16x16x64xf32>
    %cst = arith.constant 0.000000e+00 : f32
    %2 = vector.broadcast %cst : f32 to vector<16x16x64xf32>
    %3 = tpu.concatenate %1, %2 in 2 : vector<16x16x64xf32>, vector<16x16x64xf32> -> vector<16x16x128xf32>
    %cst_3 = arith.constant 0.000000e+00 : f32
    %4 = vector.broadcast %cst_3 : f32 to vector<1x16x128xf32>
    %cst_4 = arith.constant 0.000000e+00 : f32
    %5 = vector.broadcast %cst_4 : f32 to vector<18x1x128xf32>
    %6 = tpu.concatenate %4, %3, %4 in 0 : vector<1x16x128xf32>, vector<16x16x128xf32>, vector<1x16x128xf32> -> vector<18x16x128xf32>
    %7 = tpu.concatenate %5, %6, %5 in 1 : vector<18x1x128xf32>, vector<18x16x128xf32>, vector<18x1x128xf32> -> vector<18x18x128xf32>
    %8 = vector.extract_strided_slice %7 {offsets = [0, 0, 0], sizes = [18, 16, 128], strides = [1, 1, 1]} : vector<18x18x128xf32> to vector<18x16x128xf32>
    %9 = vector.extract_strided_slice %7 {offsets = [0, 1, 0], sizes = [18, 16, 128], strides = [1, 1, 1]} : vector<18x18x128xf32> to vector<18x16x128xf32>
    %10 = vector.extract_strided_slice %7 {offsets = [0, 2, 0], sizes = [18, 16, 128], strides = [1, 1, 1]} : vector<18x18x128xf32> to vector<18x16x128xf32>
    %11 = vector.extract_strided_slice %8 {offsets = [0, 0, 0], sizes = [16, 16, 128], strides = [1, 1, 1]} : vector<18x16x128xf32> to vector<16x16x128xf32>
    %12 = vector.shape_cast %11 : vector<16x16x128xf32> to vector<256x128xf32>
    %13 = vector.extract_strided_slice %9 {offsets = [0, 0, 0], sizes = [16, 16, 128], strides = [1, 1, 1]} : vector<18x16x128xf32> to vector<16x16x128xf32>
    %14 = vector.shape_cast %13 : vector<16x16x128xf32> to vector<256x128xf32>
    %15 = vector.extract_strided_slice %10 {offsets = [0, 0, 0], sizes = [16, 16, 128], strides = [1, 1, 1]} : vector<18x16x128xf32> to vector<16x16x128xf32>
    %16 = vector.shape_cast %15 : vector<16x16x128xf32> to vector<256x128xf32>
    %17 = vector.extract_strided_slice %8 {offsets = [1, 0, 0], sizes = [16, 16, 128], strides = [1, 1, 1]} : vector<18x16x128xf32> to vector<16x16x128xf32>
    %18 = vector.shape_cast %17 : vector<16x16x128xf32> to vector<256x128xf32>
    %19 = vector.extract_strided_slice %9 {offsets = [1, 0, 0], sizes = [16, 16, 128], strides = [1, 1, 1]} : vector<18x16x128xf32> to vector<16x16x128xf32>
    %20 = vector.shape_cast %19 : vector<16x16x128xf32> to vector<256x128xf32>
    %21 = vector.extract_strided_slice %10 {offsets = [1, 0, 0], sizes = [16, 16, 128], strides = [1, 1, 1]} : vector<18x16x128xf32> to vector<16x16x128xf32>
    %22 = vector.shape_cast %21 : vector<16x16x128xf32> to vector<256x128xf32>
    %23 = vector.extract_strided_slice %8 {offsets = [2, 0, 0], sizes = [16, 16, 128], strides = [1, 1, 1]} : vector<18x16x128xf32> to vector<16x16x128xf32>
    %24 = vector.shape_cast %23 : vector<16x16x128xf32> to vector<256x128xf32>
    %25 = vector.extract_strided_slice %9 {offsets = [2, 0, 0], sizes = [16, 16, 128], strides = [1, 1, 1]} : vector<18x16x128xf32> to vector<16x16x128xf32>
    %26 = vector.shape_cast %25 : vector<16x16x128xf32> to vector<256x128xf32>
    %27 = vector.extract_strided_slice %10 {offsets = [2, 0, 0], sizes = [16, 16, 128], strides = [1, 1, 1]} : vector<18x16x128xf32> to vector<16x16x128xf32>
    %28 = vector.shape_cast %27 : vector<16x16x128xf32> to vector<256x128xf32>
    %29 = tpu.concatenate %12, %14, %16, %18, %20, %22, %24, %26, %28 in 1 : vector<256x128xf32>, vector<256x128xf32>, vector<256x128xf32>, vector<256x128xf32>, vector<256x128xf32>, vector<256x128xf32>, vector<256x128xf32>, vector<256x128xf32>, vector<256x128xf32> -> vector<256x1152xf32>
    %30 = arith.truncf %29 : vector<256x1152xf32> to vector<256x1152xbf16>
    %c0_5 = arith.constant 0 : index
    %c0_6 = arith.constant 0 : index
    %31 = vector.load %arg2[%c0_5, %c0_6] : memref<1152x128xbf16, #tpu.memory_space<vmem>>, vector<1152x128xbf16>
    %cst_7 = arith.constant dense<0.000000e+00> : vector<256x128xf32>
    %32 = tpu.matmul %30, %31, %cst_7 {dimension_numbers = #tpu.dot_dimension_numbers<[1], [0], [0], [1], [0, 0, 1, 1], [], []>} : vector<256x1152xbf16>, vector<1152x128xbf16>, vector<256x128xf32> -> vector<256x128xf32>
    %c0_8 = arith.constant 0 : index
    %c0_9 = arith.constant 0 : index
    %33 = vector.load %arg3[%c0_8, %c0_9] : memref<1x128xf32, #tpu.memory_space<vmem>>, vector<1x128xf32>
    %34 = vector.broadcast %33 : vector<1x128xf32> to vector<256x128xf32>
    %35 = arith.addf %32, %34 : vector<256x128xf32>
    %c0_10 = arith.constant 0 : index
    %c0_11 = arith.constant 0 : index
    %c0_12 = arith.constant 0 : index
    %36 = vector.load %arg4[%c0_10, %c0_11, %c0_12] : memref<1x256x128xf32, #tpu.memory_space<vmem>>, vector<1x256x128xf32>
    %37 = vector.shape_cast %36 : vector<1x256x128xf32> to vector<256x128xf32>
    %38 = vector.shape_cast %35 : vector<256x128xf32> to vector<1x256x128xf32>
    tpu.vector_store %arg4[%c0_10, %c0_11, %c0_12], %38 {strides = array<i32>} : memref<1x256x128xf32, #tpu.memory_space<vmem>>, vector<1x256x128xf32>,
    %cst_13 = arith.constant dense<0.000000e+00> : vector<128xf32>
    %39 = vector.multi_reduction <add>, %35, %cst_13 [0] : vector<256x128xf32> to vector<128xf32>
    %40 = vector.shape_cast %39 : vector<128xf32> to vector<1x128xf32>
    %c0_14 = arith.constant 0 : index
    %c0_15 = arith.constant 0 : index
    %c0_16 = arith.constant 0 : index
    %41 = vector.load %arg5[%c0_14, %c0_15, %c0_16] : memref<1x1x128xf32, #tpu.memory_space<vmem>>, vector<1x1x128xf32>
    %42 = vector.shape_cast %41 : vector<1x1x128xf32> to vector<1x128xf32>
    %43 = vector.shape_cast %40 : vector<1x128xf32> to vector<1x1x128xf32>
    tpu.vector_store %arg5[%c0_14, %c0_15, %c0_16], %43 {strides = array<i32>} : memref<1x1x128xf32, #tpu.memory_space<vmem>>, vector<1x1x128xf32>,
    %44 = arith.mulf %35, %35 : vector<256x128xf32>
    %cst_17 = arith.constant dense<0.000000e+00> : vector<128xf32>
    %45 = vector.multi_reduction <add>, %44, %cst_17 [0] : vector<256x128xf32> to vector<128xf32>
    %46 = vector.shape_cast %45 : vector<128xf32> to vector<1x128xf32>
    %c0_18 = arith.constant 0 : index
    %c0_19 = arith.constant 0 : index
    %c0_20 = arith.constant 0 : index
    %47 = vector.load %arg6[%c0_18, %c0_19, %c0_20] : memref<1x1x128xf32, #tpu.memory_space<vmem>>, vector<1x1x128xf32>
    %48 = vector.shape_cast %47 : vector<1x1x128xf32> to vector<1x128xf32>
    %49 = vector.shape_cast %46 : vector<1x128xf32> to vector<1x1x128xf32>
    tpu.vector_store %arg6[%c0_18, %c0_19, %c0_20], %49 {strides = array<i32>} : memref<1x1x128xf32, #tpu.memory_space<vmem>>, vector<1x1x128xf32>,
    return
  }
  func.func @transform_0(%arg0: i32) -> (i32, i32, i32, i32) {
    %c0_i32 = arith.constant 0 : i32
    %c0_i32_0 = arith.constant 0 : i32
    %c0_i32_1 = arith.constant 0 : i32
    %c0_i32_2 = arith.constant 0 : i32
    return %arg0, %c0_i32, %c0_i32_0, %c0_i32_1 : i32, i32, i32, i32
  }
  func.func @transform_1(%arg0: i32) -> (i32, i32) {
    %c0_i32 = arith.constant 0 : i32
    %c0_i32_0 = arith.constant 0 : i32
    %c0_i32_1 = arith.constant 0 : i32
    return %c0_i32, %c0_i32_0 : i32, i32
  }
  func.func @transform_2(%arg0: i32) -> (i32, i32) {
    %c0_i32 = arith.constant 0 : i32
    %c0_i32_0 = arith.constant 0 : i32
    %c0_i32_1 = arith.constant 0 : i32
    return %c0_i32, %c0_i32_0 : i32, i32
  }
  func.func @transform_3(%arg0: i32) -> (i32, i32, i32) {
    %c0_i32 = arith.constant 0 : i32
    %c0_i32_0 = arith.constant 0 : i32
    %c0_i32_1 = arith.constant 0 : i32
    return %arg0, %c0_i32, %c0_i32_0 : i32, i32, i32
  }
  func.func @transform_4(%arg0: i32) -> (i32, i32, i32) {
    %c0_i32 = arith.constant 0 : i32
    %c0_i32_0 = arith.constant 0 : i32
    %c0_i32_1 = arith.constant 0 : i32
    return %arg0, %c0_i32, %c0_i32_0 : i32, i32, i32
  }
  func.func @transform_5(%arg0: i32) -> (i32, i32, i32) {
    %c0_i32 = arith.constant 0 : i32
    %c0_i32_0 = arith.constant 0 : i32
    %c0_i32_1 = arith.constant 0 : i32
    return %arg0, %c0_i32, %c0_i32_0 : i32, i32, i32
  }
}

module attributes {stable_mosaic.version = 11 : i64} {
  func.func @_bnrelu_conv_bias_stats_kernel(%arg0: i32, %arg1: memref<1x16x16x128xf32, #tpu.memory_space<vmem>>, %arg2: memref<1x128xf32, #tpu.memory_space<vmem>>, %arg3: memref<1x128xf32, #tpu.memory_space<vmem>>, %arg4: memref<1152x128xbf16, #tpu.memory_space<vmem>>, %arg5: memref<1x128xf32, #tpu.memory_space<vmem>>, %arg6: memref<1x256x128xf32, #tpu.memory_space<vmem>>, %arg7: memref<1x1x128xf32, #tpu.memory_space<vmem>>, %arg8: memref<1x1x128xf32, #tpu.memory_space<vmem>>) attributes {dimension_semantics = [#tpu.dimension_semantics<parallel>], iteration_bounds = array<i64: 2>, scalar_prefetch = 0 : i64, scratch_operands = 0 : i64, tpu.core_type = #tpu.core_type<tc>, window_params = [{transform_indices = @transform_0, window_bounds = array<i64: 1, 16, 16, 128>}, {pipeline_mode = #tpu.pipeline_mode<synchronous>, transform_indices = @transform_1, window_bounds = array<i64: 1, 128>}, {pipeline_mode = #tpu.pipeline_mode<synchronous>, transform_indices = @transform_2, window_bounds = array<i64: 1, 128>}, {pipeline_mode = #tpu.pipeline_mode<synchronous>, transform_indices = @transform_3, window_bounds = array<i64: 1152, 128>}, {pipeline_mode = #tpu.pipeline_mode<synchronous>, transform_indices = @transform_4, window_bounds = array<i64: 1, 128>}, {transform_indices = @transform_5, window_bounds = array<i64: 1, 256, 128>}, {transform_indices = @transform_6, window_bounds = array<i64: 1, 1, 128>}, {transform_indices = @transform_7, window_bounds = array<i64: 1, 1, 128>}]} {
    %c0 = arith.constant 0 : index
    %c0_0 = arith.constant 0 : index
    %c0_1 = arith.constant 0 : index
    %c0_2 = arith.constant 0 : index
    %0 = vector.load %arg1[%c0, %c0_0, %c0_1, %c0_2] : memref<1x16x16x128xf32, #tpu.memory_space<vmem>>, vector<1x16x16x128xf32>
    %1 = vector.shape_cast %0 : vector<1x16x16x128xf32> to vector<16x16x128xf32>
    %c0_3 = arith.constant 0 : index
    %c0_4 = arith.constant 0 : index
    %2 = vector.load %arg2[%c0_3, %c0_4] : memref<1x128xf32, #tpu.memory_space<vmem>>, vector<1x128xf32>
    %3 = vector.shape_cast %2 : vector<1x128xf32> to vector<1x1x128xf32>
    %4 = vector.broadcast %3 : vector<1x1x128xf32> to vector<16x16x128xf32>
    %5 = arith.mulf %1, %4 : vector<16x16x128xf32>
    %c0_5 = arith.constant 0 : index
    %c0_6 = arith.constant 0 : index
    %6 = vector.load %arg3[%c0_5, %c0_6] : memref<1x128xf32, #tpu.memory_space<vmem>>, vector<1x128xf32>
    %7 = vector.shape_cast %6 : vector<1x128xf32> to vector<1x1x128xf32>
    %8 = vector.broadcast %7 : vector<1x1x128xf32> to vector<16x16x128xf32>
    %9 = arith.addf %5, %8 : vector<16x16x128xf32>
    %cst = arith.constant 0.000000e+00 : f32
    %10 = vector.broadcast %cst : f32 to vector<16x16x128xf32>
    %11 = arith.maximumf %9, %10 : vector<16x16x128xf32>
    %cst_7 = arith.constant 0.000000e+00 : f32
    %12 = vector.broadcast %cst_7 : f32 to vector<1x16x128xf32>
    %cst_8 = arith.constant 0.000000e+00 : f32
    %13 = vector.broadcast %cst_8 : f32 to vector<18x1x128xf32>
    %14 = tpu.concatenate %12, %11, %12 in 0 : vector<1x16x128xf32>, vector<16x16x128xf32>, vector<1x16x128xf32> -> vector<18x16x128xf32>
    %15 = tpu.concatenate %13, %14, %13 in 1 : vector<18x1x128xf32>, vector<18x16x128xf32>, vector<18x1x128xf32> -> vector<18x18x128xf32>
    %16 = vector.extract_strided_slice %15 {offsets = [0, 0, 0], sizes = [18, 16, 128], strides = [1, 1, 1]} : vector<18x18x128xf32> to vector<18x16x128xf32>
    %17 = vector.extract_strided_slice %15 {offsets = [0, 1, 0], sizes = [18, 16, 128], strides = [1, 1, 1]} : vector<18x18x128xf32> to vector<18x16x128xf32>
    %18 = vector.extract_strided_slice %15 {offsets = [0, 2, 0], sizes = [18, 16, 128], strides = [1, 1, 1]} : vector<18x18x128xf32> to vector<18x16x128xf32>
    %19 = vector.extract_strided_slice %16 {offsets = [0, 0, 0], sizes = [16, 16, 128], strides = [1, 1, 1]} : vector<18x16x128xf32> to vector<16x16x128xf32>
    %20 = vector.shape_cast %19 : vector<16x16x128xf32> to vector<256x128xf32>
    %21 = vector.extract_strided_slice %17 {offsets = [0, 0, 0], sizes = [16, 16, 128], strides = [1, 1, 1]} : vector<18x16x128xf32> to vector<16x16x128xf32>
    %22 = vector.shape_cast %21 : vector<16x16x128xf32> to vector<256x128xf32>
    %23 = vector.extract_strided_slice %18 {offsets = [0, 0, 0], sizes = [16, 16, 128], strides = [1, 1, 1]} : vector<18x16x128xf32> to vector<16x16x128xf32>
    %24 = vector.shape_cast %23 : vector<16x16x128xf32> to vector<256x128xf32>
    %25 = vector.extract_strided_slice %16 {offsets = [1, 0, 0], sizes = [16, 16, 128], strides = [1, 1, 1]} : vector<18x16x128xf32> to vector<16x16x128xf32>
    %26 = vector.shape_cast %25 : vector<16x16x128xf32> to vector<256x128xf32>
    %27 = vector.extract_strided_slice %17 {offsets = [1, 0, 0], sizes = [16, 16, 128], strides = [1, 1, 1]} : vector<18x16x128xf32> to vector<16x16x128xf32>
    %28 = vector.shape_cast %27 : vector<16x16x128xf32> to vector<256x128xf32>
    %29 = vector.extract_strided_slice %18 {offsets = [1, 0, 0], sizes = [16, 16, 128], strides = [1, 1, 1]} : vector<18x16x128xf32> to vector<16x16x128xf32>
    %30 = vector.shape_cast %29 : vector<16x16x128xf32> to vector<256x128xf32>
    %31 = vector.extract_strided_slice %16 {offsets = [2, 0, 0], sizes = [16, 16, 128], strides = [1, 1, 1]} : vector<18x16x128xf32> to vector<16x16x128xf32>
    %32 = vector.shape_cast %31 : vector<16x16x128xf32> to vector<256x128xf32>
    %33 = vector.extract_strided_slice %17 {offsets = [2, 0, 0], sizes = [16, 16, 128], strides = [1, 1, 1]} : vector<18x16x128xf32> to vector<16x16x128xf32>
    %34 = vector.shape_cast %33 : vector<16x16x128xf32> to vector<256x128xf32>
    %35 = vector.extract_strided_slice %18 {offsets = [2, 0, 0], sizes = [16, 16, 128], strides = [1, 1, 1]} : vector<18x16x128xf32> to vector<16x16x128xf32>
    %36 = vector.shape_cast %35 : vector<16x16x128xf32> to vector<256x128xf32>
    %37 = tpu.concatenate %20, %22, %24, %26, %28, %30, %32, %34, %36 in 1 : vector<256x128xf32>, vector<256x128xf32>, vector<256x128xf32>, vector<256x128xf32>, vector<256x128xf32>, vector<256x128xf32>, vector<256x128xf32>, vector<256x128xf32>, vector<256x128xf32> -> vector<256x1152xf32>
    %38 = arith.truncf %37 : vector<256x1152xf32> to vector<256x1152xbf16>
    %c0_9 = arith.constant 0 : index
    %c0_10 = arith.constant 0 : index
    %39 = vector.load %arg4[%c0_9, %c0_10] : memref<1152x128xbf16, #tpu.memory_space<vmem>>, vector<1152x128xbf16>
    %cst_11 = arith.constant dense<0.000000e+00> : vector<256x128xf32>
    %40 = tpu.matmul %38, %39, %cst_11 {dimension_numbers = #tpu.dot_dimension_numbers<[1], [0], [0], [1], [0, 0, 1, 1], [], []>} : vector<256x1152xbf16>, vector<1152x128xbf16>, vector<256x128xf32> -> vector<256x128xf32>
    %c0_12 = arith.constant 0 : index
    %c0_13 = arith.constant 0 : index
    %41 = vector.load %arg5[%c0_12, %c0_13] : memref<1x128xf32, #tpu.memory_space<vmem>>, vector<1x128xf32>
    %42 = vector.broadcast %41 : vector<1x128xf32> to vector<256x128xf32>
    %43 = arith.addf %40, %42 : vector<256x128xf32>
    %c0_14 = arith.constant 0 : index
    %c0_15 = arith.constant 0 : index
    %c0_16 = arith.constant 0 : index
    %44 = vector.load %arg6[%c0_14, %c0_15, %c0_16] : memref<1x256x128xf32, #tpu.memory_space<vmem>>, vector<1x256x128xf32>
    %45 = vector.shape_cast %44 : vector<1x256x128xf32> to vector<256x128xf32>
    %46 = vector.shape_cast %43 : vector<256x128xf32> to vector<1x256x128xf32>
    tpu.vector_store %arg6[%c0_14, %c0_15, %c0_16], %46 {strides = array<i32>} : memref<1x256x128xf32, #tpu.memory_space<vmem>>, vector<1x256x128xf32>,
    %cst_17 = arith.constant dense<0.000000e+00> : vector<128xf32>
    %47 = vector.multi_reduction <add>, %43, %cst_17 [0] : vector<256x128xf32> to vector<128xf32>
    %48 = vector.shape_cast %47 : vector<128xf32> to vector<1x128xf32>
    %c0_18 = arith.constant 0 : index
    %c0_19 = arith.constant 0 : index
    %c0_20 = arith.constant 0 : index
    %49 = vector.load %arg7[%c0_18, %c0_19, %c0_20] : memref<1x1x128xf32, #tpu.memory_space<vmem>>, vector<1x1x128xf32>
    %50 = vector.shape_cast %49 : vector<1x1x128xf32> to vector<1x128xf32>
    %51 = vector.shape_cast %48 : vector<1x128xf32> to vector<1x1x128xf32>
    tpu.vector_store %arg7[%c0_18, %c0_19, %c0_20], %51 {strides = array<i32>} : memref<1x1x128xf32, #tpu.memory_space<vmem>>, vector<1x1x128xf32>,
    %52 = arith.mulf %43, %43 : vector<256x128xf32>
    %cst_21 = arith.constant dense<0.000000e+00> : vector<128xf32>
    %53 = vector.multi_reduction <add>, %52, %cst_21 [0] : vector<256x128xf32> to vector<128xf32>
    %54 = vector.shape_cast %53 : vector<128xf32> to vector<1x128xf32>
    %c0_22 = arith.constant 0 : index
    %c0_23 = arith.constant 0 : index
    %c0_24 = arith.constant 0 : index
    %55 = vector.load %arg8[%c0_22, %c0_23, %c0_24] : memref<1x1x128xf32, #tpu.memory_space<vmem>>, vector<1x1x128xf32>
    %56 = vector.shape_cast %55 : vector<1x1x128xf32> to vector<1x128xf32>
    %57 = vector.shape_cast %54 : vector<1x128xf32> to vector<1x1x128xf32>
    tpu.vector_store %arg8[%c0_22, %c0_23, %c0_24], %57 {strides = array<i32>} : memref<1x1x128xf32, #tpu.memory_space<vmem>>, vector<1x1x128xf32>,
    return
  }
  func.func @transform_0(%arg0: i32) -> (i32, i32, i32, i32) {
    %c0_i32 = arith.constant 0 : i32
    %c0_i32_0 = arith.constant 0 : i32
    %c0_i32_1 = arith.constant 0 : i32
    %c0_i32_2 = arith.constant 0 : i32
    return %arg0, %c0_i32, %c0_i32_0, %c0_i32_1 : i32, i32, i32, i32
  }
  func.func @transform_1(%arg0: i32) -> (i32, i32) {
    %c0_i32 = arith.constant 0 : i32
    %c0_i32_0 = arith.constant 0 : i32
    %c0_i32_1 = arith.constant 0 : i32
    return %c0_i32, %c0_i32_0 : i32, i32
  }
  func.func @transform_2(%arg0: i32) -> (i32, i32) {
    %c0_i32 = arith.constant 0 : i32
    %c0_i32_0 = arith.constant 0 : i32
    %c0_i32_1 = arith.constant 0 : i32
    return %c0_i32, %c0_i32_0 : i32, i32
  }
  func.func @transform_3(%arg0: i32) -> (i32, i32) {
    %c0_i32 = arith.constant 0 : i32
    %c0_i32_0 = arith.constant 0 : i32
    %c0_i32_1 = arith.constant 0 : i32
    return %c0_i32, %c0_i32_0 : i32, i32
  }
  func.func @transform_4(%arg0: i32) -> (i32, i32) {
    %c0_i32 = arith.constant 0 : i32
    %c0_i32_0 = arith.constant 0 : i32
    %c0_i32_1 = arith.constant 0 : i32
    return %c0_i32, %c0_i32_0 : i32, i32
  }
  func.func @transform_5(%arg0: i32) -> (i32, i32, i32) {
    %c0_i32 = arith.constant 0 : i32
    %c0_i32_0 = arith.constant 0 : i32
    %c0_i32_1 = arith.constant 0 : i32
    return %arg0, %c0_i32, %c0_i32_0 : i32, i32, i32
  }
  func.func @transform_6(%arg0: i32) -> (i32, i32, i32) {
    %c0_i32 = arith.constant 0 : i32
    %c0_i32_0 = arith.constant 0 : i32
    %c0_i32_1 = arith.constant 0 : i32
    return %arg0, %c0_i32, %c0_i32_0 : i32, i32, i32
  }
  func.func @transform_7(%arg0: i32) -> (i32, i32, i32) {
    %c0_i32 = arith.constant 0 : i32
    %c0_i32_0 = arith.constant 0 : i32
    %c0_i32_1 = arith.constant 0 : i32
    return %arg0, %c0_i32, %c0_i32_0 : i32, i32, i32
  }
}

module attributes {stable_mosaic.version = 11 : i64} {
  func.func @_bnrelu_upsample_kernel(%arg0: i32, %arg1: memref<1x16x16x128xf32, #tpu.memory_space<vmem>>, %arg2: memref<1x32xf32, #tpu.memory_space<vmem>>, %arg3: memref<1x32xf32, #tpu.memory_space<vmem>>, %arg4: memref<1x16x2x16x64xf32, #tpu.memory_space<vmem>>) attributes {dimension_semantics = [#tpu.dimension_semantics<parallel>], iteration_bounds = array<i64: 2>, scalar_prefetch = 0 : i64, scratch_operands = 0 : i64, tpu.core_type = #tpu.core_type<tc>, window_params = [{transform_indices = @transform_0, window_bounds = array<i64: 1, 16, 16, 128>}, {pipeline_mode = #tpu.pipeline_mode<synchronous>, transform_indices = @transform_1, window_bounds = array<i64: 1, 32>}, {pipeline_mode = #tpu.pipeline_mode<synchronous>, transform_indices = @transform_2, window_bounds = array<i64: 1, 32>}, {transform_indices = @transform_3, window_bounds = array<i64: 1, 16, 2, 16, 64>}]} {
    %c0 = arith.constant 0 : index
    %c0_0 = arith.constant 0 : index
    %c0_1 = arith.constant 0 : index
    %c0_2 = arith.constant 0 : index
    %0 = vector.load %arg1[%c0, %c0_0, %c0_1, %c0_2] : memref<1x16x16x128xf32, #tpu.memory_space<vmem>>, vector<1x16x16x128xf32>
    %1 = vector.shape_cast %0 : vector<1x16x16x128xf32> to vector<16x16x128xf32>
    %2 = vector.extract_strided_slice %1 {offsets = [0, 0, 0], sizes = [16, 16, 32], strides = [1, 1, 1]} : vector<16x16x128xf32> to vector<16x16x32xf32>
    %c0_3 = arith.constant 0 : index
    %c0_4 = arith.constant 0 : index
    %3 = vector.load %arg2[%c0_3, %c0_4] : memref<1x32xf32, #tpu.memory_space<vmem>>, vector<1x32xf32>
    %4 = vector.shape_cast %3 : vector<1x32xf32> to vector<1x1x32xf32>
    %5 = vector.broadcast %4 : vector<1x1x32xf32> to vector<16x16x32xf32>
    %6 = arith.mulf %2, %5 : vector<16x16x32xf32>
    %c0_5 = arith.constant 0 : index
    %c0_6 = arith.constant 0 : index
    %7 = vector.load %arg3[%c0_5, %c0_6] : memref<1x32xf32, #tpu.memory_space<vmem>>, vector<1x32xf32>
    %8 = vector.shape_cast %7 : vector<1x32xf32> to vector<1x1x32xf32>
    %9 = vector.broadcast %8 : vector<1x1x32xf32> to vector<16x16x32xf32>
    %10 = arith.addf %6, %9 : vector<16x16x32xf32>
    %cst = arith.constant 0.000000e+00 : f32
    %11 = vector.broadcast %cst : f32 to vector<16x16x32xf32>
    %12 = arith.maximumf %10, %11 : vector<16x16x32xf32>
    %13 = vector.extract_strided_slice %12 {offsets = [0, 0, 0], sizes = [16, 1, 32], strides = [1, 1, 1]} : vector<16x16x32xf32> to vector<16x1x32xf32>
    %14 = vector.extract_strided_slice %12 {offsets = [0, 0, 0], sizes = [16, 15, 32], strides = [1, 1, 1]} : vector<16x16x32xf32> to vector<16x15x32xf32>
    %15 = tpu.concatenate %13, %14 in 1 : vector<16x1x32xf32>, vector<16x15x32xf32> -> vector<16x16x32xf32>
    %16 = vector.extract_strided_slice %12 {offsets = [0, 1, 0], sizes = [16, 15, 32], strides = [1, 1, 1]} : vector<16x16x32xf32> to vector<16x15x32xf32>
    %17 = vector.extract_strided_slice %12 {offsets = [0, 15, 0], sizes = [16, 1, 32], strides = [1, 1, 1]} : vector<16x16x32xf32> to vector<16x1x32xf32>
    %18 = tpu.concatenate %16, %17 in 1 : vector<16x15x32xf32>, vector<16x1x32xf32> -> vector<16x16x32xf32>
    %cst_7 = arith.constant 2.500000e-01 : f32
    %19 = vector.broadcast %cst_7 : f32 to vector<16x16x32xf32>
    %20 = arith.mulf %19, %15 : vector<16x16x32xf32>
    %cst_8 = arith.constant 7.500000e-01 : f32
    %21 = vector.broadcast %cst_8 : f32 to vector<16x16x32xf32>
    %22 = arith.mulf %21, %12 : vector<16x16x32xf32>
    %23 = arith.addf %20, %22 : vector<16x16x32xf32>
    %cst_9 = arith.constant 7.500000e-01 : f32
    %24 = vector.broadcast %cst_9 : f32 to vector<16x16x32xf32>
    %25 = arith.mulf %24, %12 : vector<16x16x32xf32>
    %cst_10 = arith.constant 2.500000e-01 : f32
    %26 = vector.broadcast %cst_10 : f32 to vector<16x16x32xf32>
    %27 = arith.mulf %26, %18 : vector<16x16x32xf32>
    %28 = arith.addf %25, %27 : vector<16x16x32xf32>
    %29 = tpu.concatenate %23, %28 in 2 : vector<16x16x32xf32>, vector<16x16x32xf32> -> vector<16x16x64xf32>
    %30 = vector.extract_strided_slice %29 {offsets = [0, 0, 0], sizes = [1, 16, 64], strides = [1, 1, 1]} : vector<16x16x64xf32> to vector<1x16x64xf32>
    %31 = vector.extract_strided_slice %29 {offsets = [0, 0, 0], sizes = [15, 16, 64], strides = [1, 1, 1]} : vector<16x16x64xf32> to vector<15x16x64xf32>
    %32 = tpu.concatenate %30, %31 in 0 : vector<1x16x64xf32>, vector<15x16x64xf32> -> vector<16x16x64xf32>
    %33 = vector.extract_strided_slice %29 {offsets = [1, 0, 0], sizes = [15, 16, 64], strides = [1, 1, 1]} : vector<16x16x64xf32> to vector<15x16x64xf32>
    %34 = vector.extract_strided_slice %29 {offsets = [15, 0, 0], sizes = [1, 16, 64], strides = [1, 1, 1]} : vector<16x16x64xf32> to vector<1x16x64xf32>
    %35 = tpu.concatenate %33, %34 in 0 : vector<15x16x64xf32>, vector<1x16x64xf32> -> vector<16x16x64xf32>
    %cst_11 = arith.constant 2.500000e-01 : f32
    %36 = vector.broadcast %cst_11 : f32 to vector<16x16x64xf32>
    %37 = arith.mulf %36, %32 : vector<16x16x64xf32>
    %cst_12 = arith.constant 7.500000e-01 : f32
    %38 = vector.broadcast %cst_12 : f32 to vector<16x16x64xf32>
    %39 = arith.mulf %38, %29 : vector<16x16x64xf32>
    %40 = arith.addf %37, %39 : vector<16x16x64xf32>
    %cst_13 = arith.constant 7.500000e-01 : f32
    %41 = vector.broadcast %cst_13 : f32 to vector<16x16x64xf32>
    %42 = arith.mulf %41, %29 : vector<16x16x64xf32>
    %cst_14 = arith.constant 2.500000e-01 : f32
    %43 = vector.broadcast %cst_14 : f32 to vector<16x16x64xf32>
    %44 = arith.mulf %43, %35 : vector<16x16x64xf32>
    %45 = arith.addf %42, %44 : vector<16x16x64xf32>
    %46 = vector.shape_cast %40 : vector<16x16x64xf32> to vector<16x1x16x64xf32>
    %47 = vector.shape_cast %45 : vector<16x16x64xf32> to vector<16x1x16x64xf32>
    %48 = tpu.concatenate %46, %47 in 1 : vector<16x1x16x64xf32>, vector<16x1x16x64xf32> -> vector<16x2x16x64xf32>
    %c0_15 = arith.constant 0 : index
    %c0_16 = arith.constant 0 : index
    %c0_17 = arith.constant 0 : index
    %c0_18 = arith.constant 0 : index
    %c0_19 = arith.constant 0 : index
    %49 = vector.load %arg4[%c0_15, %c0_16, %c0_17, %c0_18, %c0_19] : memref<1x16x2x16x64xf32, #tpu.memory_space<vmem>>, vector<1x16x2x16x64xf32>
    %50 = vector.shape_cast %49 : vector<1x16x2x16x64xf32> to vector<16x2x16x64xf32>
    %51 = vector.shape_cast %48 : vector<16x2x16x64xf32> to vector<1x16x2x16x64xf32>
    tpu.vector_store %arg4[%c0_15, %c0_16, %c0_17, %c0_18, %c0_19], %51 {strides = array<i32>} : memref<1x16x2x16x64xf32, #tpu.memory_space<vmem>>, vector<1x16x2x16x64xf32>,
    return
  }
  func.func @transform_0(%arg0: i32) -> (i32, i32, i32, i32) {
    %c0_i32 = arith.constant 0 : i32
    %c0_i32_0 = arith.constant 0 : i32
    %c0_i32_1 = arith.constant 0 : i32
    %c0_i32_2 = arith.constant 0 : i32
    return %arg0, %c0_i32, %c0_i32_0, %c0_i32_1 : i32, i32, i32, i32
  }
  func.func @transform_1(%arg0: i32) -> (i32, i32) {
    %c0_i32 = arith.constant 0 : i32
    %c0_i32_0 = arith.constant 0 : i32
    %c0_i32_1 = arith.constant 0 : i32
    return %c0_i32, %c0_i32_0 : i32, i32
  }
  func.func @transform_2(%arg0: i32) -> (i32, i32) {
    %c0_i32 = arith.constant 0 : i32
    %c0_i32_0 = arith.constant 0 : i32
    %c0_i32_1 = arith.constant 0 : i32
    return %c0_i32, %c0_i32_0 : i32, i32
  }
  func.func @transform_3(%arg0: i32) -> (i32, i32, i32, i32, i32) {
    %c0_i32 = arith.constant 0 : i32
    %c0_i32_0 = arith.constant 0 : i32
    %c0_i32_1 = arith.constant 0 : i32
    %c0_i32_2 = arith.constant 0 : i32
    %c0_i32_3 = arith.constant 0 : i32
    return %arg0, %c0_i32, %c0_i32_0, %c0_i32_1, %c0_i32_2 : i32, i32, i32, i32, i32
  }
}

</mosaic_0001>

<llo_original>
// kernel: decoder_block_forward.5
$region0: #{decoder_block_forward.5}
  #allocation0 [shape = 'u32[]', space=smem, size = 0x4, offset = 0x4, fixed_abs, tag = 'smem constant byte address 0x4 - core index']
  #allocation1 [shape = 'u32[144,128]{1,0:T(1,128)}', space=vmem, size = 0x12000, scoped, tag = 'internal scratch']
  %s0 = inlined_call_operand.vmem [shape: f32[2,16,16,128], index: 0, kind: input, shape index: {}]
  %s1 = inlined_call_operand.vmem [shape: f32[1,32], index: 1, kind: input, shape index: {}]
  %s2 = inlined_call_operand.vmem [shape: f32[1,32], index: 2, kind: input, shape index: {}]
  %s3 = inlined_call_operand.vmem [shape: f32[2,16,2,16,64], index: 3, kind: output, shape index: {}]
  %s4 = sld [smem:[#allocation0]]
  $region45: #{decoder_block_forward.5} parent=0
    _
  %s6 = ssub.s32 1, %s4
  %s7 = scalar_select 0, %s6, %s4
  loop: start=0, step=1, limit=4
  $region2: #{decoder_block_forward.5} parent=0 // loop_pre_header
    _
  $region3: #{decoder_block_forward.5} parent=0 // loop_header
    %s9 = sphi 0, %s13
    %p10 = scmp.ge.s32.totalorder %s9, 4
    %s19 = sphi 0, %s21
    %s22 = sphi 0, %s19
    %s23 = sphi 0, %s22
    %s39 = sphi 0, %s23
    %s43 = sphi 0, %s43
    %s45 = sphi 0, %s43
    %s46 = sphi 0, %s45
    %s60 = sphi 0, %s46
    %s64 = sphi 0, %s64
    %s66 = sphi 0, %s64
    %s67 = sphi 0, %s66
    %s81 = sphi 0, %s67
    %s87 = sphi 0, %s89
    %s90 = sphi 0, %s87
    %s91 = sphi 0, %s90
    %s107 = sphi 0, %s91
  $region4: #{decoder_block_forward.5} parent=0 // loop_header_branch
    %12 = sbr.rel (%p10) target = $region8
  $region5: #{decoder_block_forward.5} parent=0 // loop_body
    %s14 = ssub.s32 %s9, 1
    %s15 = ssub.s32 %s9, 2
    %s16 = sadd.s32 %s9, 1
    %s17 = ssub.s32 %s9, %s16
    %p18 = scmp.eq.s32.totalorder %s17, 0
    %s20 = sadd.s32 %s19, 1
    %s21 = scalar_select %p18, %s19, %s20
    %p24 = pneg %p18
    %p25 = scmp.eq.s32.totalorder %s9, 1
    %p26 = por %p24, %p25
    %p27 = scmp.ne.s32.totalorder %s19, %s22
    %p28 = scmp.eq.s32.totalorder %s9, 0
    %p29 = por %p27, %p28
    %p30 = scmp.ne.s32.totalorder %s19, %s22
    %p31 = scmp.eq.s32.totalorder %s14, 1
    %p32 = por %p30, %p31
    %p33 = scmp.ne.s32.totalorder %s22, %s23
    %p34 = scmp.eq.s32.totalorder %s14, 0
    %p35 = por %p33, %p34
    %p36 = scmp.ne.s32.totalorder %s22, %s23
    %p37 = scmp.eq.s32.totalorder %s15, 1
    %p38 = por %p36, %p37
    %p40 = scmp.ne.s32.totalorder %s23, %s39
    %p41 = scmp.eq.s32.totalorder %s15, 0
    %p42 = por %p40, %p41
    %s44 = sadd.s32 %s43, 1
    %p47 = scmp.eq.s32.totalorder %s9, 1
    %p48 = scmp.ne.s32.totalorder %s43, %s45
    %p49 = scmp.eq.s32.totalorder %s9, 0
    %p50 = por %p48, %p49
    %p51 = scmp.ne.s32.totalorder %s43, %s45
    %p52 = scmp.eq.s32.totalorder %s14, 1
    %p53 = por %p51, %p52
    %p54 = scmp.ne.s32.totalorder %s45, %s46
    %p55 = scmp.eq.s32.totalorder %s14, 0
    %p56 = por %p54, %p55
    %p57 = scmp.ne.s32.totalorder %s45, %s46
    %p58 = scmp.eq.s32.totalorder %s15, 1
    %p59 = por %p57, %p58
    %p61 = scmp.ne.s32.totalorder %s46, %s60
    %p62 = scmp.eq.s32.totalorder %s15, 0
    %p63 = por %p61, %p62
    %s65 = sadd.s32 %s64, 1
    %p68 = scmp.eq.s32.totalorder %s9, 1
    %p69 = scmp.ne.s32.totalorder %s64, %s66
    %p70 = scmp.eq.s32.totalorder %s9, 0
    %p71 = por %p69, %p70
    %p72 = scmp.ne.s32.totalorder %s64, %s66
    %p73 = scmp.eq.s32.totalorder %s14, 1
    %p74 = por %p72, %p73
    %p75 = scmp.ne.s32.totalorder %s66, %s67
    %p76 = scmp.eq.s32.totalorder %s14, 0
    %p77 = por %p75, %p76
    %p78 = scmp.ne.s32.totalorder %s66, %s67
    %p79 = scmp.eq.s32.totalorder %s15, 1
    %p80 = por %p78, %p79
    %p82 = scmp.ne.s32.totalorder %s67, %s81
    %p83 = scmp.eq.s32.totalorder %s15, 0
    %p84 = por %p82, %p83
    %s85 = ssub.s32 %s9, %s16
    %p86 = scmp.eq.s32.totalorder %s85, 0
    %s88 = sadd.s32 %s87, 1
    %s89 = scalar_select %p86, %s87, %s88
    %p92 = pneg %p86
    %p93 = scmp.eq.s32.totalorder %s9, 1
    %p94 = por %p92, %p93
    %p95 = scmp.ne.s32.totalorder %s87, %s90
    %p96 = scmp.eq.s32.totalorder %s9, 0
    %p97 = por %p95, %p96
    %p98 = scmp.ne.s32.totalorder %s87, %s90
    %p99 = scmp.eq.s32.totalorder %s14, 1
    %p100 = por %p98, %p99
    %p101 = scmp.ne.s32.totalorder %s90, %s91
    %p102 = scmp.eq.s32.totalorder %s14, 0
    %p103 = por %p101, %p102
    %p104 = scmp.ne.s32.totalorder %s90, %s91
    %p105 = scmp.eq.s32.totalorder %s15, 1
    %p106 = por %p104, %p105
    %p108 = scmp.ne.s32.totalorder %s91, %s107
    %p109 = scmp.eq.s32.totalorder %s15, 0
    %p110 = por %p108, %p109
    %p111 = scmp.le.s32.totalorder 1, %s9
    %p112 = scmp.lt.s32.totalorder %s9, 3
    %p113 = pnand %p111, %p112
    %p114 = pneg %p113
    // Predicated region
    $region9: #{decoder_block_forward.5} parent=5 // pred_check
      _
    $region10: #{decoder_block_forward.5} parent=5 // pred_check_branch
      %116 = sbr.rel (%p113) target = $region12
    $region11: #{decoder_block_forward.5} parent=5 // pred_region
      %s117 = ssub.s32 %s9, 1
      // Predicated region
      $region13: #{decoder_block_forward.5} parent=11 // pred_check
        %p118 = pneg %p56
      $region14: #{decoder_block_forward.5} parent=11 // pred_check_branch
        %120 = sbr.rel (%p118) target = $region16
      $region15: #{decoder_block_forward.5} parent=11 // pred_region
        _
      $region16: #{decoder_block_forward.5} parent=11 // pred_fallthru
        _
      // Predicated region
      $region17: #{decoder_block_forward.5} parent=11 // pred_check
        %p121 = pneg %p77
      $region18: #{decoder_block_forward.5} parent=11 // pred_check_branch
        %123 = sbr.rel (%p121) target = $region20
      $region19: #{decoder_block_forward.5} parent=11 // pred_region
        _
      $region20: #{decoder_block_forward.5} parent=11 // pred_fallthru
        _
    $region12: #{decoder_block_forward.5} parent=5 // pred_fallthru
      _
    %p124 = scmp.lt.s32.totalorder %s9, 2
    // Predicated region
    $region21: #{decoder_block_forward.5} parent=5 // pred_check
      %p125 = pneg %p124
    $region22: #{decoder_block_forward.5} parent=5 // pred_check_branch
      %127 = sbr.rel (%p125) target = $region24
    $region23: #{decoder_block_forward.5} parent=5 // pred_region
      // Predicated region
      $region25: #{decoder_block_forward.5} parent=23 // pred_check
        %p128 = pneg %p29
      $region26: #{decoder_block_forward.5} parent=23 // pred_check_branch
        %130 = sbr.rel (%p128) target = $region28
      $region27: #{decoder_block_forward.5} parent=23 // pred_region
        %p131 = scmp.lt.s32.totalorder %s9, 1
        %s132 = scalar_select %p131, %s9, 1
        %s133 = smul.addr %s132, 32
        %s134 = smul.addr %s133, 8
        %s135 = scalar_lea.vmem %s0, %s134
      $region28: #{decoder_block_forward.5} parent=23 // pred_fallthru
        _
    $region24: #{decoder_block_forward.5} parent=5 // pred_fallthru
      _
    %p136 = scmp.le.s32.totalorder 1, %s9
    %p137 = scmp.lt.s32.totalorder %s9, 3
    %p138 = pnand %p136, %p137
    %p139 = pneg %p138
    // Predicated region
    $region29: #{decoder_block_forward.5} parent=5 // pred_check
      _
    $region30: #{decoder_block_forward.5} parent=5 // pred_check_branch
      %141 = sbr.rel (%p138) target = $region32
    $region31: #{decoder_block_forward.5} parent=5 // pred_region
      %s142 = ssub.s32 %s9, 1
      %p143 = scmp.lt.s32.totalorder %s14, 1
      %s144 = scalar_select %p143, %s14, 1
      %s145 = smul.addr %s144, 32
      %s146 = smul.addr %s145, 8
      %s147 = scalar_lea.vmem %s0, %s146
      %p148 = pneg %p35
      %p149 = pneg %p32
      %p150 = pneg %p56
      %p151 = pneg %p53
      %p152 = pneg %p77
      %p153 = pneg %p74
      %p154 = pneg %p103
      %p155 = pneg %p100
      %p156 = scmp.lt.s32.totalorder %s14, 1
      %s157 = scalar_select %p156, %s14, 1
      %s158 = smul.addr %s157, 64
      %s159 = smul.addr %s158, 8
      %s160 = scalar_lea.vmem %s3, %s159
      %p161 = scmp.lt.s32.totalorder %s14, 1
      %s162 = scalar_select %p161, %s14, 1
      %s163 = smul.addr %s162, 32
      %s164 = smul.addr %s163, 8
      %s165 = scalar_lea.vmem %s0, %s164
      %p166 = scmp.lt.s32.totalorder %s14, 1
      %s167 = scalar_select %p166, %s14, 1
      %s168 = smul.addr %s167, 64
      %s169 = smul.addr %s168, 8
      %s170 = scalar_lea.vmem %s3, %s169
      %v171 = vld [vmem:[%s165] sm:$0xff]
      %v172 = vld [vmem:[%s165 + $0x8] sm:$0xff]
      %v173 = vld [vmem:[%s165 + $0x10] sm:$0xff]
      %v174 = vld [vmem:[%s165 + $0x18] sm:$0xff]
      %v175 = vld [vmem:[%s165 + $0x20] sm:$0xff]
      %v176 = vld [vmem:[%s165 + $0x28] sm:$0xff]
      %v177 = vld [vmem:[%s165 + $0x30] sm:$0xff]
      %v178 = vld [vmem:[%s165 + $0x38] sm:$0xff]
      %v179 = vld [vmem:[%s165 + $0x40] sm:$0xff]
      %v180 = vld [vmem:[%s165 + $0x48] sm:$0xff]
      %v181 = vld [vmem:[%s165 + $0x50] sm:$0xff]
      %v182 = vld [vmem:[%s165 + $0x58] sm:$0xff]
      %v183 = vld [vmem:[%s165 + $0x60] sm:$0xff]
      %v184 = vld [vmem:[%s165 + $0x68] sm:$0xff]
      %v185 = vld [vmem:[%s165 + $0x70] sm:$0xff]
      %v186 = vld [vmem:[%s165 + $0x78] sm:$0xff]
      %v187 = vld [vmem:[%s165 + $0x80] sm:$0xff]
      %v188 = vld [vmem:[%s165 + $0x88] sm:$0xff]
      %v189 = vld [vmem:[%s165 + $0x90] sm:$0xff]
      %v190 = vld [vmem:[%s165 + $0x98] sm:$0xff]
      %v191 = vld [vmem:[%s165 + $0xa0] sm:$0xff]
      %v192 = vld [vmem:[%s165 + $0xa8] sm:$0xff]
      %v193 = vld [vmem:[%s165 + $0xb0] sm:$0xff]
      %v194 = vld [vmem:[%s165 + $0xb8] sm:$0xff]
      %v195 = vld [vmem:[%s165 + $0xc0] sm:$0xff]
      %v196 = vld [vmem:[%s165 + $0xc8] sm:$0xff]
      %v197 = vld [vmem:[%s165 + $0xd0] sm:$0xff]
      %v198 = vld [vmem:[%s165 + $0xd8] sm:$0xff]
      %v199 = vld [vmem:[%s165 + $0xe0] sm:$0xff]
      %v200 = vld [vmem:[%s165 + $0xe8] sm:$0xff]
      %v201 = vld [vmem:[%s165 + $0xf0] sm:$0xff]
      %v202 = vld [vmem:[%s165 + $0xf8] sm:$0xff]
      %v203 = vld [vmem:[%s1] sm:$0x1]
      %v205 = vlaneseq
      %v206 = vshrl.u32 %v205, 7
      %v207 = vsub.s32 0, %v206
      %v208 = vrot.slane %v203, %v207
      %v210 = vmul.f32 %v171, %v208
      %v211 = vmul.f32 %v172, %v208
      %v212 = vmul.f32 %v173, %v208
      %v213 = vmul.f32 %v174, %v208
      %v214 = vmul.f32 %v175, %v208
      %v215 = vmul.f32 %v176, %v208
      %v216 = vmul.f32 %v177, %v208
      %v217 = vmul.f32 %v178, %v208
      %v218 = vmul.f32 %v179, %v208
      %v219 = vmul.f32 %v180, %v208
      %v220 = vmul.f32 %v181, %v208
      %v221 = vmul.f32 %v182, %v208
      %v222 = vmul.f32 %v183, %v208
      %v223 = vmul.f32 %v184, %v208
      %v224 = vmul.f32 %v185, %v208
      %v225 = vmul.f32 %v186, %v208
      %v226 = vmul.f32 %v187, %v208
      %v227 = vmul.f32 %v188, %v208
      %v228 = vmul.f32 %v189, %v208
      %v229 = vmul.f32 %v190, %v208
      %v230 = vmul.f32 %v191, %v208
      %v231 = vmul.f32 %v192, %v208
      %v232 = vmul.f32 %v193, %v208
      %v233 = vmul.f32 %v194, %v208
      %v234 = vmul.f32 %v195, %v208
      %v235 = vmul.f32 %v196, %v208
      %v236 = vmul.f32 %v197, %v208
      %v237 = vmul.f32 %v198, %v208
      %v238 = vmul.f32 %v199, %v208
      %v239 = vmul.f32 %v200, %v208
      %v240 = vmul.f32 %v201, %v208
      %v241 = vmul.f32 %v202, %v208
      %v242 = vld [vmem:[%s2] sm:$0x1]
      %v244 = vlaneseq
      %v245 = vshrl.u32 %v244, 7
      %v246 = vsub.s32 0, %v245
      %v247 = vrot.slane %v242, %v246
      %v249 = vadd.f32 %v210, %v247
      %v250 = vadd.f32 %v211, %v247
      %v251 = vadd.f32 %v212, %v247
      %v252 = vadd.f32 %v213, %v247
      %v253 = vadd.f32 %v214, %v247
      %v254 = vadd.f32 %v215, %v247
      %v255 = vadd.f32 %v216, %v247
      %v256 = vadd.f32 %v217, %v247
      %v257 = vadd.f32 %v218, %v247
      %v258 = vadd.f32 %v219, %v247
      %v259 = vadd.f32 %v220, %v247
      %v260 = vadd.f32 %v221, %v247
      %v261 = vadd.f32 %v222, %v247
      %v262 = vadd.f32 %v223, %v247
      %v263 = vadd.f32 %v224, %v247
      %v264 = vadd.f32 %v225, %v247
      %v265 = vadd.f32 %v226, %v247
      %v266 = vadd.f32 %v227, %v247
      %v267 = vadd.f32 %v228, %v247
      %v268 = vadd.f32 %v229, %v247
      %v269 = vadd.f32 %v230, %v247
      %v270 = vadd.f32 %v231, %v247
      %v271 = vadd.f32 %v232, %v247
      %v272 = vadd.f32 %v233, %v247
      %v273 = vadd.f32 %v234, %v247
      %v274 = vadd.f32 %v235, %v247
      %v275 = vadd.f32 %v236, %v247
      %v276 = vadd.f32 %v237, %v247
      %v277 = vadd.f32 %v238, %v247
      %v278 = vadd.f32 %v239, %v247
      %v279 = vadd.f32 %v240, %v247
      %v280 = vadd.f32 %v241, %v247
      %v281 = vmax.f32 %v249, 0.0
      %v282 = vmax.f32 %v250, 0.0
      %v283 = vmax.f32 %v251, 0.0
      %v284 = vmax.f32 %v252, 0.0
      %v285 = vmax.f32 %v253, 0.0
      %v286 = vmax.f32 %v254, 0.0
      %v287 = vmax.f32 %v255, 0.0
      %v288 = vmax.f32 %v256, 0.0
      %v289 = vmax.f32 %v257, 0.0
      %v290 = vmax.f32 %v258, 0.0
      %v291 = vmax.f32 %v259, 0.0
      %v292 = vmax.f32 %v260, 0.0
      %v293 = vmax.f32 %v261, 0.0
      %v294 = vmax.f32 %v262, 0.0
      %v295 = vmax.f32 %v263, 0.0
      %v296 = vmax.f32 %v264, 0.0
      %v297 = vmax.f32 %v265, 0.0
      %v298 = vmax.f32 %v266, 0.0
      %v299 = vmax.f32 %v267, 0.0
      %v300 = vmax.f32 %v268, 0.0
      %v301 = vmax.f32 %v269, 0.0
      %v302 = vmax.f32 %v270, 0.0
      %v303 = vmax.f32 %v271, 0.0
      %v304 = vmax.f32 %v272, 0.0
      %v305 = vmax.f32 %v273, 0.0
      %v306 = vmax.f32 %v274, 0.0
      %v307 = vmax.f32 %v275, 0.0
      %v308 = vmax.f32 %v276, 0.0
      %v309 = vmax.f32 %v277, 0.0
      %v310 = vmax.f32 %v278, 0.0
      %v311 = vmax.f32 %v279, 0.0
      %v312 = vmax.f32 %v280, 0.0
      %vm345 = vcmask 1040384
      %v346 = vrot.slane %v281, 7
      %v347 = vrot.slane %v282, 7
      %v348 = vsel %vm345, %v346, %v347
      %v349 = vrot.slane %v283, 7
      %v350 = vrot.slane %v284, 7
      %v351 = vsel %vm345, %v349, %v350
      %v352 = vrot.slane %v285, 7
      %v353 = vrot.slane %v286, 7
      %v354 = vsel %vm345, %v352, %v353
      %v355 = vrot.slane %v287, 7
      %v356 = vrot.slane %v288, 7
      %v357 = vsel %vm345, %v355, %v356
      %v358 = vrot.slane %v289, 7
      %v359 = vrot.slane %v290, 7
      %v360 = vsel %vm345, %v358, %v359
      %v361 = vrot.slane %v291, 7
      %v362 = vrot.slane %v292, 7
      %v363 = vsel %vm345, %v361, %v362
      %v364 = vrot.slane %v293, 7
      %v365 = vrot.slane %v294, 7
      %v366 = vsel %vm345, %v364, %v365
      %v367 = vrot.slane %v295, 7
      %v368 = vrot.slane %v296, 7
      %v369 = vsel %vm345, %v367, %v368
      %v370 = vrot.slane %v297, 7
      %v371 = vrot.slane %v298, 7
      %v372 = vsel %vm345, %v370, %v371
      %v373 = vrot.slane %v299, 7
      %v374 = vrot.slane %v300, 7
      %v375 = vsel %vm345, %v373, %v374
      %v376 = vrot.slane %v301, 7
      %v377 = vrot.slane %v302, 7
      %v378 = vsel %vm345, %v376, %v377
      %v379 = vrot.slane %v303, 7
      %v380 = vrot.slane %v304, 7
      %v381 = vsel %vm345, %v379, %v380
      %v382 = vrot.slane %v305, 7
      %v383 = vrot.slane %v306, 7
      %v384 = vsel %vm345, %v382, %v383
      %v385 = vrot.slane %v307, 7
      %v386 = vrot.slane %v308, 7
      %v387 = vsel %vm345, %v385, %v386
      %v388 = vrot.slane %v309, 7
      %v389 = vrot.slane %v310, 7
      %v390 = vsel %vm345, %v388, %v389
      %v391 = vrot.slane %v311, 7
      %v392 = vrot.slane %v312, 7
      %v393 = vsel %vm345, %v391, %v392
      %v426 = vsel %vm345, %v281, %v346
      %v427 = vsel %vm345, %v283, %v349
      %v428 = vsel %vm345, %v285, %v352
      %v429 = vsel %vm345, %v287, %v355
      %v430 = vsel %vm345, %v289, %v358
      %v431 = vsel %vm345, %v291, %v361
      %v432 = vsel %vm345, %v293, %v364
      %v433 = vsel %vm345, %v295, %v367
      %v434 = vsel %vm345, %v297, %v370
      %v435 = vsel %vm345, %v299, %v373
      %v436 = vsel %vm345, %v301, %v376
      %v437 = vsel %vm345, %v303, %v379
      %v438 = vsel %vm345, %v305, %v382
      %v439 = vsel %vm345, %v307, %v385
      %v440 = vsel %vm345, %v309, %v388
      %v441 = vsel %vm345, %v311, %v391
      %vm442 = vcmask 1046528
      %v443 = vrot.slane %v281, 1
      %v444 = vrot.slane %v282, 1
      %v445 = vsel %vm442, %v443, %v444
      %v446 = vrot.slane %v283, 1
      %v447 = vrot.slane %v284, 1
      %v448 = vsel %vm442, %v446, %v447
      %v449 = vrot.slane %v285, 1
      %v450 = vrot.slane %v286, 1
      %v451 = vsel %vm442, %v449, %v450
      %v452 = vrot.slane %v287, 1
      %v453 = vrot.slane %v288, 1
      %v454 = vsel %vm442, %v452, %v453
      %v455 = vrot.slane %v289, 1
      %v456 = vrot.slane %v290, 1
      %v457 = vsel %vm442, %v455, %v456
      %v458 = vrot.slane %v291, 1
      %v459 = vrot.slane %v292, 1
      %v460 = vsel %vm442, %v458, %v459
      %v461 = vrot.slane %v293, 1
      %v462 = vrot.slane %v294, 1
      %v463 = vsel %vm442, %v461, %v462
      %v464 = vrot.slane %v295, 1
      %v465 = vrot.slane %v296, 1
      %v466 = vsel %vm442, %v464, %v465
      %v467 = vrot.slane %v297, 1
      %v468 = vrot.slane %v298, 1
      %v469 = vsel %vm442, %v467, %v468
      %v470 = vrot.slane %v299, 1
      %v471 = vrot.slane %v300, 1
      %v472 = vsel %vm442, %v470, %v471
      %v473 = vrot.slane %v301, 1
      %v474 = vrot.slane %v302, 1
      %v475 = vsel %vm442, %v473, %v474
      %v476 = vrot.slane %v303, 1
      %v477 = vrot.slane %v304, 1
      %v478 = vsel %vm442, %v476, %v477
      %v479 = vrot.slane %v305, 1
      %v480 = vrot.slane %v306, 1
      %v481 = vsel %vm442, %v479, %v480
      %v482 = vrot.slane %v307, 1
      %v483 = vrot.slane %v308, 1
      %v484 = vsel %vm442, %v482, %v483
      %v485 = vrot.slane %v309, 1
      %v486 = vrot.slane %v310, 1
      %v487 = vsel %vm442, %v485, %v486
      %v488 = vrot.slane %v311, 1
      %v489 = vrot.slane %v312, 1
      %v490 = vsel %vm442, %v488, %v489
      %v523 = vsel %vm442, %v444, %v282
      %v524 = vsel %vm442, %v447, %v284
      %v525 = vsel %vm442, %v450, %v286
      %v526 = vsel %vm442, %v453, %v288
      %v527 = vsel %vm442, %v456, %v290
      %v528 = vsel %vm442, %v459, %v292
      %v529 = vsel %vm442, %v462, %v294
      %v530 = vsel %vm442, %v465, %v296
      %v531 = vsel %vm442, %v468, %v298
      %v532 = vsel %vm442, %v471, %v300
      %v533 = vsel %vm442, %v474, %v302
      %v534 = vsel %vm442, %v477, %v304
      %v535 = vsel %vm442, %v480, %v306
      %v536 = vsel %vm442, %v483, %v308
      %v537 = vsel %vm442, %v486, %v310
      %v538 = vsel %vm442, %v489, %v312
      %v539 = vmul.f32 %v426, 0.25
      %v540 = vmul.f32 %v348, 0.25
      %v541 = vmul.f32 %v427, 0.25
      %v542 = vmul.f32 %v351, 0.25
      %v543 = vmul.f32 %v428, 0.25
      %v544 = vmul.f32 %v354, 0.25
      %v545 = vmul.f32 %v429, 0.25
      %v546 = vmul.f32 %v357, 0.25
      %v547 = vmul.f32 %v430, 0.25
      %v548 = vmul.f32 %v360, 0.25
      %v549 = vmul.f32 %v431, 0.25
      %v550 = vmul.f32 %v363, 0.25
      %v551 = vmul.f32 %v432, 0.25
      %v552 = vmul.f32 %v366, 0.25
      %v553 = vmul.f32 %v433, 0.25
      %v554 = vmul.f32 %v369, 0.25
      %v555 = vmul.f32 %v434, 0.25
      %v556 = vmul.f32 %v372, 0.25
      %v557 = vmul.f32 %v435, 0.25
      %v558 = vmul.f32 %v375, 0.25
      %v559 = vmul.f32 %v436, 0.25
      %v560 = vmul.f32 %v378, 0.25
      %v561 = vmul.f32 %v437, 0.25
      %v562 = vmul.f32 %v381, 0.25
      %v563 = vmul.f32 %v438, 0.25
      %v564 = vmul.f32 %v384, 0.25
      %v565 = vmul.f32 %v439, 0.25
      %v566 = vmul.f32 %v387, 0.25
      %v567 = vmul.f32 %v440, 0.25
      %v568 = vmul.f32 %v390, 0.25
      %v569 = vmul.f32 %v441, 0.25
      %v570 = vmul.f32 %v393, 0.25
      %v571 = vmul.f32 %v281, 0.75
      %v572 = vmul.f32 %v282, 0.75
      %v573 = vmul.f32 %v283, 0.75
      %v574 = vmul.f32 %v284, 0.75
      %v575 = vmul.f32 %v285, 0.75
      %v576 = vmul.f32 %v286, 0.75
      %v577 = vmul.f32 %v287, 0.75
      %v578 = vmul.f32 %v288, 0.75
      %v579 = vmul.f32 %v289, 0.75
      %v580 = vmul.f32 %v290, 0.75
      %v581 = vmul.f32 %v291, 0.75
      %v582 = vmul.f32 %v292, 0.75
      %v583 = vmul.f32 %v293, 0.75
      %v584 = vmul.f32 %v294, 0.75
      %v585 = vmul.f32 %v295, 0.75
      %v586 = vmul.f32 %v296, 0.75
      %v587 = vmul.f32 %v297, 0.75
      %v588 = vmul.f32 %v298, 0.75
      %v589 = vmul.f32 %v299, 0.75
      %v590 = vmul.f32 %v300, 0.75
      %v591 = vmul.f32 %v301, 0.75
      %v592 = vmul.f32 %v302, 0.75
      %v593 = vmul.f32 %v303, 0.75
      %v594 = vmul.f32 %v304, 0.75
      %v595 = vmul.f32 %v305, 0.75
      %v596 = vmul.f32 %v306, 0.75
      %v597 = vmul.f32 %v307, 0.75
      %v598 = vmul.f32 %v308, 0.75
      %v599 = vmul.f32 %v309, 0.75
      %v600 = vmul.f32 %v310, 0.75
      %v601 = vmul.f32 %v311, 0.75
      %v602 = vmul.f32 %v312, 0.75
      %v603 = vadd.f32 %v539, %v571
      %v604 = vadd.f32 %v540, %v572
      %v605 = vadd.f32 %v541, %v573
      %v606 = vadd.f32 %v542, %v574
      %v607 = vadd.f32 %v543, %v575
      %v608 = vadd.f32 %v544, %v576
      %v609 = vadd.f32 %v545, %v577
      %v610 = vadd.f32 %v546, %v578
      %v611 = vadd.f32 %v547, %v579
      %v612 = vadd.f32 %v548, %v580
      %v613 = vadd.f32 %v549, %v581
      %v614 = vadd.f32 %v550, %v582
      %v615 = vadd.f32 %v551, %v583
      %v616 = vadd.f32 %v552, %v584
      %v617 = vadd.f32 %v553, %v585
      %v618 = vadd.f32 %v554, %v586
      %v619 = vadd.f32 %v555, %v587
      %v620 = vadd.f32 %v556, %v588
      %v621 = vadd.f32 %v557, %v589
      %v622 = vadd.f32 %v558, %v590
      %v623 = vadd.f32 %v559, %v591
      %v624 = vadd.f32 %v560, %v592
      %v625 = vadd.f32 %v561, %v593
      %v626 = vadd.f32 %v562, %v594
      %v627 = vadd.f32 %v563, %v595
      %v628 = vadd.f32 %v564, %v596
      %v629 = vadd.f32 %v565, %v597
      %v630 = vadd.f32 %v566, %v598
      %v631 = vadd.f32 %v567, %v599
      %v632 = vadd.f32 %v568, %v600
      %v633 = vadd.f32 %v569, %v601
      %v634 = vadd.f32 %v570, %v602
      %v635 = vmul.f32 %v445, 0.25
      %v636 = vmul.f32 %v523, 0.25
      %v637 = vmul.f32 %v448, 0.25
      %v638 = vmul.f32 %v524, 0.25
      %v639 = vmul.f32 %v451, 0.25
      %v640 = vmul.f32 %v525, 0.25
      %v641 = vmul.f32 %v454, 0.25
      %v642 = vmul.f32 %v526, 0.25
      %v643 = vmul.f32 %v457, 0.25
      %v644 = vmul.f32 %v527, 0.25
      %v645 = vmul.f32 %v460, 0.25
      %v646 = vmul.f32 %v528, 0.25
      %v647 = vmul.f32 %v463, 0.25
      %v648 = vmul.f32 %v529, 0.25
      %v649 = vmul.f32 %v466, 0.25
      %v650 = vmul.f32 %v530, 0.25
      %v651 = vmul.f32 %v469, 0.25
      %v652 = vmul.f32 %v531, 0.25
      %v653 = vmul.f32 %v472, 0.25
      %v654 = vmul.f32 %v532, 0.25
      %v655 = vmul.f32 %v475, 0.25
      %v656 = vmul.f32 %v533, 0.25
      %v657 = vmul.f32 %v478, 0.25
      %v658 = vmul.f32 %v534, 0.25
      %v659 = vmul.f32 %v481, 0.25
      %v660 = vmul.f32 %v535, 0.25
      %v661 = vmul.f32 %v484, 0.25
      %v662 = vmul.f32 %v536, 0.25
      %v663 = vmul.f32 %v487, 0.25
      %v664 = vmul.f32 %v537, 0.25
      %v665 = vmul.f32 %v490, 0.25
      %v666 = vmul.f32 %v538, 0.25
      %v667 = vadd.f32 %v571, %v635
      %v668 = vadd.f32 %v572, %v636
      %v669 = vadd.f32 %v573, %v637
      %v670 = vadd.f32 %v574, %v638
      %v671 = vadd.f32 %v575, %v639
      %v672 = vadd.f32 %v576, %v640
      %v673 = vadd.f32 %v577, %v641
      %v674 = vadd.f32 %v578, %v642
      %v675 = vadd.f32 %v579, %v643
      %v676 = vadd.f32 %v580, %v644
      %v677 = vadd.f32 %v581, %v645
      %v678 = vadd.f32 %v582, %v646
      %v679 = vadd.f32 %v583, %v647
      %v680 = vadd.f32 %v584, %v648
      %v681 = vadd.f32 %v585, %v649
      %v682 = vadd.f32 %v586, %v650
      %v683 = vadd.f32 %v587, %v651
      %v684 = vadd.f32 %v588, %v652
      %v685 = vadd.f32 %v589, %v653
      %v686 = vadd.f32 %v590, %v654
      %v687 = vadd.f32 %v591, %v655
      %v688 = vadd.f32 %v592, %v656
      %v689 = vadd.f32 %v593, %v657
      %v690 = vadd.f32 %v594, %v658
      %v691 = vadd.f32 %v595, %v659
      %v692 = vadd.f32 %v596, %v660
      %v693 = vadd.f32 %v597, %v661
      %v694 = vadd.f32 %v598, %v662
      %v695 = vadd.f32 %v599, %v663
      %v696 = vadd.f32 %v600, %v664
      %v697 = vadd.f32 %v601, %v665
      %v698 = vadd.f32 %v602, %v666
      %731 = vrot.lane.b32.xlu0 %v667, 32
      %v732 = vpop.permute.xlu0 %731
      %733 = vrot.lane.b32.xlu0 %v668, 32
      %v734 = vpop.permute.xlu0 %733
      %735 = vrot.lane.b32.xlu0 %v669, 32
      %v736 = vpop.permute.xlu0 %735
      %737 = vrot.lane.b32.xlu0 %v670, 32
      %v738 = vpop.permute.xlu0 %737
      %739 = vrot.lane.b32.xlu0 %v671, 32
      %v740 = vpop.permute.xlu0 %739
      %741 = vrot.lane.b32.xlu0 %v672, 32
      %v742 = vpop.permute.xlu0 %741
      %743 = vrot.lane.b32.xlu0 %v673, 32
      %v744 = vpop.permute.xlu0 %743
      %745 = vrot.lane.b32.xlu0 %v674, 32
      %v746 = vpop.permute.xlu0 %745
      %747 = vrot.lane.b32.xlu0 %v675, 32
      %v748 = vpop.permute.xlu0 %747
      %749 = vrot.lane.b32.xlu0 %v676, 32
      %v750 = vpop.permute.xlu0 %749
      %751 = vrot.lane.b32.xlu0 %v677, 32
      %v752 = vpop.permute.xlu0 %751
      %753 = vrot.lane.b32.xlu0 %v678, 32
      %v754 = vpop.permute.xlu0 %753
      %755 = vrot.lane.b32.xlu0 %v679, 32
      %v756 = vpop.permute.xlu0 %755
      %757 = vrot.lane.b32.xlu0 %v680, 32
      %v758 = vpop.permute.xlu0 %757
      %759 = vrot.lane.b32.xlu0 %v681, 32
      %v760 = vpop.permute.xlu0 %759
      %761 = vrot.lane.b32.xlu0 %v682, 32
      %v762 = vpop.permute.xlu0 %761
      %763 = vrot.lane.b32.xlu0 %v683, 32
      %v764 = vpop.permute.xlu0 %763
      %765 = vrot.lane.b32.xlu0 %v684, 32
      %v766 = vpop.permute.xlu0 %765
      %767 = vrot.lane.b32.xlu0 %v685, 32
      %v768 = vpop.permute.xlu0 %767
      %769 = vrot.lane.b32.xlu0 %v686, 32
      %v770 = vpop.permute.xlu0 %769
      %771 = vrot.lane.b32.xlu0 %v687, 32
      %v772 = vpop.permute.xlu0 %771
      %773 = vrot.lane.b32.xlu0 %v688, 32
      %v774 = vpop.permute.xlu0 %773
      %775 = vrot.lane.b32.xlu0 %v689, 32
      %v776 = vpop.permute.xlu0 %775
      %777 = vrot.lane.b32.xlu0 %v690, 32
      %v778 = vpop.permute.xlu0 %777
      %779 = vrot.lane.b32.xlu0 %v691, 32
      %v780 = vpop.permute.xlu0 %779
      %781 = vrot.lane.b32.xlu0 %v692, 32
      %v782 = vpop.permute.xlu0 %781
      %783 = vrot.lane.b32.xlu0 %v693, 32
      %v784 = vpop.permute.xlu0 %783
      %785 = vrot.lane.b32.xlu0 %v694, 32
      %v786 = vpop.permute.xlu0 %785
      %787 = vrot.lane.b32.xlu0 %v695, 32
      %v788 = vpop.permute.xlu0 %787
      %789 = vrot.lane.b32.xlu0 %v696, 32
      %v790 = vpop.permute.xlu0 %789
      %791 = vrot.lane.b32.xlu0 %v697, 32
      %v792 = vpop.permute.xlu0 %791
      %793 = vrot.lane.b32.xlu0 %v698, 32
      %v794 = vpop.permute.xlu0 %793
      %vm827 = vcmask 261120
      %v828 = vsel %vm827, %v603, %v732
      %v829 = vsel %vm827, %v604, %v734
      %v830 = vsel %vm827, %v605, %v736
      %v831 = vsel %vm827, %v606, %v738
      %v832 = vsel %vm827, %v607, %v740
      %v833 = vsel %vm827, %v608, %v742
      %v834 = vsel %vm827, %v609, %v744
      %v835 = vsel %vm827, %v610, %v746
      %v836 = vsel %vm827, %v611, %v748
      %v837 = vsel %vm827, %v612, %v750
      %v838 = vsel %vm827, %v613, %v752
      %v839 = vsel %vm827, %v614, %v754
      %v840 = vsel %vm827, %v615, %v756
      %v841 = vsel %vm827, %v616, %v758
      %v842 = vsel %vm827, %v617, %v760
      %v843 = vsel %vm827, %v618, %v762
      %v844 = vsel %vm827, %v619, %v764
      %v845 = vsel %vm827, %v620, %v766
      %v846 = vsel %vm827, %v621, %v768
      %v847 = vsel %vm827, %v622, %v770
      %v848 = vsel %vm827, %v623, %v772
      %v849 = vsel %vm827, %v624, %v774
      %v850 = vsel %vm827, %v625, %v776
      %v851 = vsel %vm827, %v626, %v778
      %v852 = vsel %vm827, %v627, %v780
      %v853 = vsel %vm827, %v628, %v782
      %v854 = vsel %vm827, %v629, %v784
      %v855 = vsel %vm827, %v630, %v786
      %v856 = vsel %vm827, %v631, %v788
      %v857 = vsel %vm827, %v632, %v790
      %v858 = vsel %vm827, %v633, %v792
      %v859 = vsel %vm827, %v634, %v794
      %v860 = vmul.f32 %v828, 0.25
      %v861 = vmul.f32 %v829, 0.25
      %v862 = vmul.f32 %v830, 0.25
      %v863 = vmul.f32 %v831, 0.25
      %v864 = vmul.f32 %v832, 0.25
      %v865 = vmul.f32 %v833, 0.25
      %v866 = vmul.f32 %v834, 0.25
      %v867 = vmul.f32 %v835, 0.25
      %v868 = vmul.f32 %v836, 0.25
      %v869 = vmul.f32 %v837, 0.25
      %v870 = vmul.f32 %v838, 0.25
      %v871 = vmul.f32 %v839, 0.25
      %v872 = vmul.f32 %v840, 0.25
      %v873 = vmul.f32 %v841, 0.25
      %v874 = vmul.f32 %v842, 0.25
      %v875 = vmul.f32 %v843, 0.25
      %v876 = vmul.f32 %v844, 0.25
      %v877 = vmul.f32 %v845, 0.25
      %v878 = vmul.f32 %v846, 0.25
      %v879 = vmul.f32 %v847, 0.25
      %v880 = vmul.f32 %v848, 0.25
      %v881 = vmul.f32 %v849, 0.25
      %v882 = vmul.f32 %v850, 0.25
      %v883 = vmul.f32 %v851, 0.25
      %v884 = vmul.f32 %v852, 0.25
      %v885 = vmul.f32 %v853, 0.25
      %v886 = vmul.f32 %v854, 0.25
      %v887 = vmul.f32 %v855, 0.25
      %v888 = vmul.f32 %v856, 0.25
      %v889 = vmul.f32 %v857, 0.25
      %v890 = vmul.f32 %v828, 0.75
      %v891 = vmul.f32 %v829, 0.75
      %v892 = vmul.f32 %v830, 0.75
      %v893 = vmul.f32 %v831, 0.75
      %v894 = vmul.f32 %v832, 0.75
      %v895 = vmul.f32 %v833, 0.75
      %v896 = vmul.f32 %v834, 0.75
      %v897 = vmul.f32 %v835, 0.75
      %v898 = vmul.f32 %v836, 0.75
      %v899 = vmul.f32 %v837, 0.75
      %v900 = vmul.f32 %v838, 0.75
      %v901 = vmul.f32 %v839, 0.75
      %v902 = vmul.f32 %v840, 0.75
      %v903 = vmul.f32 %v841, 0.75
      %v904 = vmul.f32 %v842, 0.75
      %v905 = vmul.f32 %v843, 0.75
      %v906 = vmul.f32 %v844, 0.75
      %v907 = vmul.f32 %v845, 0.75
      %v908 = vmul.f32 %v846, 0.75
      %v909 = vmul.f32 %v847, 0.75
      %v910 = vmul.f32 %v848, 0.75
      %v911 = vmul.f32 %v849, 0.75
      %v912 = vmul.f32 %v850, 0.75
      %v913 = vmul.f32 %v851, 0.75
      %v914 = vmul.f32 %v852, 0.75
      %v915 = vmul.f32 %v853, 0.75
      %v916 = vmul.f32 %v854, 0.75
      %v917 = vmul.f32 %v855, 0.75
      %v918 = vmul.f32 %v856, 0.75
      %v919 = vmul.f32 %v857, 0.75
      %v920 = vmul.f32 %v858, 0.75
      %v921 = vmul.f32 %v859, 0.75
      %v922 = vadd.f32 %v860, %v890
      %v923 = vadd.f32 %v861, %v891
      %v924 = vadd.f32 %v860, %v892
      %v925 = vadd.f32 %v861, %v893
      %v926 = vadd.f32 %v862, %v894
      %v927 = vadd.f32 %v863, %v895
      %v928 = vadd.f32 %v864, %v896
      %v929 = vadd.f32 %v865, %v897
      %v930 = vadd.f32 %v866, %v898
      %v931 = vadd.f32 %v867, %v899
      %v932 = vadd.f32 %v868, %v900
      %v933 = vadd.f32 %v869, %v901
      %v934 = vadd.f32 %v870, %v902
      %v935 = vadd.f32 %v871, %v903
      %v936 = vadd.f32 %v872, %v904
      %v937 = vadd.f32 %v873, %v905
      %v938 = vadd.f32 %v874, %v906
      %v939 = vadd.f32 %v875, %v907
      %v940 = vadd.f32 %v876, %v908
      %v941 = vadd.f32 %v877, %v909
      %v942 = vadd.f32 %v878, %v910
      %v943 = vadd.f32 %v879, %v911
      %v944 = vadd.f32 %v880, %v912
      %v945 = vadd.f32 %v881, %v913
      %v946 = vadd.f32 %v882, %v914
      %v947 = vadd.f32 %v883, %v915
      %v948 = vadd.f32 %v884, %v916
      %v949 = vadd.f32 %v885, %v917
      %v950 = vadd.f32 %v886, %v918
      %v951 = vadd.f32 %v887, %v919
      %v952 = vadd.f32 %v888, %v920
      %v953 = vadd.f32 %v889, %v921
      %v954 = vmul.f32 %v858, 0.25
      %v955 = vmul.f32 %v859, 0.25
      %v956 = vadd.f32 %v890, %v862
      %v957 = vadd.f32 %v891, %v863
      %v958 = vadd.f32 %v892, %v864
      %v959 = vadd.f32 %v893, %v865
      %v960 = vadd.f32 %v894, %v866
      %v961 = vadd.f32 %v895, %v867
      %v962 = vadd.f32 %v896, %v868
      %v963 = vadd.f32 %v897, %v869
      %v964 = vadd.f32 %v898, %v870
      %v965 = vadd.f32 %v899, %v871
      %v966 = vadd.f32 %v900, %v872
      %v967 = vadd.f32 %v901, %v873
      %v968 = vadd.f32 %v902, %v874
      %v969 = vadd.f32 %v903, %v875
      %v970 = vadd.f32 %v904, %v876
      %v971 = vadd.f32 %v905, %v877
      %v972 = vadd.f32 %v906, %v878
      %v973 = vadd.f32 %v907, %v879
      %v974 = vadd.f32 %v908, %v880
      %v975 = vadd.f32 %v909, %v881
      %v976 = vadd.f32 %v910, %v882
      %v977 = vadd.f32 %v911, %v883
      %v978 = vadd.f32 %v912, %v884
      %v979 = vadd.f32 %v913, %v885
      %v980 = vadd.f32 %v914, %v886
      %v981 = vadd.f32 %v915, %v887
      %v982 = vadd.f32 %v916, %v888
      %v983 = vadd.f32 %v917, %v889
      %v984 = vadd.f32 %v918, %v954
      %v985 = vadd.f32 %v919, %v955
      %v986 = vadd.f32 %v920, %v954
      %v987 = vadd.f32 %v921, %v955
      %vm988 = vcmask 523264
      %989 = vst.msk [vmem:[%s170] sm:$0xff] %vm988, %v922
      %990 = vst.msk [vmem:[%s170 + $0x8] sm:$0xff] %vm988, %v923
      %991 = vst.msk [vmem:[%s170 + $0x10] sm:$0xff] %vm988, %v956
      %992 = vst.msk [vmem:[%s170 + $0x18] sm:$0xff] %vm988, %v957
      %993 = vst.msk [vmem:[%s170 + $0x20] sm:$0xff] %vm988, %v924
      %994 = vst.msk [vmem:[%s170 + $0x28] sm:$0xff] %vm988, %v925
      %995 = vst.msk [vmem:[%s170 + $0x30] sm:$0xff] %vm988, %v958
      %996 = vst.msk [vmem:[%s170 + $0x38] sm:$0xff] %vm988, %v959
      %997 = vst.msk [vmem:[%s170 + $0x40] sm:$0xff] %vm988, %v926
      %998 = vst.msk [vmem:[%s170 + $0x48] sm:$0xff] %vm988, %v927
      %999 = vst.msk [vmem:[%s170 + $0x50] sm:$0xff] %vm988, %v960
      %1000 = vst.msk [vmem:[%s170 + $0x58] sm:$0xff] %vm988, %v961
      %1001 = vst.msk [vmem:[%s170 + $0x60] sm:$0xff] %vm988, %v928
      %1002 = vst.msk [vmem:[%s170 + $0x68] sm:$0xff] %vm988, %v929
      %1003 = vst.msk [vmem:[%s170 + $0x70] sm:$0xff] %vm988, %v962
      %1004 = vst.msk [vmem:[%s170 + $0x78] sm:$0xff] %vm988, %v963
      %1005 = vst.msk [vmem:[%s170 + $0x80] sm:$0xff] %vm988, %v930
      %1006 = vst.msk [vmem:[%s170 + $0x88] sm:$0xff] %vm988, %v931
      %1007 = vst.msk [vmem:[%s170 + $0x90] sm:$0xff] %vm988, %v964
      %1008 = vst.msk [vmem:[%s170 + $0x98] sm:$0xff] %vm988, %v965
      %1009 = vst.msk [vmem:[%s170 + $0xa0] sm:$0xff] %vm988, %v932
      %1010 = vst.msk [vmem:[%s170 + $0xa8] sm:$0xff] %vm988, %v933
      %1011 = vst.msk [vmem:[%s170 + $0xb0] sm:$0xff] %vm988, %v966
      %1012 = vst.msk [vmem:[%s170 + $0xb8] sm:$0xff] %vm988, %v967
      %1013 = vst.msk [vmem:[%s170 + $0xc0] sm:$0xff] %vm988, %v934
      %1014 = vst.msk [vmem:[%s170 + $0xc8] sm:$0xff] %vm988, %v935
      %1015 = vst.msk [vmem:[%s170 + $0xd0] sm:$0xff] %vm988, %v968
      %1016 = vst.msk [vmem:[%s170 + $0xd8] sm:$0xff] %vm988, %v969
      %1017 = vst.msk [vmem:[%s170 + $0xe0] sm:$0xff] %vm988, %v936
      %1018 = vst.msk [vmem:[%s170 + $0xe8] sm:$0xff] %vm988, %v937
      %1019 = vst.msk [vmem:[%s170 + $0xf0] sm:$0xff] %vm988, %v970
      %1020 = vst.msk [vmem:[%s170 + $0xf8] sm:$0xff] %vm988, %v971
      %1021 = vst.msk [vmem:[%s170 + $0x100] sm:$0xff] %vm988, %v938
      %1022 = vst.msk [vmem:[%s170 + $0x108] sm:$0xff] %vm988, %v939
      %1023 = vst.msk [vmem:[%s170 + $0x110] sm:$0xff] %vm988, %v972
      %1024 = vst.msk [vmem:[%s170 + $0x118] sm:$0xff] %vm988, %v973
      %1025 = vst.msk [vmem:[%s170 + $0x120] sm:$0xff] %vm988, %v940
      %1026 = vst.msk [vmem:[%s170 + $0x128] sm:$0xff] %vm988, %v941
      %1027 = vst.msk [vmem:[%s170 + $0x130] sm:$0xff] %vm988, %v974
      %1028 = vst.msk [vmem:[%s170 + $0x138] sm:$0xff] %vm988, %v975
      %1029 = vst.msk [vmem:[%s170 + $0x140] sm:$0xff] %vm988, %v942
      %1030 = vst.msk [vmem:[%s170 + $0x148] sm:$0xff] %vm988, %v943
      %1031 = vst.msk [vmem:[%s170 + $0x150] sm:$0xff] %vm988, %v976
      %1032 = vst.msk [vmem:[%s170 + $0x158] sm:$0xff] %vm988, %v977
      %1033 = vst.msk [vmem:[%s170 + $0x160] sm:$0xff] %vm988, %v944
      %1034 = vst.msk [vmem:[%s170 + $0x168] sm:$0xff] %vm988, %v945
      %1035 = vst.msk [vmem:[%s170 + $0x170] sm:$0xff] %vm988, %v978
      %1036 = vst.msk [vmem:[%s170 + $0x178] sm:$0xff] %vm988, %v979
      %1037 = vst.msk [vmem:[%s170 + $0x180] sm:$0xff] %vm988, %v946
      %1038 = vst.msk [vmem:[%s170 + $0x188] sm:$0xff] %vm988, %v947
      %1039 = vst.msk [vmem:[%s170 + $0x190] sm:$0xff] %vm988, %v980
      %1040 = vst.msk [vmem:[%s170 + $0x198] sm:$0xff] %vm988, %v981
      %1041 = vst.msk [vmem:[%s170 + $0x1a0] sm:$0xff] %vm988, %v948
      %1042 = vst.msk [vmem:[%s170 + $0x1a8] sm:$0xff] %vm988, %v949
      %1043 = vst.msk [vmem:[%s170 + $0x1b0] sm:$0xff] %vm988, %v982
      %1044 = vst.msk [vmem:[%s170 + $0x1b8] sm:$0xff] %vm988, %v983
      %1045 = vst.msk [vmem:[%s170 + $0x1c0] sm:$0xff] %vm988, %v950
      %1046 = vst.msk [vmem:[%s170 + $0x1c8] sm:$0xff] %vm988, %v951
      %1047 = vst.msk [vmem:[%s170 + $0x1d0] sm:$0xff] %vm988, %v984
      %1048 = vst.msk [vmem:[%s170 + $0x1d8] sm:$0xff] %vm988, %v985
      %1049 = vst.msk [vmem:[%s170 + $0x1e0] sm:$0xff] %vm988, %v952
      %1050 = vst.msk [vmem:[%s170 + $0x1e8] sm:$0xff] %vm988, %v953
      %1051 = vst.msk [vmem:[%s170 + $0x1f0] sm:$0xff] %vm988, %v986
      %1052 = vst.msk [vmem:[%s170 + $0x1f8] sm:$0xff] %vm988, %v987
      %p1053 = scmp.lt.s32.totalorder %s14, 1
      %s1054 = scalar_select %p1053, %s14, 1
      %s1055 = smul.addr %s1054, 64
      %s1056 = smul.addr %s1055, 8
      %s1057 = scalar_lea.vmem %s3, %s1056
      // Predicated region
      $region33: #{decoder_block_forward.5} parent=31 // pred_check
        %p1058 = pneg %p100
      $region34: #{decoder_block_forward.5} parent=31 // pred_check_branch
        %1060 = sbr.rel (%p1058) target = $region36
      $region35: #{decoder_block_forward.5} parent=31 // pred_region
        _
      $region36: #{decoder_block_forward.5} parent=31 // pred_fallthru
        _
    $region32: #{decoder_block_forward.5} parent=5 // pred_fallthru
      _
    %p1061 = scmp.le.s32.totalorder 2, %s9
    // Predicated region
    $region37: #{decoder_block_forward.5} parent=5 // pred_check
      %p1062 = pneg %p1061
    $region38: #{decoder_block_forward.5} parent=5 // pred_check_branch
      %1064 = sbr.rel (%p1062) target = $region40
    $region39: #{decoder_block_forward.5} parent=5 // pred_region
      %s1065 = ssub.s32 %s9, 2
      // Predicated region
      $region41: #{decoder_block_forward.5} parent=39 // pred_check
        %p1066 = pneg %p106
      $region42: #{decoder_block_forward.5} parent=39 // pred_check_branch
        %1068 = sbr.rel (%p1066) target = $region44
      $region43: #{decoder_block_forward.5} parent=39 // pred_region
        %p1069 = scmp.lt.s32.totalorder %s15, 1
        %s1070 = scalar_select %p1069, %s15, 1
        %s1071 = smul.addr %s1070, 64
        %s1072 = smul.addr %s1071, 8
        %s1073 = scalar_lea.vmem %s3, %s1072
      $region44: #{decoder_block_forward.5} parent=39 // pred_fallthru
        _
    $region40: #{decoder_block_forward.5} parent=5 // pred_fallthru
      _
  $region6: #{decoder_block_forward.5} parent=0 // loop_footer
    %s13 = sadd.s32 1, %s9
  $region7: #{decoder_block_forward.5} parent=0 // loop_footer_branch
    %8 = sbr.rel target = $region3
  $region8: #{decoder_block_forward.5} parent=0 // loop_exit
    _

// kernel: decoder_block_forward.3
$region0: #{decoder_block_forward.3}
  #allocation0 [shape = 'u32[]', space=smem, size = 0x4, offset = 0x4, fixed_abs, tag = 'smem constant byte address 0x4 - core index']
  #allocation1 [shape = 'u32[144,128]{1,0:T(1,128)}', space=vmem, size = 0x12000, scoped, tag = 'internal scratch']
  %s0 = inlined_call_operand.vmem [shape: f32[2,16,16,64], index: 0, kind: input, shape index: {}]
  %s1 = inlined_call_operand.vmem [shape: bf16[1152,128], index: 1, kind: input, shape index: {}]
  %s2 = inlined_call_operand.vmem [shape: f32[1,128], index: 2, kind: input, shape index: {}]
  %s3 = inlined_call_operand.vmem [shape: f32[2,256,128], index: 3, kind: output, shape index: {0}]
  %s4 = inlined_call_operand.vmem [shape: f32[2,1,128], index: 4, kind: output, shape index: {1}]
  %s5 = inlined_call_operand.vmem [shape: f32[2,1,128], index: 5, kind: output, shape index: {2}]
  %6 = xla_tuple %s3, %s4, %s5
  %s7 = sld [smem:[#allocation0]]
  $region61: #{decoder_block_forward.3} parent=0
    _
  %s9 = ssub.s32 1, %s7
  %s10 = scalar_select 0, %s9, %s7
  loop: start=0, step=1, limit=4
  $region2: #{decoder_block_forward.3} parent=0 // loop_pre_header
    _
  $region3: #{decoder_block_forward.3} parent=0 // loop_header
    %s12 = sphi 0, %s16
    %p13 = scmp.ge.s32.totalorder %s12, 4
    %s22 = sphi 0, %s24
    %s25 = sphi 0, %s22
    %s26 = sphi 0, %s25
    %s42 = sphi 0, %s26
    %s46 = sphi 0, %s46
    %s48 = sphi 0, %s46
    %s49 = sphi 0, %s48
    %s63 = sphi 0, %s49
    %s67 = sphi 0, %s67
    %s69 = sphi 0, %s67
    %s70 = sphi 0, %s69
    %s84 = sphi 0, %s70
    %s90 = sphi 0, %s92
    %s93 = sphi 0, %s90
    %s94 = sphi 0, %s93
    %s110 = sphi 0, %s94
    %s116 = sphi 0, %s118
    %s119 = sphi 0, %s116
    %s120 = sphi 0, %s119
    %s136 = sphi 0, %s120
    %s142 = sphi 0, %s144
    %s145 = sphi 0, %s142
    %s146 = sphi 0, %s145
    %s162 = sphi 0, %s146
  $region4: #{decoder_block_forward.3} parent=0 // loop_header_branch
    %15 = sbr.rel (%p13) target = $region8
  $region5: #{decoder_block_forward.3} parent=0 // loop_body
    %s17 = ssub.s32 %s12, 1
    %s18 = ssub.s32 %s12, 2
    %s19 = sadd.s32 %s12, 1
    %s20 = ssub.s32 %s12, %s19
    %p21 = scmp.eq.s32.totalorder %s20, 0
    %s23 = sadd.s32 %s22, 1
    %s24 = scalar_select %p21, %s22, %s23
    %p27 = pneg %p21
    %p28 = scmp.eq.s32.totalorder %s12, 1
    %p29 = por %p27, %p28
    %p30 = scmp.ne.s32.totalorder %s22, %s25
    %p31 = scmp.eq.s32.totalorder %s12, 0
    %p32 = por %p30, %p31
    %p33 = scmp.ne.s32.totalorder %s22, %s25
    %p34 = scmp.eq.s32.totalorder %s17, 1
    %p35 = por %p33, %p34
    %p36 = scmp.ne.s32.totalorder %s25, %s26
    %p37 = scmp.eq.s32.totalorder %s17, 0
    %p38 = por %p36, %p37
    %p39 = scmp.ne.s32.totalorder %s25, %s26
    %p40 = scmp.eq.s32.totalorder %s18, 1
    %p41 = por %p39, %p40
    %p43 = scmp.ne.s32.totalorder %s26, %s42
    %p44 = scmp.eq.s32.totalorder %s18, 0
    %p45 = por %p43, %p44
    %s47 = sadd.s32 %s46, 1
    %p50 = scmp.eq.s32.totalorder %s12, 1
    %p51 = scmp.ne.s32.totalorder %s46, %s48
    %p52 = scmp.eq.s32.totalorder %s12, 0
    %p53 = por %p51, %p52
    %p54 = scmp.ne.s32.totalorder %s46, %s48
    %p55 = scmp.eq.s32.totalorder %s17, 1
    %p56 = por %p54, %p55
    %p57 = scmp.ne.s32.totalorder %s48, %s49
    %p58 = scmp.eq.s32.totalorder %s17, 0
    %p59 = por %p57, %p58
    %p60 = scmp.ne.s32.totalorder %s48, %s49
    %p61 = scmp.eq.s32.totalorder %s18, 1
    %p62 = por %p60, %p61
    %p64 = scmp.ne.s32.totalorder %s49, %s63
    %p65 = scmp.eq.s32.totalorder %s18, 0
    %p66 = por %p64, %p65
    %s68 = sadd.s32 %s67, 1
    %p71 = scmp.eq.s32.totalorder %s12, 1
    %p72 = scmp.ne.s32.totalorder %s67, %s69
    %p73 = scmp.eq.s32.totalorder %s12, 0
    %p74 = por %p72, %p73
    %p75 = scmp.ne.s32.totalorder %s67, %s69
    %p76 = scmp.eq.s32.totalorder %s17, 1
    %p77 = por %p75, %p76
    %p78 = scmp.ne.s32.totalorder %s69, %s70
    %p79 = scmp.eq.s32.totalorder %s17, 0
    %p80 = por %p78, %p79
    %p81 = scmp.ne.s32.totalorder %s69, %s70
    %p82 = scmp.eq.s32.totalorder %s18, 1
    %p83 = por %p81, %p82
    %p85 = scmp.ne.s32.totalorder %s70, %s84
    %p86 = scmp.eq.s32.totalorder %s18, 0
    %p87 = por %p85, %p86
    %s88 = ssub.s32 %s12, %s19
    %p89 = scmp.eq.s32.totalorder %s88, 0
    %s91 = sadd.s32 %s90, 1
    %s92 = scalar_select %p89, %s90, %s91
    %p95 = pneg %p89
    %p96 = scmp.eq.s32.totalorder %s12, 1
    %p97 = por %p95, %p96
    %p98 = scmp.ne.s32.totalorder %s90, %s93
    %p99 = scmp.eq.s32.totalorder %s12, 0
    %p100 = por %p98, %p99
    %p101 = scmp.ne.s32.totalorder %s90, %s93
    %p102 = scmp.eq.s32.totalorder %s17, 1
    %p103 = por %p101, %p102
    %p104 = scmp.ne.s32.totalorder %s93, %s94
    %p105 = scmp.eq.s32.totalorder %s17, 0
    %p106 = por %p104, %p105
    %p107 = scmp.ne.s32.totalorder %s93, %s94
    %p108 = scmp.eq.s32.totalorder %s18, 1
    %p109 = por %p107, %p108
    %p111 = scmp.ne.s32.totalorder %s94, %s110
    %p112 = scmp.eq.s32.totalorder %s18, 0
    %p113 = por %p111, %p112
    %s114 = ssub.s32 %s12, %s19
    %p115 = scmp.eq.s32.totalorder %s114, 0
    %s117 = sadd.s32 %s116, 1
    %s118 = scalar_select %p115, %s116, %s117
    %p121 = pneg %p115
    %p122 = scmp.eq.s32.totalorder %s12, 1
    %p123 = por %p121, %p122
    %p124 = scmp.ne.s32.totalorder %s116, %s119
    %p125 = scmp.eq.s32.totalorder %s12, 0
    %p126 = por %p124, %p125
    %p127 = scmp.ne.s32.totalorder %s116, %s119
    %p128 = scmp.eq.s32.totalorder %s17, 1
    %p129 = por %p127, %p128
    %p130 = scmp.ne.s32.totalorder %s119, %s120
    %p131 = scmp.eq.s32.totalorder %s17, 0
    %p132 = por %p130, %p131
    %p133 = scmp.ne.s32.totalorder %s119, %s120
    %p134 = scmp.eq.s32.totalorder %s18, 1
    %p135 = por %p133, %p134
    %p137 = scmp.ne.s32.totalorder %s120, %s136
    %p138 = scmp.eq.s32.totalorder %s18, 0
    %p139 = por %p137, %p138
    %s140 = ssub.s32 %s12, %s19
    %p141 = scmp.eq.s32.totalorder %s140, 0
    %s143 = sadd.s32 %s142, 1
    %s144 = scalar_select %p141, %s142, %s143
    %p147 = pneg %p141
    %p148 = scmp.eq.s32.totalorder %s12, 1
    %p149 = por %p147, %p148
    %p150 = scmp.ne.s32.totalorder %s142, %s145
    %p151 = scmp.eq.s32.totalorder %s12, 0
    %p152 = por %p150, %p151
    %p153 = scmp.ne.s32.totalorder %s142, %s145
    %p154 = scmp.eq.s32.totalorder %s17, 1
    %p155 = por %p153, %p154
    %p156 = scmp.ne.s32.totalorder %s145, %s146
    %p157 = scmp.eq.s32.totalorder %s17, 0
    %p158 = por %p156, %p157
    %p159 = scmp.ne.s32.totalorder %s145, %s146
    %p160 = scmp.eq.s32.totalorder %s18, 1
    %p161 = por %p159, %p160
    %p163 = scmp.ne.s32.totalorder %s146, %s162
    %p164 = scmp.eq.s32.totalorder %s18, 0
    %p165 = por %p163, %p164
    %p166 = scmp.le.s32.totalorder 1, %s12
    %p167 = scmp.lt.s32.totalorder %s12, 3
    %p168 = pnand %p166, %p167
    %p169 = pneg %p168
    // Predicated region
    $region9: #{decoder_block_forward.3} parent=5 // pred_check
      _
    $region10: #{decoder_block_forward.3} parent=5 // pred_check_branch
      %171 = sbr.rel (%p168) target = $region12
    $region11: #{decoder_block_forward.3} parent=5 // pred_region
      %s172 = ssub.s32 %s12, 1
      // Predicated region
      $region13: #{decoder_block_forward.3} parent=11 // pred_check
        %p173 = pneg %p59
      $region14: #{decoder_block_forward.3} parent=11 // pred_check_branch
        %175 = sbr.rel (%p173) target = $region16
      $region15: #{decoder_block_forward.3} parent=11 // pred_region
        _
      $region16: #{decoder_block_forward.3} parent=11 // pred_fallthru
        _
      // Predicated region
      $region17: #{decoder_block_forward.3} parent=11 // pred_check
        %p176 = pneg %p80
      $region18: #{decoder_block_forward.3} parent=11 // pred_check_branch
        %178 = sbr.rel (%p176) target = $region20
      $region19: #{decoder_block_forward.3} parent=11 // pred_region
        _
      $region20: #{decoder_block_forward.3} parent=11 // pred_fallthru
        _
    $region12: #{decoder_block_forward.3} parent=5 // pred_fallthru
      _
    %p179 = scmp.lt.s32.totalorder %s12, 2
    // Predicated region
    $region21: #{decoder_block_forward.3} parent=5 // pred_check
      %p180 = pneg %p179
    $region22: #{decoder_block_forward.3} parent=5 // pred_check_branch
      %182 = sbr.rel (%p180) target = $region24
    $region23: #{decoder_block_forward.3} parent=5 // pred_region
      // Predicated region
      $region25: #{decoder_block_forward.3} parent=23 // pred_check
        %p183 = pneg %p32
      $region26: #{decoder_block_forward.3} parent=23 // pred_check_branch
        %185 = sbr.rel (%p183) target = $region28
      $region27: #{decoder_block_forward.3} parent=23 // pred_region
        %p186 = scmp.lt.s32.totalorder %s12, 1
        %s187 = scalar_select %p186, %s12, 1
        %s188 = smul.addr %s187, 32
        %s189 = smul.addr %s188, 8
        %s190 = scalar_lea.vmem %s0, %s189
      $region28: #{decoder_block_forward.3} parent=23 // pred_fallthru
        _
    $region24: #{decoder_block_forward.3} parent=5 // pred_fallthru
      _
    %p191 = scmp.le.s32.totalorder 1, %s12
    %p192 = scmp.lt.s32.totalorder %s12, 3
    %p193 = pnand %p191, %p192
    %p194 = pneg %p193
    // Predicated region
    $region29: #{decoder_block_forward.3} parent=5 // pred_check
      _
    $region30: #{decoder_block_forward.3} parent=5 // pred_check_branch
      %196 = sbr.rel (%p193) target = $region32
    $region31: #{decoder_block_forward.3} parent=5 // pred_region
      %s197 = ssub.s32 %s12, 1
      %p198 = scmp.lt.s32.totalorder %s17, 1
      %s199 = scalar_select %p198, %s17, 1
      %s200 = smul.addr %s199, 32
      %s201 = smul.addr %s200, 8
      %s202 = scalar_lea.vmem %s0, %s201
      %p203 = pneg %p38
      %p204 = pneg %p35
      %p205 = pneg %p59
      %p206 = pneg %p56
      %p207 = pneg %p80
      %p208 = pneg %p77
      %p209 = pneg %p106
      %p210 = pneg %p103
      %p211 = scmp.lt.s32.totalorder %s17, 1
      %s212 = scalar_select %p211, %s17, 1
      %s213 = smul.addr %s212, 32
      %s214 = smul.addr %s213, 8
      %s215 = scalar_lea.vmem %s3, %s214
      %p216 = pneg %p132
      %p217 = pneg %p129
      %p218 = scmp.lt.s32.totalorder %s17, 1
      %s219 = scalar_select %p218, %s17, 1
      %s220 = scalar_lea.vmem %s4, %s219
      %p221 = pneg %p158
      %p222 = pneg %p155
      %p223 = scmp.lt.s32.totalorder %s17, 1
      %s224 = scalar_select %p223, %s17, 1
      %s225 = scalar_lea.vmem %s5, %s224
      %p226 = scmp.lt.s32.totalorder %s17, 1
      %s227 = scalar_select %p226, %s17, 1
      %s228 = smul.addr %s227, 32
      %s229 = smul.addr %s228, 8
      %s230 = scalar_lea.vmem %s0, %s229
      %p231 = scmp.lt.s32.totalorder %s17, 1
      %s232 = scalar_select %p231, %s17, 1
      %s233 = smul.addr %s232, 32
      %s234 = smul.addr %s233, 8
      %s235 = scalar_lea.vmem %s3, %s234
      %p236 = scmp.lt.s32.totalorder %s17, 1
      %s237 = scalar_select %p236, %s17, 1
      %s238 = scalar_lea.vmem %s4, %s237
      %p239 = scmp.lt.s32.totalorder %s17, 1
      %s240 = scalar_select %p239, %s17, 1
      %s241 = scalar_lea.vmem %s5, %s240
      %v243 = vld [vmem:[%s230] sm:$0xff]
      %v244 = vld [vmem:[%s230 + $0x8] sm:$0xff]
      %v245 = vld [vmem:[%s230 + $0x10] sm:$0xff]
      %v246 = vld [vmem:[%s230 + $0x18] sm:$0xff]
      %v247 = vld [vmem:[%s230 + $0x20] sm:$0xff]
      %v248 = vld [vmem:[%s230 + $0x28] sm:$0xff]
      %v249 = vld [vmem:[%s230 + $0x30] sm:$0xff]
      %v250 = vld [vmem:[%s230 + $0x38] sm:$0xff]
      %v251 = vld [vmem:[%s230 + $0x40] sm:$0xff]
      %v252 = vld [vmem:[%s230 + $0x48] sm:$0xff]
      %v253 = vld [vmem:[%s230 + $0x50] sm:$0xff]
      %v254 = vld [vmem:[%s230 + $0x58] sm:$0xff]
      %v255 = vld [vmem:[%s230 + $0x60] sm:$0xff]
      %v256 = vld [vmem:[%s230 + $0x68] sm:$0xff]
      %v257 = vld [vmem:[%s230 + $0x70] sm:$0xff]
      %v258 = vld [vmem:[%s230 + $0x78] sm:$0xff]
      %v259 = vld [vmem:[%s230 + $0x80] sm:$0xff]
      %v260 = vld [vmem:[%s230 + $0x88] sm:$0xff]
      %v261 = vld [vmem:[%s230 + $0x90] sm:$0xff]
      %v262 = vld [vmem:[%s230 + $0x98] sm:$0xff]
      %v263 = vld [vmem:[%s230 + $0xa0] sm:$0xff]
      %v264 = vld [vmem:[%s230 + $0xa8] sm:$0xff]
      %v265 = vld [vmem:[%s230 + $0xb0] sm:$0xff]
      %v266 = vld [vmem:[%s230 + $0xb8] sm:$0xff]
      %v267 = vld [vmem:[%s230 + $0xc0] sm:$0xff]
      %v268 = vld [vmem:[%s230 + $0xc8] sm:$0xff]
      %v269 = vld [vmem:[%s230 + $0xd0] sm:$0xff]
      %v270 = vld [vmem:[%s230 + $0xd8] sm:$0xff]
      %v271 = vld [vmem:[%s230 + $0xe0] sm:$0xff]
      %v272 = vld [vmem:[%s230 + $0xe8] sm:$0xff]
      %v273 = vld [vmem:[%s230 + $0xf0] sm:$0xff]
      %v274 = vld [vmem:[%s230 + $0xf8] sm:$0xff]
      %vm275 = vcmask 523264
      %v276 = vsel %vm275, %v243, 0.0
      %v277 = vsel %vm275, %v244, 0.0
      %v278 = vsel %vm275, %v245, 0.0
      %v279 = vsel %vm275, %v246, 0.0
      %v280 = vsel %vm275, %v247, 0.0
      %v281 = vsel %vm275, %v248, 0.0
      %v282 = vsel %vm275, %v249, 0.0
      %v283 = vsel %vm275, %v250, 0.0
      %v284 = vsel %vm275, %v251, 0.0
      %v285 = vsel %vm275, %v252, 0.0
      %v286 = vsel %vm275, %v253, 0.0
      %v287 = vsel %vm275, %v254, 0.0
      %v288 = vsel %vm275, %v255, 0.0
      %v289 = vsel %vm275, %v256, 0.0
      %v290 = vsel %vm275, %v257, 0.0
      %v291 = vsel %vm275, %v258, 0.0
      %v292 = vsel %vm275, %v259, 0.0
      %v293 = vsel %vm275, %v260, 0.0
      %v294 = vsel %vm275, %v261, 0.0
      %v295 = vsel %vm275, %v262, 0.0
      %v296 = vsel %vm275, %v263, 0.0
      %v297 = vsel %vm275, %v264, 0.0
      %v298 = vsel %vm275, %v265, 0.0
      %v299 = vsel %vm275, %v266, 0.0
      %v300 = vsel %vm275, %v267, 0.0
      %v301 = vsel %vm275, %v268, 0.0
      %v302 = vsel %vm275, %v269, 0.0
      %v303 = vsel %vm275, %v270, 0.0
      %v304 = vsel %vm275, %v271, 0.0
      %v305 = vsel %vm275, %v272, 0.0
      %v306 = vsel %vm275, %v273, 0.0
      %v307 = vsel %vm275, %v274, 0.0
      %vm341 = vcmask 1040384
      %v342 = vrot.slane 0.0, 7
      %v343 = vsel %vm341, %v342, %v342
      %v344 = vrot.slane %v276, 7
      %v345 = vrot.slane %v277, 7
      %v346 = vsel %vm341, %v344, %v345
      %v347 = vrot.slane %v278, 7
      %v348 = vrot.slane %v279, 7
      %v349 = vsel %vm341, %v347, %v348
      %v350 = vrot.slane %v280, 7
      %v351 = vrot.slane %v281, 7
      %v352 = vsel %vm341, %v350, %v351
      %v353 = vrot.slane %v282, 7
      %v354 = vrot.slane %v283, 7
      %v355 = vsel %vm341, %v353, %v354
      %v356 = vrot.slane %v284, 7
      %v357 = vrot.slane %v285, 7
      %v358 = vsel %vm341, %v356, %v357
      %v359 = vrot.slane %v286, 7
      %v360 = vrot.slane %v287, 7
      %v361 = vsel %vm341, %v359, %v360
      %v362 = vrot.slane %v288, 7
      %v363 = vrot.slane %v289, 7
      %v364 = vsel %vm341, %v362, %v363
      %v365 = vrot.slane %v290, 7
      %v366 = vrot.slane %v291, 7
      %v367 = vsel %vm341, %v365, %v366
      %v368 = vrot.slane %v292, 7
      %v369 = vrot.slane %v293, 7
      %v370 = vsel %vm341, %v368, %v369
      %v371 = vrot.slane %v294, 7
      %v372 = vrot.slane %v295, 7
      %v373 = vsel %vm341, %v371, %v372
      %v374 = vrot.slane %v296, 7
      %v375 = vrot.slane %v297, 7
      %v376 = vsel %vm341, %v374, %v375
      %v377 = vrot.slane %v298, 7
      %v378 = vrot.slane %v299, 7
      %v379 = vsel %vm341, %v377, %v378
      %v380 = vrot.slane %v300, 7
      %v381 = vrot.slane %v301, 7
      %v382 = vsel %vm341, %v380, %v381
      %v383 = vrot.slane %v302, 7
      %v384 = vrot.slane %v303, 7
      %v385 = vsel %vm341, %v383, %v384
      %v386 = vrot.slane %v304, 7
      %v387 = vrot.slane %v305, 7
      %v388 = vsel %vm341, %v386, %v387
      %v389 = vrot.slane %v306, 7
      %v390 = vrot.slane %v307, 7
      %v391 = vsel %vm341, %v389, %v390
      %v442 = vsel %vm341, 0.0, %v342
      %v443 = vsel %vm341, 0.0, %v344
      %v444 = vsel %vm341, 0.0, %v347
      %v445 = vsel %vm341, 0.0, %v350
      %v446 = vsel %vm341, 0.0, %v353
      %v447 = vsel %vm341, 0.0, %v356
      %v448 = vsel %vm341, 0.0, %v359
      %v449 = vsel %vm341, 0.0, %v362
      %v450 = vsel %vm341, 0.0, %v365
      %v451 = vsel %vm341, 0.0, %v368
      %v452 = vsel %vm341, 0.0, %v371
      %v453 = vsel %vm341, 0.0, %v374
      %v454 = vsel %vm341, 0.0, %v377
      %v455 = vsel %vm341, 0.0, %v380
      %v456 = vsel %vm341, 0.0, %v383
      %v457 = vsel %vm341, 0.0, %v386
      %v458 = vsel %vm341, 0.0, %v389
      %v459 = vsel %vm341, %v342, 0.0
      %v460 = vsel %vm341, %v345, 0.0
      %v461 = vsel %vm341, %v348, 0.0
      %v462 = vsel %vm341, %v351, 0.0
      %v463 = vsel %vm341, %v354, 0.0
      %v464 = vsel %vm341, %v357, 0.0
      %v465 = vsel %vm341, %v360, 0.0
      %v466 = vsel %vm341, %v363, 0.0
      %v467 = vsel %vm341, %v366, 0.0
      %v468 = vsel %vm341, %v369, 0.0
      %v469 = vsel %vm341, %v372, 0.0
      %v470 = vsel %vm341, %v375, 0.0
      %v471 = vsel %vm341, %v378, 0.0
      %v472 = vsel %vm341, %v381, 0.0
      %v473 = vsel %vm341, %v384, 0.0
      %v474 = vsel %vm341, %v387, 0.0
      %v475 = vsel %vm341, %v390, 0.0
      %vm508 = vcmask 1046528
      %v509 = vrot.slane %v442, 1
      %v510 = vrot.slane %v343, 1
      %v511 = vsel %vm508, %v509, %v510
      %v512 = vrot.slane %v459, 1
      %v513 = vsel %vm508, %v510, %v512
      %v514 = vrot.slane %v443, 1
      %v515 = vrot.slane %v346, 1
      %v516 = vsel %vm508, %v514, %v515
      %v517 = vrot.slane %v460, 1
      %v518 = vsel %vm508, %v515, %v517
      %v519 = vrot.slane %v444, 1
      %v520 = vrot.slane %v349, 1
      %v521 = vsel %vm508, %v519, %v520
      %v522 = vrot.slane %v461, 1
      %v523 = vsel %vm508, %v520, %v522
      %v524 = vrot.slane %v445, 1
      %v525 = vrot.slane %v352, 1
      %v526 = vsel %vm508, %v524, %v525
      %v527 = vrot.slane %v462, 1
      %v528 = vsel %vm508, %v525, %v527
      %v529 = vrot.slane %v446, 1
      %v530 = vrot.slane %v355, 1
      %v531 = vsel %vm508, %v529, %v530
      %v532 = vrot.slane %v463, 1
      %v533 = vsel %vm508, %v530, %v532
      %v534 = vrot.slane %v447, 1
      %v535 = vrot.slane %v358, 1
      %v536 = vsel %vm508, %v534, %v535
      %v537 = vrot.slane %v464, 1
      %v538 = vsel %vm508, %v535, %v537
      %v539 = vrot.slane %v448, 1
      %v540 = vrot.slane %v361, 1
      %v541 = vsel %vm508, %v539, %v540
      %v542 = vrot.slane %v465, 1
      %v543 = vsel %vm508, %v540, %v542
      %v544 = vrot.slane %v449, 1
      %v545 = vrot.slane %v364, 1
      %v546 = vsel %vm508, %v544, %v545
      %v547 = vrot.slane %v466, 1
      %v548 = vsel %vm508, %v545, %v547
      %v549 = vrot.slane %v450, 1
      %v550 = vrot.slane %v367, 1
      %v551 = vsel %vm508, %v549, %v550
      %v552 = vrot.slane %v467, 1
      %v553 = vsel %vm508, %v550, %v552
      %v554 = vrot.slane %v451, 1
      %v555 = vrot.slane %v370, 1
      %v556 = vsel %vm508, %v554, %v555
      %v557 = vrot.slane %v468, 1
      %v558 = vsel %vm508, %v555, %v557
      %v559 = vrot.slane %v452, 1
      %v560 = vrot.slane %v373, 1
      %v561 = vsel %vm508, %v559, %v560
      %v562 = vrot.slane %v469, 1
      %v563 = vsel %vm508, %v560, %v562
      %v564 = vrot.slane %v453, 1
      %v565 = vrot.slane %v376, 1
      %v566 = vsel %vm508, %v564, %v565
      %v567 = vrot.slane %v470, 1
      %v568 = vsel %vm508, %v565, %v567
      %v569 = vrot.slane %v454, 1
      %v570 = vrot.slane %v379, 1
      %v571 = vsel %vm508, %v569, %v570
      %v572 = vrot.slane %v471, 1
      %v573 = vsel %vm508, %v570, %v572
      %v574 = vrot.slane %v455, 1
      %v575 = vrot.slane %v382, 1
      %v576 = vsel %vm508, %v574, %v575
      %v577 = vrot.slane %v472, 1
      %v578 = vsel %vm508, %v575, %v577
      %v579 = vrot.slane %v456, 1
      %v580 = vrot.slane %v385, 1
      %v581 = vsel %vm508, %v579, %v580
      %v582 = vrot.slane %v473, 1
      %v583 = vsel %vm508, %v580, %v582
      %v584 = vrot.slane %v457, 1
      %v585 = vrot.slane %v388, 1
      %v586 = vsel %vm508, %v584, %v585
      %v587 = vrot.slane %v474, 1
      %v588 = vsel %vm508, %v585, %v587
      %vm621 = vcmask 1045504
      %v622 = vrot.slane %v442, 2
      %v623 = vrot.slane %v343, 2
      %v624 = vsel %vm621, %v622, %v623
      %v625 = vrot.slane %v459, 2
      %v626 = vsel %vm621, %v623, %v625
      %v627 = vrot.slane %v443, 2
      %v628 = vrot.slane %v346, 2
      %v629 = vsel %vm621, %v627, %v628
      %v630 = vrot.slane %v460, 2
      %v631 = vsel %vm621, %v628, %v630
      %v632 = vrot.slane %v444, 2
      %v633 = vrot.slane %v349, 2
      %v634 = vsel %vm621, %v632, %v633
      %v635 = vrot.slane %v461, 2
      %v636 = vsel %vm621, %v633, %v635
      %v637 = vrot.slane %v445, 2
      %v638 = vrot.slane %v352, 2
      %v639 = vsel %vm621, %v637, %v638
      %v640 = vrot.slane %v462, 2
      %v641 = vsel %vm621, %v638, %v640
      %v642 = vrot.slane %v446, 2
      %v643 = vrot.slane %v355, 2
      %v644 = vsel %vm621, %v642, %v643
      %v645 = vrot.slane %v463, 2
      %v646 = vsel %vm621, %v643, %v645
      %v647 = vrot.slane %v447, 2
      %v648 = vrot.slane %v358, 2
      %v649 = vsel %vm621, %v647, %v648
      %v650 = vrot.slane %v464, 2
      %v651 = vsel %vm621, %v648, %v650
      %v652 = vrot.slane %v448, 2
      %v653 = vrot.slane %v361, 2
      %v654 = vsel %vm621, %v652, %v653
      %v655 = vrot.slane %v465, 2
      %v656 = vsel %vm621, %v653, %v655
      %v657 = vrot.slane %v449, 2
      %v658 = vrot.slane %v364, 2
      %v659 = vsel %vm621, %v657, %v658
      %v660 = vrot.slane %v466, 2
      %v661 = vsel %vm621, %v658, %v660
      %v662 = vrot.slane %v450, 2
      %v663 = vrot.slane %v367, 2
      %v664 = vsel %vm621, %v662, %v663
      %v665 = vrot.slane %v467, 2
      %v666 = vsel %vm621, %v663, %v665
      %v667 = vrot.slane %v451, 2
      %v668 = vrot.slane %v370, 2
      %v669 = vsel %vm621, %v667, %v668
      %v670 = vrot.slane %v468, 2
      %v671 = vsel %vm621, %v668, %v670
      %v672 = vrot.slane %v452, 2
      %v673 = vrot.slane %v373, 2
      %v674 = vsel %vm621, %v672, %v673
      %v675 = vrot.slane %v469, 2
      %v676 = vsel %vm621, %v673, %v675
      %v677 = vrot.slane %v453, 2
      %v678 = vrot.slane %v376, 2
      %v679 = vsel %vm621, %v677, %v678
      %v680 = vrot.slane %v470, 2
      %v681 = vsel %vm621, %v678, %v680
      %v682 = vrot.slane %v454, 2
      %v683 = vrot.slane %v379, 2
      %v684 = vsel %vm621, %v682, %v683
      %v685 = vrot.slane %v471, 2
      %v686 = vsel %vm621, %v683, %v685
      %v687 = vrot.slane %v455, 2
      %v688 = vrot.slane %v382, 2
      %v689 = vsel %vm621, %v687, %v688
      %v690 = vrot.slane %v472, 2
      %v691 = vsel %vm621, %v688, %v690
      %v692 = vrot.slane %v456, 2
      %v693 = vrot.slane %v385, 2
      %v694 = vsel %vm621, %v692, %v693
      %v695 = vrot.slane %v473, 2
      %v696 = vsel %vm621, %v693, %v695
      %v697 = vrot.slane %v457, 2
      %v698 = vrot.slane %v388, 2
      %v699 = vsel %vm621, %v697, %v698
      %v700 = vrot.slane %v474, 2
      %v701 = vsel %vm621, %v698, %v700
      %v736 = vrot.slane %v458, 1
      %v737 = vrot.slane %v391, 1
      %v738 = vsel %vm508, %v736, %v737
      %v739 = vrot.slane %v475, 1
      %v740 = vsel %vm508, %v737, %v739
      %v743 = vrot.slane %v458, 2
      %v744 = vrot.slane %v391, 2
      %v745 = vsel %vm621, %v743, %v744
      %v746 = vrot.slane %v475, 2
      %v747 = vsel %vm621, %v744, %v746
      %v750 = vpack.c.bf16 %v343, %v442
      %v751 = vpack.c.bf16 %v513, %v511
      %v752 = vpack.c.bf16 %v626, %v624
      %v753 = vpack.c.bf16 %v346, %v443
      %v754 = vpack.c.bf16 %v518, %v516
      %v755 = vpack.c.bf16 %v631, %v629
      %v756 = vpack.c.bf16 %v349, %v444
      %v757 = vpack.c.bf16 %v523, %v521
      %v758 = vpack.c.bf16 %v636, %v634
      %v759 = vpack.c.bf16 %v352, %v445
      %v760 = vpack.c.bf16 %v528, %v526
      %v761 = vpack.c.bf16 %v641, %v639
      %v762 = vpack.c.bf16 %v355, %v446
      %v763 = vpack.c.bf16 %v533, %v531
      %v764 = vpack.c.bf16 %v646, %v644
      %v765 = vpack.c.bf16 %v358, %v447
      %v766 = vpack.c.bf16 %v538, %v536
      %v767 = vpack.c.bf16 %v651, %v649
      %v768 = vpack.c.bf16 %v361, %v448
      %v769 = vpack.c.bf16 %v543, %v541
      %v770 = vpack.c.bf16 %v656, %v654
      %v771 = vpack.c.bf16 %v364, %v449
      %v772 = vpack.c.bf16 %v548, %v546
      %v773 = vpack.c.bf16 %v661, %v659
      %v774 = vpack.c.bf16 %v367, %v450
      %v775 = vpack.c.bf16 %v553, %v551
      %v776 = vpack.c.bf16 %v666, %v664
      %v777 = vpack.c.bf16 %v370, %v451
      %v778 = vpack.c.bf16 %v558, %v556
      %v779 = vpack.c.bf16 %v671, %v669
      %v780 = vpack.c.bf16 %v373, %v452
      %v781 = vpack.c.bf16 %v563, %v561
      %v782 = vpack.c.bf16 %v676, %v674
      %v783 = vpack.c.bf16 %v376, %v453
      %v784 = vpack.c.bf16 %v568, %v566
      %v785 = vpack.c.bf16 %v681, %v679
      %v786 = vpack.c.bf16 %v379, %v454
      %v787 = vpack.c.bf16 %v573, %v571
      %v788 = vpack.c.bf16 %v686, %v684
      %v789 = vpack.c.bf16 %v382, %v455
      %v790 = vpack.c.bf16 %v578, %v576
      %v791 = vpack.c.bf16 %v691, %v689
      %v792 = vpack.c.bf16 %v385, %v456
      %v793 = vpack.c.bf16 %v583, %v581
      %v794 = vpack.c.bf16 %v696, %v694
      %v795 = vpack.c.bf16 %v388, %v457
      %v796 = vpack.c.bf16 %v588, %v586
      %v797 = vpack.c.bf16 %v701, %v699
      %v798 = vpack.c.bf16 %v391, %v458
      %v799 = vpack.c.bf16 %v740, %v738
      %v800 = vpack.c.bf16 %v747, %v745
      %v801 = vld [vmem:[%s1] sm:$0xf]
      %v802 = vld [vmem:[%s1 + $0x4] sm:$0xf]
      %v803 = vld [vmem:[%s1 + $0x8] sm:$0xf]
      %v804 = vld [vmem:[%s1 + $0xc] sm:$0xf]
      %v805 = vld [vmem:[%s1 + $0x10] sm:$0xf]
      %v806 = vld [vmem:[%s1 + $0x14] sm:$0xf]
      %v807 = vld [vmem:[%s1 + $0x18] sm:$0xf]
      %v808 = vld [vmem:[%s1 + $0x1c] sm:$0xf]
      %v809 = vld [vmem:[%s1 + $0x20] sm:$0xf]
      %v810 = vld [vmem:[%s1 + $0x24] sm:$0xf]
      %v811 = vld [vmem:[%s1 + $0x28] sm:$0xf]
      %v812 = vld [vmem:[%s1 + $0x2c] sm:$0xf]
      %v813 = vld [vmem:[%s1 + $0x30] sm:$0xf]
      %v814 = vld [vmem:[%s1 + $0x34] sm:$0xf]
      %v815 = vld [vmem:[%s1 + $0x38] sm:$0xf]
      %v816 = vld [vmem:[%s1 + $0x3c] sm:$0xf]
      %v817 = vld [vmem:[%s1 + $0x40] sm:$0xf]
      %v818 = vld [vmem:[%s1 + $0x44] sm:$0xf]
      %v819 = vld [vmem:[%s1 + $0x48] sm:$0xf]
      %v820 = vld [vmem:[%s1 + $0x4c] sm:$0xf]
      %v821 = vld [vmem:[%s1 + $0x50] sm:$0xf]
      %v822 = vld [vmem:[%s1 + $0x54] sm:$0xf]
      %v823 = vld [vmem:[%s1 + $0x58] sm:$0xf]
      %v824 = vld [vmem:[%s1 + $0x5c] sm:$0xf]
      %v825 = vld [vmem:[%s1 + $0x60] sm:$0xf]
      %v826 = vld [vmem:[%s1 + $0x64] sm:$0xf]
      %v827 = vld [vmem:[%s1 + $0x68] sm:$0xf]
      %v828 = vld [vmem:[%s1 + $0x6c] sm:$0xf]
      %v829 = vld [vmem:[%s1 + $0x70] sm:$0xf]
      %v830 = vld [vmem:[%s1 + $0x74] sm:$0xf]
      %v831 = vld [vmem:[%s1 + $0x78] sm:$0xf]
      %v832 = vld [vmem:[%s1 + $0x7c] sm:$0xf]
      %v833 = vld [vmem:[%s1 + $0x80] sm:$0xf]
      %v834 = vld [vmem:[%s1 + $0x84] sm:$0xf]
      %v835 = vld [vmem:[%s1 + $0x88] sm:$0xf]
      %v836 = vld [vmem:[%s1 + $0x8c] sm:$0xf]
      %v837 = vld [vmem:[%s1 + $0x90] sm:$0xf]
      %v838 = vld [vmem:[%s1 + $0x94] sm:$0xf]
      %v839 = vld [vmem:[%s1 + $0x98] sm:$0xf]
      %v840 = vld [vmem:[%s1 + $0x9c] sm:$0xf]
      %v841 = vld [vmem:[%s1 + $0xa0] sm:$0xf]
      %v842 = vld [vmem:[%s1 + $0xa4] sm:$0xf]
      %v843 = vld [vmem:[%s1 + $0xa8] sm:$0xf]
      %v844 = vld [vmem:[%s1 + $0xac] sm:$0xf]
      %v845 = vld [vmem:[%s1 + $0xb0] sm:$0xf]
      %v846 = vld [vmem:[%s1 + $0xb4] sm:$0xf]
      %v847 = vld [vmem:[%s1 + $0xb8] sm:$0xf]
      %v848 = vld [vmem:[%s1 + $0xbc] sm:$0xf]
      %v849 = vld [vmem:[%s1 + $0xc0] sm:$0xf]
      %v850 = vld [vmem:[%s1 + $0xc4] sm:$0xf]
      %v851 = vld [vmem:[%s1 + $0xc8] sm:$0xf]
      %v852 = vld [vmem:[%s1 + $0xcc] sm:$0xf]
      %v853 = vld [vmem:[%s1 + $0xd0] sm:$0xf]
      %v854 = vld [vmem:[%s1 + $0xd4] sm:$0xf]
      %v855 = vld [vmem:[%s1 + $0xd8] sm:$0xf]
      %v856 = vld [vmem:[%s1 + $0xdc] sm:$0xf]
      %v857 = vld [vmem:[%s1 + $0xe0] sm:$0xf]
      %v858 = vld [vmem:[%s1 + $0xe4] sm:$0xf]
      %v859 = vld [vmem:[%s1 + $0xe8] sm:$0xf]
      %v860 = vld [vmem:[%s1 + $0xec] sm:$0xf]
      %v861 = vld [vmem:[%s1 + $0xf0] sm:$0xf]
      %v862 = vld [vmem:[%s1 + $0xf4] sm:$0xf]
      %v863 = vld [vmem:[%s1 + $0xf8] sm:$0xf]
      %v864 = vld [vmem:[%s1 + $0xfc] sm:$0xf]
      %v865 = vld [vmem:[%s1 + $0x100] sm:$0xf]
      %v866 = vld [vmem:[%s1 + $0x104] sm:$0xf]
      %v867 = vld [vmem:[%s1 + $0x108] sm:$0xf]
      %v868 = vld [vmem:[%s1 + $0x10c] sm:$0xf]
      %v869 = vld [vmem:[%s1 + $0x110] sm:$0xf]
      %v870 = vld [vmem:[%s1 + $0x114] sm:$0xf]
      %v871 = vld [vmem:[%s1 + $0x118] sm:$0xf]
      %v872 = vld [vmem:[%s1 + $0x11c] sm:$0xf]
      %v873 = vld [vmem:[%s1 + $0x120] sm:$0xf]
      %v874 = vld [vmem:[%s1 + $0x124] sm:$0xf]
      %v875 = vld [vmem:[%s1 + $0x128] sm:$0xf]
      %v876 = vld [vmem:[%s1 + $0x12c] sm:$0xf]
      %v877 = vld [vmem:[%s1 + $0x130] sm:$0xf]
      %v878 = vld [vmem:[%s1 + $0x134] sm:$0xf]
      %v879 = vld [vmem:[%s1 + $0x138] sm:$0xf]
      %v880 = vld [vmem:[%s1 + $0x13c] sm:$0xf]
      %v881 = vld [vmem:[%s1 + $0x140] sm:$0xf]
      %v882 = vld [vmem:[%s1 + $0x144] sm:$0xf]
      %v883 = vld [vmem:[%s1 + $0x148] sm:$0xf]
      %v884 = vld [vmem:[%s1 + $0x14c] sm:$0xf]
      %v885 = vld [vmem:[%s1 + $0x150] sm:$0xf]
      %v886 = vld [vmem:[%s1 + $0x154] sm:$0xf]
      %v887 = vld [vmem:[%s1 + $0x158] sm:$0xf]
      %v888 = vld [vmem:[%s1 + $0x15c] sm:$0xf]
      %v889 = vld [vmem:[%s1 + $0x160] sm:$0xf]
      %v890 = vld [vmem:[%s1 + $0x164] sm:$0xf]
      %v891 = vld [vmem:[%s1 + $0x168] sm:$0xf]
      %v892 = vld [vmem:[%s1 + $0x16c] sm:$0xf]
      %v893 = vld [vmem:[%s1 + $0x170] sm:$0xf]
      %v894 = vld [vmem:[%s1 + $0x174] sm:$0xf]
      %v895 = vld [vmem:[%s1 + $0x178] sm:$0xf]
      %v896 = vld [vmem:[%s1 + $0x17c] sm:$0xf]
      %v897 = vld [vmem:[%s1 + $0x180] sm:$0xf]
      %v898 = vld [vmem:[%s1 + $0x184] sm:$0xf]
      %v899 = vld [vmem:[%s1 + $0x188] sm:$0xf]
      %v900 = vld [vmem:[%s1 + $0x18c] sm:$0xf]
      %v901 = vld [vmem:[%s1 + $0x190] sm:$0xf]
      %v902 = vld [vmem:[%s1 + $0x194] sm:$0xf]
      %v903 = vld [vmem:[%s1 + $0x198] sm:$0xf]
      %v904 = vld [vmem:[%s1 + $0x19c] sm:$0xf]
      %v905 = vld [vmem:[%s1 + $0x1a0] sm:$0xf]
      %v906 = vld [vmem:[%s1 + $0x1a4] sm:$0xf]
      %v907 = vld [vmem:[%s1 + $0x1a8] sm:$0xf]
      %v908 = vld [vmem:[%s1 + $0x1ac] sm:$0xf]
      %v909 = vld [vmem:[%s1 + $0x1b0] sm:$0xf]
      %v910 = vld [vmem:[%s1 + $0x1b4] sm:$0xf]
      %v911 = vld [vmem:[%s1 + $0x1b8] sm:$0xf]
      %v912 = vld [vmem:[%s1 + $0x1bc] sm:$0xf]
      %v913 = vld [vmem:[%s1 + $0x1c0] sm:$0xf]
      %v914 = vld [vmem:[%s1 + $0x1c4] sm:$0xf]
      %v915 = vld [vmem:[%s1 + $0x1c8] sm:$0xf]
      %v916 = vld [vmem:[%s1 + $0x1cc] sm:$0xf]
      %v917 = vld [vmem:[%s1 + $0x1d0] sm:$0xf]
      %v918 = vld [vmem:[%s1 + $0x1d4] sm:$0xf]
      %v919 = vld [vmem:[%s1 + $0x1d8] sm:$0xf]
      %v920 = vld [vmem:[%s1 + $0x1dc] sm:$0xf]
      %v921 = vld [vmem:[%s1 + $0x1e0] sm:$0xf]
      %v922 = vld [vmem:[%s1 + $0x1e4] sm:$0xf]
      %v923 = vld [vmem:[%s1 + $0x1e8] sm:$0xf]
      %v924 = vld [vmem:[%s1 + $0x1ec] sm:$0xf]
      %v925 = vld [vmem:[%s1 + $0x1f0] sm:$0xf]
      %v926 = vld [vmem:[%s1 + $0x1f4] sm:$0xf]
      %v927 = vld [vmem:[%s1 + $0x1f8] sm:$0xf]
      %v928 = vld [vmem:[%s1 + $0x1fc] sm:$0xf]
      %v929 = vld [vmem:[%s1 + $0x200] sm:$0xf]
      %v930 = vld [vmem:[%s1 + $0x204] sm:$0xf]
      %v931 = vld [vmem:[%s1 + $0x208] sm:$0xf]
      %v932 = vld [vmem:[%s1 + $0x20c] sm:$0xf]
      %v933 = vld [vmem:[%s1 + $0x210] sm:$0xf]
      %v934 = vld [vmem:[%s1 + $0x214] sm:$0xf]
      %v935 = vld [vmem:[%s1 + $0x218] sm:$0xf]
      %v936 = vld [vmem:[%s1 + $0x21c] sm:$0xf]
      %v937 = vld [vmem:[%s1 + $0x220] sm:$0xf]
      %v938 = vld [vmem:[%s1 + $0x224] sm:$0xf]
      %v939 = vld [vmem:[%s1 + $0x228] sm:$0xf]
      %v940 = vld [vmem:[%s1 + $0x22c] sm:$0xf]
      %v941 = vld [vmem:[%s1 + $0x230] sm:$0xf]
      %v942 = vld [vmem:[%s1 + $0x234] sm:$0xf]
      %v943 = vld [vmem:[%s1 + $0x238] sm:$0xf]
      %v944 = vld [vmem:[%s1 + $0x23c] sm:$0xf]
      %v945 = vld [vmem:[%s2] sm:$0x1]
      %v947 = vlaneseq
      %v948 = vshrl.u32 %v947, 7
      %v949 = vsub.s32 0, %v948
      %v950 = vrot.slane %v945, %v949
      %v1096 = vunpack.c.l.b16 %v801
      %v1097 = vunpack.c.l.b16 %v802
      %v1098 = vunpack.c.l.b16 %v803
      %v1099 = vunpack.c.l.b16 %v804
      %v1100 = vunpack.c.l.b16 %v805
      %v1101 = vunpack.c.l.b16 %v806
      %v1102 = vunpack.c.l.b16 %v807
      %v1103 = vunpack.c.l.b16 %v808
      %v1104 = vunpack.c.l.b16 %v809
      %v1105 = vunpack.c.l.b16 %v810
      %v1106 = vunpack.c.l.b16 %v811
      %v1107 = vunpack.c.l.b16 %v812
      %v1108 = vunpack.c.l.b16 %v813
      %v1109 = vunpack.c.l.b16 %v814
      %v1110 = vunpack.c.l.b16 %v815
      %v1111 = vunpack.c.l.b16 %v816
      %v1112 = vunpack.c.l.b16 %v817
      %v1113 = vunpack.c.l.b16 %v818
      %v1114 = vunpack.c.l.b16 %v819
      %v1115 = vunpack.c.l.b16 %v820
      %v1116 = vunpack.c.l.b16 %v821
      %v1117 = vunpack.c.l.b16 %v822
      %v1118 = vunpack.c.l.b16 %v823
      %v1119 = vunpack.c.l.b16 %v824
      %v1120 = vunpack.c.l.b16 %v825
      %v1121 = vunpack.c.l.b16 %v826
      %v1122 = vunpack.c.l.b16 %v827
      %v1123 = vunpack.c.l.b16 %v828
      %v1124 = vunpack.c.l.b16 %v829
      %v1125 = vunpack.c.l.b16 %v830
      %v1126 = vunpack.c.l.b16 %v831
      %v1127 = vunpack.c.l.b16 %v832
      %v1128 = vunpack.c.l.b16 %v833
      %v1129 = vunpack.c.l.b16 %v834
      %v1130 = vunpack.c.l.b16 %v835
      %v1131 = vunpack.c.l.b16 %v836
      %v1132 = vunpack.c.l.b16 %v837
      %v1133 = vunpack.c.l.b16 %v838
      %v1134 = vunpack.c.l.b16 %v839
      %v1135 = vunpack.c.l.b16 %v840
      %v1136 = vunpack.c.l.b16 %v841
      %v1137 = vunpack.c.l.b16 %v842
      %v1138 = vunpack.c.l.b16 %v843
      %v1139 = vunpack.c.l.b16 %v844
      %v1140 = vunpack.c.l.b16 %v845
      %v1141 = vunpack.c.l.b16 %v846
      %v1142 = vunpack.c.l.b16 %v847
      %v1143 = vunpack.c.l.b16 %v848
      %v1144 = vunpack.c.l.b16 %v849
      %v1145 = vunpack.c.l.b16 %v850
      %v1146 = vunpack.c.l.b16 %v851
      %v1147 = vunpack.c.l.b16 %v852
      %v1148 = vunpack.c.l.b16 %v853
      %v1149 = vunpack.c.l.b16 %v854
      %v1150 = vunpack.c.l.b16 %v855
      %v1151 = vunpack.c.l.b16 %v856
      %v1152 = vunpack.c.l.b16 %v857
      %v1153 = vunpack.c.l.b16 %v858
      %v1154 = vunpack.c.l.b16 %v859
      %v1155 = vunpack.c.l.b16 %v860
      %v1156 = vunpack.c.l.b16 %v861
      %v1157 = vunpack.c.l.b16 %v862
      %v1158 = vunpack.c.l.b16 %v863
      %v1159 = vunpack.c.l.b16 %v864
      %v1160 = vunpack.c.l.b16 %v865
      %v1161 = vunpack.c.l.b16 %v866
      %v1162 = vunpack.c.l.b16 %v867
      %v1163 = vunpack.c.l.b16 %v868
      %v1164 = vunpack.c.l.b16 %v869
      %v1165 = vunpack.c.l.b16 %v870
      %v1166 = vunpack.c.l.b16 %v871
      %v1167 = vunpack.c.l.b16 %v872
      %v1168 = vunpack.c.l.b16 %v873
      %v1169 = vunpack.c.l.b16 %v874
      %v1170 = vunpack.c.l.b16 %v875
      %v1171 = vunpack.c.l.b16 %v876
      %v1172 = vunpack.c.l.b16 %v877
      %v1173 = vunpack.c.l.b16 %v878
      %v1174 = vunpack.c.l.b16 %v879
      %v1175 = vunpack.c.l.b16 %v880
      %v1176 = vunpack.c.l.b16 %v881
      %v1177 = vunpack.c.l.b16 %v882
      %v1178 = vunpack.c.l.b16 %v883
      %v1179 = vunpack.c.l.b16 %v884
      %v1180 = vunpack.c.l.b16 %v885
      %v1181 = vunpack.c.l.b16 %v886
      %v1182 = vunpack.c.l.b16 %v887
      %v1183 = vunpack.c.l.b16 %v888
      %v1184 = vunpack.c.l.b16 %v889
      %v1185 = vunpack.c.l.b16 %v890
      %v1186 = vunpack.c.l.b16 %v891
      %v1187 = vunpack.c.l.b16 %v892
      %v1188 = vunpack.c.l.b16 %v893
      %v1189 = vunpack.c.l.b16 %v894
      %v1190 = vunpack.c.l.b16 %v895
      %v1191 = vunpack.c.l.b16 %v896
      %v1192 = vunpack.c.l.b16 %v897
      %v1193 = vunpack.c.l.b16 %v898
      %v1194 = vunpack.c.l.b16 %v899
      %v1195 = vunpack.c.l.b16 %v900
      %v1196 = vunpack.c.l.b16 %v901
      %v1197 = vunpack.c.l.b16 %v902
      %v1198 = vunpack.c.l.b16 %v903
      %v1199 = vunpack.c.l.b16 %v904
      %v1200 = vunpack.c.l.b16 %v905
      %v1201 = vunpack.c.l.b16 %v906
      %v1202 = vunpack.c.l.b16 %v907
      %v1203 = vunpack.c.l.b16 %v908
      %v1204 = vunpack.c.l.b16 %v909
      %v1205 = vunpack.c.l.b16 %v910
      %v1206 = vunpack.c.l.b16 %v911
      %v1207 = vunpack.c.l.b16 %v912
      %v1208 = vunpack.c.l.b16 %v913
      %v1209 = vunpack.c.l.b16 %v914
      %v1210 = vunpack.c.l.b16 %v915
      %v1211 = vunpack.c.l.b16 %v916
      %v1212 = vunpack.c.l.b16 %v917
      %v1213 = vunpack.c.l.b16 %v918
      %v1214 = vunpack.c.l.b16 %v919
      %v1215 = vunpack.c.l.b16 %v920
      %v1216 = vunpack.c.l.b16 %v921
      %v1217 = vunpack.c.l.b16 %v922
      %v1218 = vunpack.c.l.b16 %v923
      %v1219 = vunpack.c.l.b16 %v924
      %v1220 = vunpack.c.l.b16 %v925
      %v1221 = vunpack.c.l.b16 %v926
      %v1222 = vunpack.c.l.b16 %v927
      %v1223 = vunpack.c.l.b16 %v928
      %v1224 = vunpack.c.l.b16 %v929
      %v1225 = vunpack.c.l.b16 %v930
      %v1226 = vunpack.c.l.b16 %v931
      %v1227 = vunpack.c.l.b16 %v932
      %v1228 = vunpack.c.l.b16 %v933
      %v1229 = vunpack.c.l.b16 %v934
      %v1230 = vunpack.c.l.b16 %v935
      %v1231 = vunpack.c.l.b16 %v936
      %v1232 = vunpack.c.l.b16 %v937
      %v1233 = vunpack.c.l.b16 %v938
      %v1234 = vunpack.c.l.b16 %v939
      %v1235 = vunpack.c.l.b16 %v940
      %v1236 = vunpack.c.l.b16 %v941
      %v1237 = vunpack.c.l.b16 %v942
      %v1238 = vunpack.c.l.b16 %v943
      %v1239 = vunpack.c.l.b16 %v944
      %v1240 = vpack.c.b16 %v1097, %v1096
      %v1241 = vpack.c.b16 %v1099, %v1098
      %v1242 = vpack.c.b16 %v1101, %v1100
      %v1243 = vpack.c.b16 %v1103, %v1102
      %v1244 = vpack.c.b16 %v1105, %v1104
      %v1245 = vpack.c.b16 %v1107, %v1106
      %v1246 = vpack.c.b16 %v1109, %v1108
      %v1247 = vpack.c.b16 %v1111, %v1110
      %v1248 = vpack.c.b16 %v1113, %v1112
      %v1249 = vpack.c.b16 %v1115, %v1114
      %v1250 = vpack.c.b16 %v1117, %v1116
      %v1251 = vpack.c.b16 %v1119, %v1118
      %v1252 = vpack.c.b16 %v1121, %v1120
      %v1253 = vpack.c.b16 %v1123, %v1122
      %v1254 = vpack.c.b16 %v1125, %v1124
      %v1255 = vpack.c.b16 %v1127, %v1126
      %v1256 = vpack.c.b16 %v1129, %v1128
      %v1257 = vpack.c.b16 %v1131, %v1130
      %v1258 = vpack.c.b16 %v1133, %v1132
      %v1259 = vpack.c.b16 %v1135, %v1134
      %v1260 = vpack.c.b16 %v1137, %v1136
      %v1261 = vpack.c.b16 %v1139, %v1138
      %v1262 = vpack.c.b16 %v1141, %v1140
      %v1263 = vpack.c.b16 %v1143, %v1142
      %v1264 = vpack.c.b16 %v1145, %v1144
      %v1265 = vpack.c.b16 %v1147, %v1146
      %v1266 = vpack.c.b16 %v1149, %v1148
      %v1267 = vpack.c.b16 %v1151, %v1150
      %v1268 = vpack.c.b16 %v1153, %v1152
      %v1269 = vpack.c.b16 %v1155, %v1154
      %v1270 = vpack.c.b16 %v1157, %v1156
      %v1271 = vpack.c.b16 %v1159, %v1158
      %v1272 = vpack.c.b16 %v1161, %v1160
      %v1273 = vpack.c.b16 %v1163, %v1162
      %v1274 = vpack.c.b16 %v1165, %v1164
      %v1275 = vpack.c.b16 %v1167, %v1166
      %v1276 = vpack.c.b16 %v1169, %v1168
      %v1277 = vpack.c.b16 %v1171, %v1170
      %v1278 = vpack.c.b16 %v1173, %v1172
      %v1279 = vpack.c.b16 %v1175, %v1174
      %v1280 = vpack.c.b16 %v1177, %v1176
      %v1281 = vpack.c.b16 %v1179, %v1178
      %v1282 = vpack.c.b16 %v1181, %v1180
      %v1283 = vpack.c.b16 %v1183, %v1182
      %v1284 = vpack.c.b16 %v1185, %v1184
      %v1285 = vpack.c.b16 %v1187, %v1186
      %v1286 = vpack.c.b16 %v1189, %v1188
      %v1287 = vpack.c.b16 %v1191, %v1190
      %v1288 = vpack.c.b16 %v1193, %v1192
      %v1289 = vpack.c.b16 %v1195, %v1194
      %v1290 = vpack.c.b16 %v1197, %v1196
      %v1291 = vpack.c.b16 %v1199, %v1198
      %v1292 = vpack.c.b16 %v1201, %v1200
      %v1293 = vpack.c.b16 %v1203, %v1202
      %v1294 = vpack.c.b16 %v1205, %v1204
      %v1295 = vpack.c.b16 %v1207, %v1206
      %v1296 = vpack.c.b16 %v1209, %v1208
      %v1297 = vpack.c.b16 %v1211, %v1210
      %v1298 = vpack.c.b16 %v1213, %v1212
      %v1299 = vpack.c.b16 %v1215, %v1214
      %v1300 = vpack.c.b16 %v1217, %v1216
      %v1301 = vpack.c.b16 %v1219, %v1218
      %v1302 = vpack.c.b16 %v1221, %v1220
      %v1303 = vpack.c.b16 %v1223, %v1222
      %v1304 = vpack.c.b16 %v1225, %v1224
      %v1305 = vpack.c.b16 %v1227, %v1226
      %v1306 = vpack.c.b16 %v1229, %v1228
      %v1307 = vpack.c.b16 %v1231, %v1230
      %v1308 = vpack.c.b16 %v1233, %v1232
      %v1309 = vpack.c.b16 %v1235, %v1234
      %v1310 = vpack.c.b16 %v1237, %v1236
      %v1311 = vpack.c.b16 %v1239, %v1238
      %1384 = vmatprep.subr.bf16.mxu0 0
      %1385 = vmatpush1.bf16.msra.mxu0 %v1240
      %1386 = vmatprep.subr.bf16.mxu0 0
      %1387 = vmatpush1.bf16.msra.mxu0 %v1241
      %1388 = vmatprep.subr.bf16.mxu0 0
      %1389 = vmatpush1.bf16.msra.mxu0 %v1242
      %1390 = vmatprep.subr.bf16.mxu0 0
      %1391 = vmatpush1.bf16.msra.mxu0 %v1243
      %1392 = vmatprep.subr.bf16.mxu0 0
      %1393 = vmatpush1.bf16.msra.mxu0 %v1244
      %1394 = vmatprep.subr.bf16.mxu0 0
      %1395 = vmatpush1.bf16.msra.mxu0 %v1245
      %1396 = vmatprep.subr.bf16.mxu0 0
      %1397 = vmatpush1.bf16.msra.mxu0 %v1246
      %1398 = vmatprep.subr.bf16.mxu0 0
      %1399 = vmatpush1.bf16.msra.mxu0 %v1247
      %1400 = vmatprep.subr.bf16.mxu0 0
      %1401 = vmatpush1.bf16.msra.mxu0 %v1248
      %1402 = vmatprep.subr.bf16.mxu0 0
      %1403 = vmatpush1.bf16.msra.mxu0 %v1249
      %1404 = vmatprep.subr.bf16.mxu0 0
      %1405 = vmatpush1.bf16.msra.mxu0 %v1250
      %1406 = vmatprep.subr.bf16.mxu0 0
      %1407 = vmatpush1.bf16.msra.mxu0 %v1251
      %1408 = vmatprep.subr.bf16.mxu0 0
      %1409 = vmatpush1.bf16.msra.mxu0 %v1252
      %1410 = vmatprep.subr.bf16.mxu0 0
      %1411 = vmatpush1.bf16.msra.mxu0 %v1253
      %1412 = vmatprep.subr.bf16.mxu0 0
      %1413 = vmatpush1.bf16.msra.mxu0 %v1254
      %1414 = vmatprep.subr.bf16.mxu0 0
      %1415 = vmatpush1.bf16.msra.mxu0 %v1255
      %1416 = vmatprep.mubr.bf16.mxu0 %v751
      %1417 = vmatmul.mubr.bf16.gmra.mrb[0].mxu0 %v750
      %v1418 = vpop.f32.mrb[0].mxu0
      %v1419 = vadd.f32 %v950, %v1418
      %v1420 = vpop.f32.mrb[0].mxu0
      %v1421 = vpop.f32.mrb[0].mxu0
      %v1422 = vadd.f32 %v950, %v1421
      %v1423 = vpop.f32.mrb[0].mxu0
      %1424 = vmatprep.mubr.bf16.mxu0 %v754
      %1425 = vmatmul.mubr.bf16.gmra.mrb[0].mxu0 %v753
      %v1426 = vpop.f32.mrb[0].mxu0
      %v1427 = vadd.f32 %v950, %v1426
      %v1428 = vpop.f32.mrb[0].mxu0
      %v1429 = vpop.f32.mrb[0].mxu0
      %v1430 = vadd.f32 %v950, %v1429
      %v1431 = vpop.f32.mrb[0].mxu0
      %1432 = vmatprep.mubr.bf16.mxu0 %v757
      %1433 = vmatmul.mubr.bf16.gmra.mrb[0].mxu0 %v756
      %v1434 = vpop.f32.mrb[0].mxu0
      %v1435 = vadd.f32 %v950, %v1434
      %v1436 = vpop.f32.mrb[0].mxu0
      %v1437 = vpop.f32.mrb[0].mxu0
      %v1438 = vadd.f32 %v950, %v1437
      %v1439 = vpop.f32.mrb[0].mxu0
      %1440 = vmatprep.mubr.bf16.mxu0 %v760
      %1441 = vmatmul.mubr.bf16.gmra.mrb[0].mxu0 %v759
      %v1442 = vpop.f32.mrb[0].mxu0
      %v1443 = vadd.f32 %v950, %v1442
      %v1444 = vpop.f32.mrb[0].mxu0
      %v1445 = vpop.f32.mrb[0].mxu0
      %v1446 = vadd.f32 %v950, %v1445
      %v1447 = vpop.f32.mrb[0].mxu0
      %1448 = vmatprep.mubr.bf16.mxu0 %v763
      %1449 = vmatmul.mubr.bf16.gmra.mrb[0].mxu0 %v762
      %v1450 = vpop.f32.mrb[0].mxu0
      %v1451 = vadd.f32 %v950, %v1450
      %v1452 = vpop.f32.mrb[0].mxu0
      %v1453 = vpop.f32.mrb[0].mxu0
      %v1454 = vadd.f32 %v950, %v1453
      %v1455 = vpop.f32.mrb[0].mxu0
      %1456 = vmatprep.mubr.bf16.mxu0 %v766
      %1457 = vmatmul.mubr.bf16.gmra.mrb[0].mxu0 %v765
      %v1458 = vpop.f32.mrb[0].mxu0
      %v1459 = vadd.f32 %v950, %v1458
      %v1460 = vpop.f32.mrb[0].mxu0
      %v1461 = vpop.f32.mrb[0].mxu0
      %v1462 = vadd.f32 %v950, %v1461
      %v1463 = vpop.f32.mrb[0].mxu0
      %1464 = vmatprep.mubr.bf16.mxu0 %v769
      %1465 = vmatmul.mubr.bf16.gmra.mrb[0].mxu0 %v768
      %v1466 = vpop.f32.mrb[0].mxu0
      %v1467 = vadd.f32 %v950, %v1466
      %v1468 = vpop.f32.mrb[0].mxu0
      %v1469 = vpop.f32.mrb[0].mxu0
      %v1470 = vadd.f32 %v950, %v1469
      %v1471 = vpop.f32.mrb[0].mxu0
      %1472 = vmatprep.mubr.bf16.mxu0 %v772
      %1473 = vmatmul.mubr.bf16.gmra.mrb[0].mxu0 %v771
      %v1474 = vpop.f32.mrb[0].mxu0
      %v1475 = vadd.f32 %v950, %v1474
      %v1476 = vpop.f32.mrb[0].mxu0
      %v1477 = vpop.f32.mrb[0].mxu0
      %v1478 = vadd.f32 %v950, %v1477
      %v1479 = vpop.f32.mrb[0].mxu0
      %1480 = vmatprep.mubr.bf16.mxu0 %v775
      %1481 = vmatmul.mubr.bf16.gmra.mrb[0].mxu0 %v774
      %v1482 = vpop.f32.mrb[0].mxu0
      %v1483 = vadd.f32 %v950, %v1482
      %v1484 = vpop.f32.mrb[0].mxu0
      %v1485 = vpop.f32.mrb[0].mxu0
      %v1486 = vadd.f32 %v950, %v1485
      %v1487 = vpop.f32.mrb[0].mxu0
      %1488 = vmatprep.mubr.bf16.mxu0 %v778
      %1489 = vmatmul.mubr.bf16.gmra.mrb[0].mxu0 %v777
      %v1490 = vpop.f32.mrb[0].mxu0
      %v1491 = vadd.f32 %v950, %v1490
      %v1492 = vpop.f32.mrb[0].mxu0
      %v1493 = vpop.f32.mrb[0].mxu0
      %v1494 = vadd.f32 %v950, %v1493
      %v1495 = vpop.f32.mrb[0].mxu0
      %1496 = vmatprep.mubr.bf16.mxu0 %v781
      %1497 = vmatmul.mubr.bf16.gmra.mrb[0].mxu0 %v780
      %v1498 = vpop.f32.mrb[0].mxu0
      %v1499 = vadd.f32 %v950, %v1498
      %v1500 = vpop.f32.mrb[0].mxu0
      %v1501 = vpop.f32.mrb[0].mxu0
      %v1502 = vadd.f32 %v950, %v1501
      %v1503 = vpop.f32.mrb[0].mxu0
      %1504 = vmatprep.mubr.bf16.mxu0 %v784
      %1505 = vmatmul.mubr.bf16.gmra.mrb[0].mxu0 %v783
      %v1506 = vpop.f32.mrb[0].mxu0
      %v1507 = vadd.f32 %v950, %v1506
      %v1508 = vpop.f32.mrb[0].mxu0
      %v1509 = vpop.f32.mrb[0].mxu0
      %v1510 = vadd.f32 %v950, %v1509
      %v1511 = vpop.f32.mrb[0].mxu0
      %1512 = vmatprep.mubr.bf16.mxu0 %v787
      %1513 = vmatmul.mubr.bf16.gmra.mrb[0].mxu0 %v786
      %v1514 = vpop.f32.mrb[0].mxu0
      %v1515 = vadd.f32 %v950, %v1514
      %v1516 = vpop.f32.mrb[0].mxu0
      %v1517 = vpop.f32.mrb[0].mxu0
      %v1518 = vadd.f32 %v950, %v1517
      %v1519 = vpop.f32.mrb[0].mxu0
      %1520 = vmatprep.mubr.bf16.mxu0 %v790
      %1521 = vmatmul.mubr.bf16.gmra.mrb[0].mxu0 %v789
      %v1522 = vpop.f32.mrb[0].mxu0
      %v1523 = vadd.f32 %v950, %v1522
      %v1524 = vpop.f32.mrb[0].mxu0
      %v1525 = vpop.f32.mrb[0].mxu0
      %v1526 = vadd.f32 %v950, %v1525
      %v1527 = vpop.f32.mrb[0].mxu0
      %1528 = vmatprep.mubr.bf16.mxu0 %v793
      %1529 = vmatmul.mubr.bf16.gmra.mrb[0].mxu0 %v792
      %v1530 = vpop.f32.mrb[0].mxu0
      %v1531 = vadd.f32 %v950, %v1530
      %v1532 = vpop.f32.mrb[0].mxu0
      %v1533 = vpop.f32.mrb[0].mxu0
      %v1534 = vadd.f32 %v950, %v1533
      %v1535 = vpop.f32.mrb[0].mxu0
      %1536 = vmatprep.mubr.bf16.mxu0 %v796
      %1537 = vmatmul.mubr.bf16.gmra.mrb[0].mxu0 %v795
      %v1538 = vpop.f32.mrb[0].mxu0
      %v1539 = vadd.f32 %v950, %v1538
      %v1540 = vpop.f32.mrb[0].mxu0
      %v1541 = vpop.f32.mrb[0].mxu0
      %v1542 = vadd.f32 %v950, %v1541
      %v1543 = vpop.f32.mrb[0].mxu0
      %1544 = vdwg.mxu0
      %1545 = vmatprep.subr.bf16.mxu0 0
      %1546 = vmatpush1.bf16.msra.mxu0 %v1256
      %1547 = vmatprep.subr.bf16.mxu0 0
      %1548 = vmatpush1.bf16.msra.mxu0 %v1257
      %1549 = vmatprep.subr.bf16.mxu0 0
      %1550 = vmatpush1.bf16.msra.mxu0 %v1258
      %1551 = vmatprep.subr.bf16.mxu0 0
      %1552 = vmatpush1.bf16.msra.mxu0 %v1259
      %1553 = vmatprep.subr.bf16.mxu0 0
      %1554 = vmatpush1.bf16.msra.mxu0 %v1260
      %1555 = vmatprep.subr.bf16.mxu0 0
      %1556 = vmatpush1.bf16.msra.mxu0 %v1261
      %1557 = vmatprep.subr.bf16.mxu0 0
      %1558 = vmatpush1.bf16.msra.mxu0 %v1262
      %1559 = vmatprep.subr.bf16.mxu0 0
      %1560 = vmatpush1.bf16.msra.mxu0 %v1263
      %1561 = vmatprep.subr.bf16.mxu0 0
      %1562 = vmatpush1.bf16.msra.mxu0 %v1264
      %1563 = vmatprep.subr.bf16.mxu0 0
      %1564 = vmatpush1.bf16.msra.mxu0 %v1265
      %1565 = vmatprep.subr.bf16.mxu0 0
      %1566 = vmatpush1.bf16.msra.mxu0 %v1266
      %1567 = vmatprep.subr.bf16.mxu0 0
      %1568 = vmatpush1.bf16.msra.mxu0 %v1267
      %1569 = vmatprep.subr.bf16.mxu0 0
      %1570 = vmatpush1.bf16.msra.mxu0 %v1268
      %1571 = vmatprep.subr.bf16.mxu0 0
      %1572 = vmatpush1.bf16.msra.mxu0 %v1269
      %1573 = vmatprep.subr.bf16.mxu0 0
      %1574 = vmatpush1.bf16.msra.mxu0 %v1270
      %1575 = vmatprep.subr.bf16.mxu0 0
      %1576 = vmatpush1.bf16.msra.mxu0 %v1271
      %1577 = vmatprep.mubr.bf16.mxu0 %v753
      %1578 = vmatmul.mubr.bf16.gmra.mrb[0].mxu0 %v752
      %v1579 = vpop.f32.mrb[0].mxu0
      %v1580 = vadd.f32 %v1419, %v1579
      %v1581 = vpop.f32.mrb[0].mxu0
      %v1582 = vpop.f32.mrb[0].mxu0
      %v1583 = vadd.f32 %v1422, %v1582
      %v1584 = vpop.f32.mrb[0].mxu0
      %1585 = vmatprep.mubr.bf16.mxu0 %v756
      %1586 = vmatmul.mubr.bf16.gmra.mrb[0].mxu0 %v755
      %v1587 = vpop.f32.mrb[0].mxu0
      %v1588 = vadd.f32 %v1427, %v1587
      %v1589 = vpop.f32.mrb[0].mxu0
      %v1590 = vpop.f32.mrb[0].mxu0
      %v1591 = vadd.f32 %v1430, %v1590
      %v1592 = vpop.f32.mrb[0].mxu0
      %1593 = vmatprep.mubr.bf16.mxu0 %v759
      %1594 = vmatmul.mubr.bf16.gmra.mrb[0].mxu0 %v758
      %v1595 = vpop.f32.mrb[0].mxu0
      %v1596 = vadd.f32 %v1435, %v1595
      %v1597 = vpop.f32.mrb[0].mxu0
      %v1598 = vpop.f32.mrb[0].mxu0
      %v1599 = vadd.f32 %v1438, %v1598
      %v1600 = vpop.f32.mrb[0].mxu0
      %1601 = vmatprep.mubr.bf16.mxu0 %v762
      %1602 = vmatmul.mubr.bf16.gmra.mrb[0].mxu0 %v761
      %v1603 = vpop.f32.mrb[0].mxu0
      %v1604 = vadd.f32 %v1443, %v1603
      %v1605 = vpop.f32.mrb[0].mxu0
      %v1606 = vpop.f32.mrb[0].mxu0
      %v1607 = vadd.f32 %v1446, %v1606
      %v1608 = vpop.f32.mrb[0].mxu0
      %1609 = vmatprep.mubr.bf16.mxu0 %v765
      %1610 = vmatmul.mubr.bf16.gmra.mrb[0].mxu0 %v764
      %v1611 = vpop.f32.mrb[0].mxu0
      %v1612 = vadd.f32 %v1451, %v1611
      %v1613 = vpop.f32.mrb[0].mxu0
      %v1614 = vpop.f32.mrb[0].mxu0
      %v1615 = vadd.f32 %v1454, %v1614
      %v1616 = vpop.f32.mrb[0].mxu0
      %1617 = vmatprep.mubr.bf16.mxu0 %v768
      %1618 = vmatmul.mubr.bf16.gmra.mrb[0].mxu0 %v767
      %v1619 = vpop.f32.mrb[0].mxu0
      %v1620 = vadd.f32 %v1459, %v1619
      %v1621 = vpop.f32.mrb[0].mxu0
      %v1622 = vpop.f32.mrb[0].mxu0
      %v1623 = vadd.f32 %v1462, %v1622
      %v1624 = vpop.f32.mrb[0].mxu0
      %1625 = vmatprep.mubr.bf16.mxu0 %v771
      %1626 = vmatmul.mubr.bf16.gmra.mrb[0].mxu0 %v770
      %v1627 = vpop.f32.mrb[0].mxu0
      %v1628 = vadd.f32 %v1467, %v1627
      %v1629 = vpop.f32.mrb[0].mxu0
      %v1630 = vpop.f32.mrb[0].mxu0
      %v1631 = vadd.f32 %v1470, %v1630
      %v1632 = vpop.f32.mrb[0].mxu0
      %1633 = vmatprep.mubr.bf16.mxu0 %v774
      %1634 = vmatmul.mubr.bf16.gmra.mrb[0].mxu0 %v773
      %v1635 = vpop.f32.mrb[0].mxu0
      %v1636 = vadd.f32 %v1475, %v1635
      %v1637 = vpop.f32.mrb[0].mxu0
      %v1638 = vpop.f32.mrb[0].mxu0
      %v1639 = vadd.f32 %v1478, %v1638
      %v1640 = vpop.f32.mrb[0].mxu0
      %1641 = vmatprep.mubr.bf16.mxu0 %v777
      %1642 = vmatmul.mubr.bf16.gmra.mrb[0].mxu0 %v776
      %v1643 = vpop.f32.mrb[0].mxu0
      %v1644 = vadd.f32 %v1483, %v1643
      %v1645 = vpop.f32.mrb[0].mxu0
      %v1646 = vpop.f32.mrb[0].mxu0
      %v1647 = vadd.f32 %v1486, %v1646
      %v1648 = vpop.f32.mrb[0].mxu0
      %1649 = vmatprep.mubr.bf16.mxu0 %v780
      %1650 = vmatmul.mubr.bf16.gmra.mrb[0].mxu0 %v779
      %v1651 = vpop.f32.mrb[0].mxu0
      %v1652 = vadd.f32 %v1491, %v1651
      %v1653 = vpop.f32.mrb[0].mxu0
      %v1654 = vpop.f32.mrb[0].mxu0
      %v1655 = vadd.f32 %v1494, %v1654
      %v1656 = vpop.f32.mrb[0].mxu0
      %1657 = vmatprep.mubr.bf16.mxu0 %v783
      %1658 = vmatmul.mubr.bf16.gmra.mrb[0].mxu0 %v782
      %v1659 = vpop.f32.mrb[0].mxu0
      %v1660 = vadd.f32 %v1499, %v1659
      %v1661 = vpop.f32.mrb[0].mxu0
      %v1662 = vpop.f32.mrb[0].mxu0
      %v1663 = vadd.f32 %v1502, %v1662
      %v1664 = vpop.f32.mrb[0].mxu0
      %1665 = vmatprep.mubr.bf16.mxu0 %v786
      %1666 = vmatmul.mubr.bf16.gmra.mrb[0].mxu0 %v785
      %v1667 = vpop.f32.mrb[0].mxu0
      %v1668 = vadd.f32 %v1507, %v1667
      %v1669 = vpop.f32.mrb[0].mxu0
      %v1670 = vpop.f32.mrb[0].mxu0
      %v1671 = vadd.f32 %v1510, %v1670
      %v1672 = vpop.f32.mrb[0].mxu0
      %1673 = vmatprep.mubr.bf16.mxu0 %v789
      %1674 = vmatmul.mubr.bf16.gmra.mrb[0].mxu0 %v788
      %v1675 = vpop.f32.mrb[0].mxu0
      %v1676 = vadd.f32 %v1515, %v1675
      %v1677 = vpop.f32.mrb[0].mxu0
      %v1678 = vpop.f32.mrb[0].mxu0
      %v1679 = vadd.f32 %v1518, %v1678
      %v1680 = vpop.f32.mrb[0].mxu0
      %1681 = vmatprep.mubr.bf16.mxu0 %v792
      %1682 = vmatmul.mubr.bf16.gmra.mrb[0].mxu0 %v791
      %v1683 = vpop.f32.mrb[0].mxu0
      %v1684 = vadd.f32 %v1523, %v1683
      %v1685 = vpop.f32.mrb[0].mxu0
      %v1686 = vpop.f32.mrb[0].mxu0
      %v1687 = vadd.f32 %v1526, %v1686
      %v1688 = vpop.f32.mrb[0].mxu0
      %1689 = vmatprep.mubr.bf16.mxu0 %v795
      %1690 = vmatmul.mubr.bf16.gmra.mrb[0].mxu0 %v794
      %v1691 = vpop.f32.mrb[0].mxu0
      %v1692 = vadd.f32 %v1531, %v1691
      %v1693 = vpop.f32.mrb[0].mxu0
      %v1694 = vpop.f32.mrb[0].mxu0
      %v1695 = vadd.f32 %v1534, %v1694
      %v1696 = vpop.f32.mrb[0].mxu0
      %1697 = vmatprep.mubr.bf16.mxu0 %v798
      %1698 = vmatmul.mubr.bf16.gmra.mrb[0].mxu0 %v797
      %v1699 = vpop.f32.mrb[0].mxu0
      %v1700 = vadd.f32 %v1539, %v1699
      %v1701 = vpop.f32.mrb[0].mxu0
      %v1702 = vpop.f32.mrb[0].mxu0
      %v1703 = vadd.f32 %v1542, %v1702
      %v1704 = vpop.f32.mrb[0].mxu0
      %1705 = vdwg.mxu0
      %1706 = vmatprep.subr.bf16.mxu0 0
      %1707 = vmatpush1.bf16.msra.mxu0 %v1272
      %1708 = vmatprep.subr.bf16.mxu0 0
      %1709 = vmatpush1.bf16.msra.mxu0 %v1273
      %1710 = vmatprep.subr.bf16.mxu0 0
      %1711 = vmatpush1.bf16.msra.mxu0 %v1274
      %1712 = vmatprep.subr.bf16.mxu0 0
      %1713 = vmatpush1.bf16.msra.mxu0 %v1275
      %1714 = vmatprep.subr.bf16.mxu0 0
      %1715 = vmatpush1.bf16.msra.mxu0 %v1276
      %1716 = vmatprep.subr.bf16.mxu0 0
      %1717 = vmatpush1.bf16.msra.mxu0 %v1277
      %1718 = vmatprep.subr.bf16.mxu0 0
      %1719 = vmatpush1.bf16.msra.mxu0 %v1278
      %1720 = vmatprep.subr.bf16.mxu0 0
      %1721 = vmatpush1.bf16.msra.mxu0 %v1279
      %1722 = vmatprep.subr.bf16.mxu0 0
      %1723 = vmatpush1.bf16.msra.mxu0 %v1280
      %1724 = vmatprep.subr.bf16.mxu0 0
      %1725 = vmatpush1.bf16.msra.mxu0 %v1281
      %1726 = vmatprep.subr.bf16.mxu0 0
      %1727 = vmatpush1.bf16.msra.mxu0 %v1282
      %1728 = vmatprep.subr.bf16.mxu0 0
      %1729 = vmatpush1.bf16.msra.mxu0 %v1283
      %1730 = vmatprep.subr.bf16.mxu0 0
      %1731 = vmatpush1.bf16.msra.mxu0 %v1284
      %1732 = vmatprep.subr.bf16.mxu0 0
      %1733 = vmatpush1.bf16.msra.mxu0 %v1285
      %1734 = vmatprep.subr.bf16.mxu0 0
      %1735 = vmatpush1.bf16.msra.mxu0 %v1286
      %1736 = vmatprep.subr.bf16.mxu0 0
      %1737 = vmatpush1.bf16.msra.mxu0 %v1287
      %1738 = vmatprep.mubr.bf16.mxu0 %v755
      %1739 = vmatmul.mubr.bf16.gmra.mrb[0].mxu0 %v754
      %v1740 = vpop.f32.mrb[0].mxu0
      %v1741 = vadd.f32 %v1580, %v1740
      %v1742 = vpop.f32.mrb[0].mxu0
      %v1743 = vpop.f32.mrb[0].mxu0
      %v1744 = vadd.f32 %v1583, %v1743
      %v1745 = vpop.f32.mrb[0].mxu0
      %1746 = vmatprep.mubr.bf16.mxu0 %v758
      %1747 = vmatmul.mubr.bf16.gmra.mrb[0].mxu0 %v757
      %v1748 = vpop.f32.mrb[0].mxu0
      %v1749 = vadd.f32 %v1588, %v1748
      %v1750 = vpop.f32.mrb[0].mxu0
      %v1751 = vpop.f32.mrb[0].mxu0
      %v1752 = vadd.f32 %v1591, %v1751
      %v1753 = vpop.f32.mrb[0].mxu0
      %1754 = vmatprep.mubr.bf16.mxu0 %v761
      %1755 = vmatmul.mubr.bf16.gmra.mrb[0].mxu0 %v760
      %v1756 = vpop.f32.mrb[0].mxu0
      %v1757 = vadd.f32 %v1596, %v1756
      %v1758 = vpop.f32.mrb[0].mxu0
      %v1759 = vpop.f32.mrb[0].mxu0
      %v1760 = vadd.f32 %v1599, %v1759
      %v1761 = vpop.f32.mrb[0].mxu0
      %1762 = vmatprep.mubr.bf16.mxu0 %v764
      %1763 = vmatmul.mubr.bf16.gmra.mrb[0].mxu0 %v763
      %v1764 = vpop.f32.mrb[0].mxu0
      %v1765 = vadd.f32 %v1604, %v1764
      %v1766 = vpop.f32.mrb[0].mxu0
      %v1767 = vpop.f32.mrb[0].mxu0
      %v1768 = vadd.f32 %v1607, %v1767
      %v1769 = vpop.f32.mrb[0].mxu0
      %1770 = vmatprep.mubr.bf16.mxu0 %v767
      %1771 = vmatmul.mubr.bf16.gmra.mrb[0].mxu0 %v766
      %v1772 = vpop.f32.mrb[0].mxu0
      %v1773 = vadd.f32 %v1612, %v1772
      %v1774 = vpop.f32.mrb[0].mxu0
      %v1775 = vpop.f32.mrb[0].mxu0
      %v1776 = vadd.f32 %v1615, %v1775
      %v1777 = vpop.f32.mrb[0].mxu0
      %1778 = vmatprep.mubr.bf16.mxu0 %v770
      %1779 = vmatmul.mubr.bf16.gmra.mrb[0].mxu0 %v769
      %v1780 = vpop.f32.mrb[0].mxu0
      %v1781 = vadd.f32 %v1620, %v1780
      %v1782 = vpop.f32.mrb[0].mxu0
      %v1783 = vpop.f32.mrb[0].mxu0
      %v1784 = vadd.f32 %v1623, %v1783
      %v1785 = vpop.f32.mrb[0].mxu0
      %1786 = vmatprep.mubr.bf16.mxu0 %v773
      %1787 = vmatmul.mubr.bf16.gmra.mrb[0].mxu0 %v772
      %v1788 = vpop.f32.mrb[0].mxu0
      %v1789 = vadd.f32 %v1628, %v1788
      %v1790 = vpop.f32.mrb[0].mxu0
      %v1791 = vpop.f32.mrb[0].mxu0
      %v1792 = vadd.f32 %v1631, %v1791
      %v1793 = vpop.f32.mrb[0].mxu0
      %1794 = vmatprep.mubr.bf16.mxu0 %v776
      %1795 = vmatmul.mubr.bf16.gmra.mrb[0].mxu0 %v775
      %v1796 = vpop.f32.mrb[0].mxu0
      %v1797 = vadd.f32 %v1636, %v1796
      %v1798 = vpop.f32.mrb[0].mxu0
      %v1799 = vpop.f32.mrb[0].mxu0
      %v1800 = vadd.f32 %v1639, %v1799
      %v1801 = vpop.f32.mrb[0].mxu0
      %1802 = vmatprep.mubr.bf16.mxu0 %v779
      %1803 = vmatmul.mubr.bf16.gmra.mrb[0].mxu0 %v778
      %v1804 = vpop.f32.mrb[0].mxu0
      %v1805 = vadd.f32 %v1644, %v1804
      %v1806 = vpop.f32.mrb[0].mxu0
      %v1807 = vpop.f32.mrb[0].mxu0
      %v1808 = vadd.f32 %v1647, %v1807
      %v1809 = vpop.f32.mrb[0].mxu0
      %1810 = vmatprep.mubr.bf16.mxu0 %v782
      %1811 = vmatmul.mubr.bf16.gmra.mrb[0].mxu0 %v781
      %v1812 = vpop.f32.mrb[0].mxu0
      %v1813 = vadd.f32 %v1652, %v1812
      %v1814 = vpop.f32.mrb[0].mxu0
      %v1815 = vpop.f32.mrb[0].mxu0
      %v1816 = vadd.f32 %v1655, %v1815
      %v1817 = vpop.f32.mrb[0].mxu0
      %1818 = vmatprep.mubr.bf16.mxu0 %v785
      %1819 = vmatmul.mubr.bf16.gmra.mrb[0].mxu0 %v784
      %v1820 = vpop.f32.mrb[0].mxu0
      %v1821 = vadd.f32 %v1660, %v1820
      %v1822 = vpop.f32.mrb[0].mxu0
      %v1823 = vpop.f32.mrb[0].mxu0
      %v1824 = vadd.f32 %v1663, %v1823
      %v1825 = vpop.f32.mrb[0].mxu0
      %1826 = vmatprep.mubr.bf16.mxu0 %v788
      %1827 = vmatmul.mubr.bf16.gmra.mrb[0].mxu0 %v787
      %v1828 = vpop.f32.mrb[0].mxu0
      %v1829 = vadd.f32 %v1668, %v1828
      %v1830 = vpop.f32.mrb[0].mxu0
      %v1831 = vpop.f32.mrb[0].mxu0
      %v1832 = vadd.f32 %v1671, %v1831
      %v1833 = vpop.f32.mrb[0].mxu0
      %1834 = vmatprep.mubr.bf16.mxu0 %v791
      %1835 = vmatmul.mubr.bf16.gmra.mrb[0].mxu0 %v790
      %v1836 = vpop.f32.mrb[0].mxu0
      %v1837 = vadd.f32 %v1676, %v1836
      %v1838 = vpop.f32.mrb[0].mxu0
      %v1839 = vpop.f32.mrb[0].mxu0
      %v1840 = vadd.f32 %v1679, %v1839
      %v1841 = vpop.f32.mrb[0].mxu0
      %1842 = vmatprep.mubr.bf16.mxu0 %v794
      %1843 = vmatmul.mubr.bf16.gmra.mrb[0].mxu0 %v793
      %v1844 = vpop.f32.mrb[0].mxu0
      %v1845 = vadd.f32 %v1684, %v1844
      %v1846 = vpop.f32.mrb[0].mxu0
      %v1847 = vpop.f32.mrb[0].mxu0
      %v1848 = vadd.f32 %v1687, %v1847
      %v1849 = vpop.f32.mrb[0].mxu0
      %1850 = vmatprep.mubr.bf16.mxu0 %v797
      %1851 = vmatmul.mubr.bf16.gmra.mrb[0].mxu0 %v796
      %v1852 = vpop.f32.mrb[0].mxu0
      %v1853 = vadd.f32 %v1692, %v1852
      %v1854 = vpop.f32.mrb[0].mxu0
      %v1855 = vpop.f32.mrb[0].mxu0
      %v1856 = vadd.f32 %v1695, %v1855
      %v1857 = vpop.f32.mrb[0].mxu0
      %1858 = vmatprep.mubr.bf16.mxu0 %v800
      %1859 = vmatmul.mubr.bf16.gmra.mrb[0].mxu0 %v799
      %v1860 = vpop.f32.mrb[0].mxu0
      %v1861 = vadd.f32 %v1700, %v1860
      %v1862 = vpop.f32.mrb[0].mxu0
      %v1863 = vpop.f32.mrb[0].mxu0
      %v1864 = vadd.f32 %v1703, %v1863
      %v1865 = vpop.f32.mrb[0].mxu0
      %1866 = vdwg.mxu0
      %1867 = vmatprep.subr.bf16.mxu0 0
      %1868 = vmatpush1.bf16.msra.mxu0 %v1288
      %1869 = vmatprep.subr.bf16.mxu0 0
      %1870 = vmatpush1.bf16.msra.mxu0 %v1289
      %1871 = vmatprep.subr.bf16.mxu0 0
      %1872 = vmatpush1.bf16.msra.mxu0 %v1290
      %1873 = vmatprep.subr.bf16.mxu0 0
      %1874 = vmatpush1.bf16.msra.mxu0 %v1291
      %1875 = vmatprep.subr.bf16.mxu0 0
      %1876 = vmatpush1.bf16.msra.mxu0 %v1292
      %1877 = vmatprep.subr.bf16.mxu0 0
      %1878 = vmatpush1.bf16.msra.mxu0 %v1293
      %1879 = vmatprep.subr.bf16.mxu0 0
      %1880 = vmatpush1.bf16.msra.mxu0 %v1294
      %1881 = vmatprep.subr.bf16.mxu0 0
      %1882 = vmatpush1.bf16.msra.mxu0 %v1295
      %1883 = vmatprep.subr.bf16.mxu0 0
      %1884 = vmatpush1.bf16.msra.mxu0 %v1296
      %1885 = vmatprep.subr.bf16.mxu0 0
      %1886 = vmatpush1.bf16.msra.mxu0 %v1297
      %1887 = vmatprep.subr.bf16.mxu0 0
      %1888 = vmatpush1.bf16.msra.mxu0 %v1298
      %1889 = vmatprep.subr.bf16.mxu0 0
      %1890 = vmatpush1.bf16.msra.mxu0 %v1299
      %1891 = vmatprep.subr.bf16.mxu0 0
      %1892 = vmatpush1.bf16.msra.mxu0 %v1300
      %1893 = vmatprep.subr.bf16.mxu0 0
      %1894 = vmatpush1.bf16.msra.mxu0 %v1301
      %1895 = vmatprep.subr.bf16.mxu0 0
      %1896 = vmatpush1.bf16.msra.mxu0 %v1302
      %1897 = vmatprep.subr.bf16.mxu0 0
      %1898 = vmatpush1.bf16.msra.mxu0 %v1303
      %1899 = vmatprep.mubr.bf16.mxu0 %v757
      %1900 = vmatmul.mubr.bf16.gmra.mrb[0].mxu0 %v756
      %v1901 = vpop.f32.mrb[0].mxu0
      %v1902 = vadd.f32 %v1741, %v1901
      %v1903 = vpop.f32.mrb[0].mxu0
      %v1904 = vpop.f32.mrb[0].mxu0
      %v1905 = vadd.f32 %v1744, %v1904
      %v1906 = vpop.f32.mrb[0].mxu0
      %1907 = vmatprep.mubr.bf16.mxu0 %v760
      %1908 = vmatmul.mubr.bf16.gmra.mrb[0].mxu0 %v759
      %v1909 = vpop.f32.mrb[0].mxu0
      %v1910 = vadd.f32 %v1749, %v1909
      %v1911 = vpop.f32.mrb[0].mxu0
      %v1912 = vpop.f32.mrb[0].mxu0
      %v1913 = vadd.f32 %v1752, %v1912
      %v1914 = vpop.f32.mrb[0].mxu0
      %1915 = vmatprep.mubr.bf16.mxu0 %v763
      %1916 = vmatmul.mubr.bf16.gmra.mrb[0].mxu0 %v762
      %v1917 = vpop.f32.mrb[0].mxu0
      %v1918 = vadd.f32 %v1757, %v1917
      %v1919 = vpop.f32.mrb[0].mxu0
      %v1920 = vpop.f32.mrb[0].mxu0
      %v1921 = vadd.f32 %v1760, %v1920
      %v1922 = vpop.f32.mrb[0].mxu0
      %1923 = vmatprep.mubr.bf16.mxu0 %v766
      %1924 = vmatmul.mubr.bf16.gmra.mrb[0].mxu0 %v765
      %v1925 = vpop.f32.mrb[0].mxu0
      %v1926 = vadd.f32 %v1765, %v1925
      %v1927 = vpop.f32.mrb[0].mxu0
      %v1928 = vpop.f32.mrb[0].mxu0
      %v1929 = vadd.f32 %v1768, %v1928
      %v1930 = vpop.f32.mrb[0].mxu0
      %1931 = vmatprep.mubr.bf16.mxu0 %v769
      %1932 = vmatmul.mubr.bf16.gmra.mrb[0].mxu0 %v768
      %v1933 = vpop.f32.mrb[0].mxu0
      %v1934 = vadd.f32 %v1773, %v1933
      %v1935 = vpop.f32.mrb[0].mxu0
      %v1936 = vpop.f32.mrb[0].mxu0
      %v1937 = vadd.f32 %v1776, %v1936
      %v1938 = vpop.f32.mrb[0].mxu0
      %1939 = vmatprep.mubr.bf16.mxu0 %v772
      %1940 = vmatmul.mubr.bf16.gmra.mrb[0].mxu0 %v771
      %v1941 = vpop.f32.mrb[0].mxu0
      %v1942 = vadd.f32 %v1781, %v1941
      %v1943 = vpop.f32.mrb[0].mxu0
      %v1944 = vpop.f32.mrb[0].mxu0
      %v1945 = vadd.f32 %v1784, %v1944
      %v1946 = vpop.f32.mrb[0].mxu0
      %1947 = vmatprep.mubr.bf16.mxu0 %v775
      %1948 = vmatmul.mubr.bf16.gmra.mrb[0].mxu0 %v774
      %v1949 = vpop.f32.mrb[0].mxu0
      %v1950 = vadd.f32 %v1789, %v1949
      %v1951 = vpop.f32.mrb[0].mxu0
      %v1952 = vpop.f32.mrb[0].mxu0
      %v1953 = vadd.f32 %v1792, %v1952
      %v1954 = vpop.f32.mrb[0].mxu0
      %1955 = vmatprep.mubr.bf16.mxu0 %v778
      %1956 = vmatmul.mubr.bf16.gmra.mrb[0].mxu0 %v777
      %v1957 = vpop.f32.mrb[0].mxu0
      %v1958 = vadd.f32 %v1797, %v1957
      %v1959 = vpop.f32.mrb[0].mxu0
      %v1960 = vpop.f32.mrb[0].mxu0
      %v1961 = vadd.f32 %v1800, %v1960
      %v1962 = vpop.f32.mrb[0].mxu0
      %1963 = vmatprep.mubr.bf16.mxu0 %v781
      %1964 = vmatmul.mubr.bf16.gmra.mrb[0].mxu0 %v780
      %v1965 = vpop.f32.mrb[0].mxu0
      %v1966 = vadd.f32 %v1805, %v1965
      %v1967 = vpop.f32.mrb[0].mxu0
      %v1968 = vpop.f32.mrb[0].mxu0
      %v1969 = vadd.f32 %v1808, %v1968
      %v1970 = vpop.f32.mrb[0].mxu0
      %1971 = vmatprep.mubr.bf16.mxu0 %v784
      %1972 = vmatmul.mubr.bf16.gmra.mrb[0].mxu0 %v783
      %v1973 = vpop.f32.mrb[0].mxu0
      %v1974 = vadd.f32 %v1813, %v1973
      %v1975 = vpop.f32.mrb[0].mxu0
      %v1976 = vpop.f32.mrb[0].mxu0
      %v1977 = vadd.f32 %v1816, %v1976
      %v1978 = vpop.f32.mrb[0].mxu0
      %1979 = vmatprep.mubr.bf16.mxu0 %v787
      %1980 = vmatmul.mubr.bf16.gmra.mrb[0].mxu0 %v786
      %v1981 = vpop.f32.mrb[0].mxu0
      %v1982 = vadd.f32 %v1821, %v1981
      %v1983 = vpop.f32.mrb[0].mxu0
      %v1984 = vpop.f32.mrb[0].mxu0
      %v1985 = vadd.f32 %v1824, %v1984
      %v1986 = vpop.f32.mrb[0].mxu0
      %1987 = vmatprep.mubr.bf16.mxu0 %v790
      %1988 = vmatmul.mubr.bf16.gmra.mrb[0].mxu0 %v789
      %v1989 = vpop.f32.mrb[0].mxu0
      %v1990 = vadd.f32 %v1829, %v1989
      %v1991 = vpop.f32.mrb[0].mxu0
      %v1992 = vpop.f32.mrb[0].mxu0
      %v1993 = vadd.f32 %v1832, %v1992
      %v1994 = vpop.f32.mrb[0].mxu0
      %1995 = vmatprep.mubr.bf16.mxu0 %v793
      %1996 = vmatmul.mubr.bf16.gmra.mrb[0].mxu0 %v792
      %v1997 = vpop.f32.mrb[0].mxu0
      %v1998 = vadd.f32 %v1837, %v1997
      %v1999 = vpop.f32.mrb[0].mxu0
      %v2000 = vpop.f32.mrb[0].mxu0
      %v2001 = vadd.f32 %v1840, %v2000
      %v2002 = vpop.f32.mrb[0].mxu0
      %2003 = vmatprep.mubr.bf16.mxu0 %v796
      %2004 = vmatmul.mubr.bf16.gmra.mrb[0].mxu0 %v795
      %v2005 = vpop.f32.mrb[0].mxu0
      %v2006 = vadd.f32 %v1845, %v2005
      %v2007 = vpop.f32.mrb[0].mxu0
      %v2008 = vpop.f32.mrb[0].mxu0
      %v2009 = vadd.f32 %v1848, %v2008
      %v2010 = vpop.f32.mrb[0].mxu0
      %2011 = vmatprep.mubr.bf16.mxu0 %v799
      %2012 = vmatmul.mubr.bf16.gmra.mrb[0].mxu0 %v798
      %v2013 = vpop.f32.mrb[0].mxu0
      %v2014 = vadd.f32 %v1853, %v2013
      %v2015 = vpop.f32.mrb[0].mxu0
      %v2016 = vpop.f32.mrb[0].mxu0
      %v2017 = vadd.f32 %v1856, %v2016
      %v2018 = vpop.f32.mrb[0].mxu0
      %2019 = vmatprep.mubr.bf16.mxu0 %v751
      %2020 = vmatmul.mubr.bf16.gmra.mrb[0].mxu0 %v750
      %v2021 = vpop.f32.mrb[0].mxu0
      %v2022 = vadd.f32 %v1861, %v2021
      %v2023 = vpop.f32.mrb[0].mxu0
      %v2024 = vpop.f32.mrb[0].mxu0
      %v2025 = vadd.f32 %v1864, %v2024
      %v2026 = vpop.f32.mrb[0].mxu0
      %2027 = vdwg.mxu0
      %2028 = vmatprep.subr.bf16.mxu0 0
      %2029 = vmatpush1.bf16.msra.mxu0 %v1304
      %2030 = vmatprep.subr.bf16.mxu0 0
      %2031 = vmatpush1.bf16.msra.mxu0 %v1305
      %2032 = vmatprep.subr.bf16.mxu0 0
      %2033 = vmatpush1.bf16.msra.mxu0 %v1306
      %2034 = vmatprep.subr.bf16.mxu0 0
      %2035 = vmatpush1.bf16.msra.mxu0 %v1307
      %2036 = vmatprep.subr.bf16.mxu0 0
      %2037 = vmatpush1.bf16.msra.mxu0 %v1308
      %2038 = vmatprep.subr.bf16.mxu0 0
      %2039 = vmatpush1.bf16.msra.mxu0 %v1309
      %2040 = vmatprep.subr.bf16.mxu0 0
      %2041 = vmatpush1.bf16.msra.mxu0 %v1310
      %2042 = vmatprep.subr.bf16.mxu0 0
      %2043 = vmatpush1.bf16.msra.mxu0 %v1311
      %2044 = vmatprep.subr.bf16.mxu0 0
      %2045 = vmatpush1.bf16.msra.mxu0 0
      %2046 = vmatprep.subr.bf16.mxu0 0
      %2047 = vmatpush1.bf16.msra.mxu0 0
      %2048 = vmatprep.subr.bf16.mxu0 0
      %2049 = vmatpush1.bf16.msra.mxu0 0
      %2050 = vmatprep.subr.bf16.mxu0 0
      %2051 = vmatpush1.bf16.msra.mxu0 0
      %2052 = vmatprep.subr.bf16.mxu0 0
      %2053 = vmatpush1.bf16.msra.mxu0 0
      %2054 = vmatprep.subr.bf16.mxu0 0
      %2055 = vmatpush1.bf16.msra.mxu0 0
      %2056 = vmatprep.subr.bf16.mxu0 0
      %2057 = vmatpush1.bf16.msra.mxu0 0
      %2058 = vmatprep.subr.bf16.mxu0 0
      %2059 = vmatpush1.bf16.msra.mxu0 0
      %2060 = vmatprep.mubr.bf16.mxu0 0
      %2061 = vmatmul.mubr.bf16.gmra.mrb[0].mxu0 %v758
      %v2062 = vpop.f32.mrb[0].mxu0
      %v2063 = vadd.f32 %v1902, %v2062
      %v2064 = vpop.f32.mrb[0].mxu0
      %v2065 = vpop.f32.mrb[0].mxu0
      %v2066 = vadd.f32 %v1905, %v2065
      %v2067 = vpop.f32.mrb[0].mxu0
      %2068 = vmatprep.mubr.bf16.mxu0 0
      %2069 = vmatmul.mubr.bf16.gmra.mrb[0].mxu0 %v761
      %v2070 = vpop.f32.mrb[0].mxu0
      %v2071 = vadd.f32 %v1910, %v2070
      %v2072 = vpop.f32.mrb[0].mxu0
      %v2073 = vpop.f32.mrb[0].mxu0
      %v2074 = vadd.f32 %v1913, %v2073
      %v2075 = vpop.f32.mrb[0].mxu0
      %2076 = vmatprep.mubr.bf16.mxu0 0
      %2077 = vmatmul.mubr.bf16.gmra.mrb[0].mxu0 %v764
      %v2078 = vpop.f32.mrb[0].mxu0
      %v2079 = vadd.f32 %v1918, %v2078
      %v2080 = vpop.f32.mrb[0].mxu0
      %v2081 = vpop.f32.mrb[0].mxu0
      %v2082 = vadd.f32 %v1921, %v2081
      %v2083 = vpop.f32.mrb[0].mxu0
      %2084 = vmatprep.mubr.bf16.mxu0 0
      %2085 = vmatmul.mubr.bf16.gmra.mrb[0].mxu0 %v767
      %v2086 = vpop.f32.mrb[0].mxu0
      %v2087 = vadd.f32 %v1926, %v2086
      %v2088 = vpop.f32.mrb[0].mxu0
      %v2089 = vpop.f32.mrb[0].mxu0
      %v2090 = vadd.f32 %v1929, %v2089
      %v2091 = vpop.f32.mrb[0].mxu0
      %2092 = vmatprep.mubr.bf16.mxu0 0
      %2093 = vmatmul.mubr.bf16.gmra.mrb[0].mxu0 %v770
      %v2094 = vpop.f32.mrb[0].mxu0
      %v2095 = vadd.f32 %v1934, %v2094
      %v2096 = vpop.f32.mrb[0].mxu0
      %v2097 = vpop.f32.mrb[0].mxu0
      %v2098 = vadd.f32 %v1937, %v2097
      %v2099 = vpop.f32.mrb[0].mxu0
      %2100 = vmatprep.mubr.bf16.mxu0 0
      %2101 = vmatmul.mubr.bf16.gmra.mrb[0].mxu0 %v773
      %v2102 = vpop.f32.mrb[0].mxu0
      %v2103 = vadd.f32 %v1942, %v2102
      %v2104 = vpop.f32.mrb[0].mxu0
      %v2105 = vpop.f32.mrb[0].mxu0
      %v2106 = vadd.f32 %v1945, %v2105
      %v2107 = vpop.f32.mrb[0].mxu0
      %2108 = vmatprep.mubr.bf16.mxu0 0
      %2109 = vmatmul.mubr.bf16.gmra.mrb[0].mxu0 %v776
      %v2110 = vpop.f32.mrb[0].mxu0
      %v2111 = vadd.f32 %v1950, %v2110
      %v2112 = vpop.f32.mrb[0].mxu0
      %v2113 = vpop.f32.mrb[0].mxu0
      %v2114 = vadd.f32 %v1953, %v2113
      %v2115 = vpop.f32.mrb[0].mxu0
      %2116 = vmatprep.mubr.bf16.mxu0 0
      %2117 = vmatmul.mubr.bf16.gmra.mrb[0].mxu0 %v779
      %v2118 = vpop.f32.mrb[0].mxu0
      %v2119 = vadd.f32 %v1958, %v2118
      %v2120 = vpop.f32.mrb[0].mxu0
      %v2121 = vpop.f32.mrb[0].mxu0
      %v2122 = vadd.f32 %v1961, %v2121
      %v2123 = vpop.f32.mrb[0].mxu0
      %2124 = vmatprep.mubr.bf16.mxu0 0
      %2125 = vmatmul.mubr.bf16.gmra.mrb[0].mxu0 %v782
      %v2126 = vpop.f32.mrb[0].mxu0
      %v2127 = vadd.f32 %v1966, %v2126
      %v2128 = vpop.f32.mrb[0].mxu0
      %v2129 = vpop.f32.mrb[0].mxu0
      %v2130 = vadd.f32 %v1969, %v2129
      %v2131 = vpop.f32.mrb[0].mxu0
      %2132 = vmatprep.mubr.bf16.mxu0 0
      %2133 = vmatmul.mubr.bf16.gmra.mrb[0].mxu0 %v785
      %v2134 = vpop.f32.mrb[0].mxu0
      %v2135 = vadd.f32 %v1974, %v2134
      %v2136 = vpop.f32.mrb[0].mxu0
      %v2137 = vpop.f32.mrb[0].mxu0
      %v2138 = vadd.f32 %v1977, %v2137
      %v2139 = vpop.f32.mrb[0].mxu0
      %2140 = vmatprep.mubr.bf16.mxu0 0
      %2141 = vmatmul.mubr.bf16.gmra.mrb[0].mxu0 %v788
      %v2142 = vpop.f32.mrb[0].mxu0
      %v2143 = vadd.f32 %v1982, %v2142
      %v2144 = vpop.f32.mrb[0].mxu0
      %v2145 = vpop.f32.mrb[0].mxu0
      %v2146 = vadd.f32 %v1985, %v2145
      %v2147 = vpop.f32.mrb[0].mxu0
      %2148 = vmatprep.mubr.bf16.mxu0 0
      %2149 = vmatmul.mubr.bf16.gmra.mrb[0].mxu0 %v791
      %v2150 = vpop.f32.mrb[0].mxu0
      %v2151 = vadd.f32 %v1990, %v2150
      %v2152 = vpop.f32.mrb[0].mxu0
      %v2153 = vpop.f32.mrb[0].mxu0
      %v2154 = vadd.f32 %v1993, %v2153
      %v2155 = vpop.f32.mrb[0].mxu0
      %2156 = vmatprep.mubr.bf16.mxu0 0
      %2157 = vmatmul.mubr.bf16.gmra.mrb[0].mxu0 %v794
      %v2158 = vpop.f32.mrb[0].mxu0
      %v2159 = vadd.f32 %v1998, %v2158
      %v2160 = vpop.f32.mrb[0].mxu0
      %v2161 = vpop.f32.mrb[0].mxu0
      %v2162 = vadd.f32 %v2001, %v2161
      %v2163 = vpop.f32.mrb[0].mxu0
      %2164 = vmatprep.mubr.bf16.mxu0 0
      %2165 = vmatmul.mubr.bf16.gmra.mrb[0].mxu0 %v797
      %v2166 = vpop.f32.mrb[0].mxu0
      %v2167 = vadd.f32 %v2006, %v2166
      %v2168 = vpop.f32.mrb[0].mxu0
      %v2169 = vpop.f32.mrb[0].mxu0
      %v2170 = vadd.f32 %v2009, %v2169
      %v2171 = vpop.f32.mrb[0].mxu0
      %2172 = vmatprep.mubr.bf16.mxu0 0
      %2173 = vmatmul.mubr.bf16.gmra.mrb[0].mxu0 %v800
      %v2174 = vpop.f32.mrb[0].mxu0
      %v2175 = vadd.f32 %v2014, %v2174
      %v2176 = vpop.f32.mrb[0].mxu0
      %v2177 = vpop.f32.mrb[0].mxu0
      %v2178 = vadd.f32 %v2017, %v2177
      %v2179 = vpop.f32.mrb[0].mxu0
      %2180 = vmatprep.mubr.bf16.mxu0 0
      %2181 = vmatmul.mubr.bf16.gmra.mrb[0].mxu0 %v752
      %v2182 = vpop.f32.mrb[0].mxu0
      %v2183 = vadd.f32 %v2022, %v2182
      %v2184 = vpop.f32.mrb[0].mxu0
      %v2185 = vpop.f32.mrb[0].mxu0
      %v2186 = vadd.f32 %v2025, %v2185
      %v2187 = vpop.f32.mrb[0].mxu0
      %2188 = vdwg.mxu0
      %2189 = vst [vmem:[%s235] sm:$0xff] %v2063
      %2190 = vst [vmem:[%s235 + $0x8] sm:$0xff] %v2066
      %2191 = vst [vmem:[%s235 + $0x10] sm:$0xff] %v2071
      %2192 = vst [vmem:[%s235 + $0x18] sm:$0xff] %v2074
      %2193 = vst [vmem:[%s235 + $0x20] sm:$0xff] %v2079
      %2194 = vst [vmem:[%s235 + $0x28] sm:$0xff] %v2082
      %2195 = vst [vmem:[%s235 + $0x30] sm:$0xff] %v2087
      %2196 = vst [vmem:[%s235 + $0x38] sm:$0xff] %v2090
      %2197 = vst [vmem:[%s235 + $0x40] sm:$0xff] %v2095
      %2198 = vst [vmem:[%s235 + $0x48] sm:$0xff] %v2098
      %2199 = vst [vmem:[%s235 + $0x50] sm:$0xff] %v2103
      %2200 = vst [vmem:[%s235 + $0x58] sm:$0xff] %v2106
      %2201 = vst [vmem:[%s235 + $0x60] sm:$0xff] %v2111
      %2202 = vst [vmem:[%s235 + $0x68] sm:$0xff] %v2114
      %2203 = vst [vmem:[%s235 + $0x70] sm:$0xff] %v2119
      %2204 = vst [vmem:[%s235 + $0x78] sm:$0xff] %v2122
      %2205 = vst [vmem:[%s235 + $0x80] sm:$0xff] %v2127
      %2206 = vst [vmem:[%s235 + $0x88] sm:$0xff] %v2130
      %2207 = vst [vmem:[%s235 + $0x90] sm:$0xff] %v2135
      %2208 = vst [vmem:[%s235 + $0x98] sm:$0xff] %v2138
      %2209 = vst [vmem:[%s235 + $0xa0] sm:$0xff] %v2143
      %2210 = vst [vmem:[%s235 + $0xa8] sm:$0xff] %v2146
      %2211 = vst [vmem:[%s235 + $0xb0] sm:$0xff] %v2151
      %2212 = vst [vmem:[%s235 + $0xb8] sm:$0xff] %v2154
      %2213 = vst [vmem:[%s235 + $0xc0] sm:$0xff] %v2159
      %2214 = vst [vmem:[%s235 + $0xc8] sm:$0xff] %v2162
      %2215 = vst [vmem:[%s235 + $0xd0] sm:$0xff] %v2167
      %2216 = vst [vmem:[%s235 + $0xd8] sm:$0xff] %v2170
      %2217 = vst [vmem:[%s235 + $0xe0] sm:$0xff] %v2175
      %2218 = vst [vmem:[%s235 + $0xe8] sm:$0xff] %v2178
      %2219 = vst [vmem:[%s235 + $0xf0] sm:$0xff] %v2183
      %2220 = vst [vmem:[%s235 + $0xf8] sm:$0xff] %v2186
      %v2221 = vadd.f32 %v2063, %v2066
      %v2222 = vadd.f32 %v2221, %v2071
      %v2223 = vadd.f32 %v2222, %v2074
      %v2224 = vadd.f32 %v2223, %v2079
      %v2225 = vadd.f32 %v2224, %v2082
      %v2226 = vadd.f32 %v2225, %v2087
      %v2227 = vadd.f32 %v2226, %v2090
      %v2228 = vadd.f32 %v2227, %v2095
      %v2229 = vadd.f32 %v2228, %v2098
      %v2230 = vadd.f32 %v2229, %v2103
      %v2231 = vadd.f32 %v2230, %v2106
      %v2232 = vadd.f32 %v2231, %v2111
      %v2233 = vadd.f32 %v2232, %v2114
      %v2234 = vadd.f32 %v2233, %v2119
      %v2235 = vadd.f32 %v2234, %v2122
      %v2236 = vadd.f32 %v2235, %v2127
      %v2237 = vadd.f32 %v2236, %v2130
      %v2238 = vadd.f32 %v2237, %v2135
      %v2239 = vadd.f32 %v2238, %v2138
      %v2240 = vadd.f32 %v2239, %v2143
      %v2241 = vadd.f32 %v2240, %v2146
      %v2242 = vadd.f32 %v2241, %v2151
      %v2243 = vadd.f32 %v2242, %v2154
      %v2244 = vadd.f32 %v2243, %v2159
      %v2245 = vadd.f32 %v2244, %v2162
      %v2246 = vadd.f32 %v2245, %v2167
      %v2247 = vadd.f32 %v2246, %v2170
      %v2248 = vadd.f32 %v2247, %v2175
      %v2249 = vadd.f32 %v2248, %v2178
      %v2250 = vadd.f32 %v2249, %v2183
      %v2251 = vadd.f32 %v2250, %v2186
      %v2252 = vrot.slane %v2251, 4
      %v2253 = vadd.f32 %v2251, %v2252
      %v2254 = vrot.slane %v2253, 2
      %v2255 = vadd.f32 %v2253, %v2254
      %v2256 = vrot.slane %v2255, 1
      %v2257 = vadd.f32 %v2255, %v2256
      %2258 = vst [vmem:[%s238] sm:$0x1] %v2257
      %v2259 = vmul.f32 %v2063, %v2063
      %v2260 = vmul.f32 %v2066, %v2066
      %v2261 = vmul.f32 %v2071, %v2071
      %v2262 = vmul.f32 %v2074, %v2074
      %v2263 = vmul.f32 %v2079, %v2079
      %v2264 = vmul.f32 %v2082, %v2082
      %v2265 = vmul.f32 %v2087, %v2087
      %v2266 = vmul.f32 %v2090, %v2090
      %v2267 = vmul.f32 %v2095, %v2095
      %v2268 = vmul.f32 %v2098, %v2098
      %v2269 = vmul.f32 %v2103, %v2103
      %v2270 = vmul.f32 %v2106, %v2106
      %v2271 = vmul.f32 %v2111, %v2111
      %v2272 = vmul.f32 %v2114, %v2114
      %v2273 = vmul.f32 %v2119, %v2119
      %v2274 = vmul.f32 %v2122, %v2122
      %v2275 = vmul.f32 %v2127, %v2127
      %v2276 = vmul.f32 %v2130, %v2130
      %v2277 = vmul.f32 %v2135, %v2135
      %v2278 = vmul.f32 %v2138, %v2138
      %v2279 = vmul.f32 %v2143, %v2143
      %v2280 = vmul.f32 %v2146, %v2146
      %v2281 = vmul.f32 %v2151, %v2151
      %v2282 = vmul.f32 %v2154, %v2154
      %v2283 = vmul.f32 %v2159, %v2159
      %v2284 = vmul.f32 %v2162, %v2162
      %v2285 = vmul.f32 %v2167, %v2167
      %v2286 = vmul.f32 %v2170, %v2170
      %v2287 = vmul.f32 %v2175, %v2175
      %v2288 = vmul.f32 %v2178, %v2178
      %v2289 = vmul.f32 %v2183, %v2183
      %v2290 = vmul.f32 %v2186, %v2186
      %v2291 = vadd.f32 %v2259, %v2260
      %v2292 = vadd.f32 %v2291, %v2261
      %v2293 = vadd.f32 %v2292, %v2262
      %v2294 = vadd.f32 %v2293, %v2263
      %v2295 = vadd.f32 %v2294, %v2264
      %v2296 = vadd.f32 %v2295, %v2265
      %v2297 = vadd.f32 %v2296, %v2266
      %v2298 = vadd.f32 %v2297, %v2267
      %v2299 = vadd.f32 %v2298, %v2268
      %v2300 = vadd.f32 %v2299, %v2269
      %v2301 = vadd.f32 %v2300, %v2270
      %v2302 = vadd.f32 %v2301, %v2271
      %v2303 = vadd.f32 %v2302, %v2272
      %v2304 = vadd.f32 %v2303, %v2273
      %v2305 = vadd.f32 %v2304, %v2274
      %v2306 = vadd.f32 %v2305, %v2275
      %v2307 = vadd.f32 %v2306, %v2276
      %v2308 = vadd.f32 %v2307, %v2277
      %v2309 = vadd.f32 %v2308, %v2278
      %v2310 = vadd.f32 %v2309, %v2279
      %v2311 = vadd.f32 %v2310, %v2280
      %v2312 = vadd.f32 %v2311, %v2281
      %v2313 = vadd.f32 %v2312, %v2282
      %v2314 = vadd.f32 %v2313, %v2283
      %v2315 = vadd.f32 %v2314, %v2284
      %v2316 = vadd.f32 %v2315, %v2285
      %v2317 = vadd.f32 %v2316, %v2286
      %v2318 = vadd.f32 %v2317, %v2287
      %v2319 = vadd.f32 %v2318, %v2288
      %v2320 = vadd.f32 %v2319, %v2289
      %v2321 = vadd.f32 %v2320, %v2290
      %v2322 = vrot.slane %v2321, 4
      %v2323 = vadd.f32 %v2321, %v2322
      %v2324 = vrot.slane %v2323, 2
      %v2325 = vadd.f32 %v2323, %v2324
      %v2326 = vrot.slane %v2325, 1
      %v2327 = vadd.f32 %v2325, %v2326
      %2328 = vst [vmem:[%s241] sm:$0x1] %v2327
      %p2329 = scmp.lt.s32.totalorder %s17, 1
      %s2330 = scalar_select %p2329, %s17, 1
      %s2331 = smul.addr %s2330, 32
      %s2332 = smul.addr %s2331, 8
      %s2333 = scalar_lea.vmem %s3, %s2332
      %p2334 = scmp.lt.s32.totalorder %s17, 1
      %s2335 = scalar_select %p2334, %s17, 1
      %s2336 = scalar_lea.vmem %s4, %s2335
      %p2337 = scmp.lt.s32.totalorder %s17, 1
      %s2338 = scalar_select %p2337, %s17, 1
      %s2339 = scalar_lea.vmem %s5, %s2338
      // Predicated region
      $region33: #{decoder_block_forward.3} parent=31 // pred_check
        %p2340 = pneg %p103
      $region34: #{decoder_block_forward.3} parent=31 // pred_check_branch
        %2342 = sbr.rel (%p2340) target = $region36
      $region35: #{decoder_block_forward.3} parent=31 // pred_region
        _
      $region36: #{decoder_block_forward.3} parent=31 // pred_fallthru
        _
      // Predicated region
      $region37: #{decoder_block_forward.3} parent=31 // pred_check
        %p2343 = pneg %p129
      $region38: #{decoder_block_forward.3} parent=31 // pred_check_branch
        %2345 = sbr.rel (%p2343) target = $region40
      $region39: #{decoder_block_forward.3} parent=31 // pred_region
        _
      $region40: #{decoder_block_forward.3} parent=31 // pred_fallthru
        _
      // Predicated region
      $region41: #{decoder_block_forward.3} parent=31 // pred_check
        %p2346 = pneg %p155
      $region42: #{decoder_block_forward.3} parent=31 // pred_check_branch
        %2348 = sbr.rel (%p2346) target = $region44
      $region43: #{decoder_block_forward.3} parent=31 // pred_region
        _
      $region44: #{decoder_block_forward.3} parent=31 // pred_fallthru
        _
    $region32: #{decoder_block_forward.3} parent=5 // pred_fallthru
      _
    %p2349 = scmp.le.s32.totalorder 2, %s12
    // Predicated region
    $region45: #{decoder_block_forward.3} parent=5 // pred_check
      %p2350 = pneg %p2349
    $region46: #{decoder_block_forward.3} parent=5 // pred_check_branch
      %2352 = sbr.rel (%p2350) target = $region48
    $region47: #{decoder_block_forward.3} parent=5 // pred_region
      %s2353 = ssub.s32 %s12, 2
      // Predicated region
      $region49: #{decoder_block_forward.3} parent=47 // pred_check
        %p2354 = pneg %p109
      $region50: #{decoder_block_forward.3} parent=47 // pred_check_branch
        %2356 = sbr.rel (%p2354) target = $region52
      $region51: #{decoder_block_forward.3} parent=47 // pred_region
        %p2357 = scmp.lt.s32.totalorder %s18, 1
        %s2358 = scalar_select %p2357, %s18, 1
        %s2359 = smul.addr %s2358, 32
        %s2360 = smul.addr %s2359, 8
        %s2361 = scalar_lea.vmem %s3, %s2360
      $region52: #{decoder_block_forward.3} parent=47 // pred_fallthru
        _
      // Predicated region
      $region53: #{decoder_block_forward.3} parent=47 // pred_check
        %p2362 = pneg %p135
      $region54: #{decoder_block_forward.3} parent=47 // pred_check_branch
        %2364 = sbr.rel (%p2362) target = $region56
      $region55: #{decoder_block_forward.3} parent=47 // pred_region
        %p2365 = scmp.lt.s32.totalorder %s18, 1
        %s2366 = scalar_select %p2365, %s18, 1
        %s2367 = scalar_lea.vmem %s4, %s2366
      $region56: #{decoder_block_forward.3} parent=47 // pred_fallthru
        _
      // Predicated region
      $region57: #{decoder_block_forward.3} parent=47 // pred_check
        %p2368 = pneg %p161
      $region58: #{decoder_block_forward.3} parent=47 // pred_check_branch
        %2370 = sbr.rel (%p2368) target = $region60
      $region59: #{decoder_block_forward.3} parent=47 // pred_region
        %p2371 = scmp.lt.s32.totalorder %s18, 1
        %s2372 = scalar_select %p2371, %s18, 1
        %s2373 = scalar_lea.vmem %s5, %s2372
      $region60: #{decoder_block_forward.3} parent=47 // pred_fallthru
        _
    $region48: #{decoder_block_forward.3} parent=5 // pred_fallthru
      _
  $region6: #{decoder_block_forward.3} parent=0 // loop_footer
    %s16 = sadd.s32 1, %s12
  $region7: #{decoder_block_forward.3} parent=0 // loop_footer_branch
    %11 = sbr.rel target = $region3
  $region8: #{decoder_block_forward.3} parent=0 // loop_exit
    _

// kernel: decoder_block_forward.4
$region0: #{decoder_block_forward.4}
  #allocation0 [shape = 'u32[]', space=smem, size = 0x4, offset = 0x4, fixed_abs, tag = 'smem constant byte address 0x4 - core index']
  #allocation1 [shape = 'u32[144,128]{1,0:T(1,128)}', space=vmem, size = 0x12000, scoped, tag = 'internal scratch']
  %s0 = inlined_call_operand.vmem [shape: f32[2,16,16,128], index: 0, kind: input, shape index: {}]
  %s1 = inlined_call_operand.vmem [shape: f32[1,128], index: 1, kind: input, shape index: {}]
  %s2 = inlined_call_operand.vmem [shape: f32[1,128], index: 2, kind: input, shape index: {}]
  %s3 = inlined_call_operand.vmem [shape: bf16[1152,128], index: 3, kind: input, shape index: {}]
  %s4 = inlined_call_operand.vmem [shape: f32[1,128], index: 4, kind: input, shape index: {}]
  %s5 = inlined_call_operand.vmem [shape: f32[2,256,128], index: 5, kind: output, shape index: {0}]
  %s6 = inlined_call_operand.vmem [shape: f32[2,1,128], index: 6, kind: output, shape index: {1}]
  %s7 = inlined_call_operand.vmem [shape: f32[2,1,128], index: 7, kind: output, shape index: {2}]
  %8 = xla_tuple %s5, %s6, %s7
  %s9 = sld [smem:[#allocation0]]
  $region69: #{decoder_block_forward.4} parent=0
    _
  %s11 = ssub.s32 1, %s9
  %s12 = scalar_select 0, %s11, %s9
  loop: start=0, step=1, limit=4
  $region2: #{decoder_block_forward.4} parent=0 // loop_pre_header
    _
  $region3: #{decoder_block_forward.4} parent=0 // loop_header
    %s14 = sphi 0, %s18
    %p15 = scmp.ge.s32.totalorder %s14, 4
    %s24 = sphi 0, %s26
    %s27 = sphi 0, %s24
    %s28 = sphi 0, %s27
    %s44 = sphi 0, %s28
    %s48 = sphi 0, %s48
    %s50 = sphi 0, %s48
    %s51 = sphi 0, %s50
    %s65 = sphi 0, %s51
    %s69 = sphi 0, %s69
    %s71 = sphi 0, %s69
    %s72 = sphi 0, %s71
    %s86 = sphi 0, %s72
    %s90 = sphi 0, %s90
    %s92 = sphi 0, %s90
    %s93 = sphi 0, %s92
    %s107 = sphi 0, %s93
    %s111 = sphi 0, %s111
    %s113 = sphi 0, %s111
    %s114 = sphi 0, %s113
    %s128 = sphi 0, %s114
    %s134 = sphi 0, %s136
    %s137 = sphi 0, %s134
    %s138 = sphi 0, %s137
    %s154 = sphi 0, %s138
    %s160 = sphi 0, %s162
    %s163 = sphi 0, %s160
    %s164 = sphi 0, %s163
    %s180 = sphi 0, %s164
    %s186 = sphi 0, %s188
    %s189 = sphi 0, %s186
    %s190 = sphi 0, %s189
    %s206 = sphi 0, %s190
  $region4: #{decoder_block_forward.4} parent=0 // loop_header_branch
    %17 = sbr.rel (%p15) target = $region8
  $region5: #{decoder_block_forward.4} parent=0 // loop_body
    %s19 = ssub.s32 %s14, 1
    %s20 = ssub.s32 %s14, 2
    %s21 = sadd.s32 %s14, 1
    %s22 = ssub.s32 %s14, %s21
    %p23 = scmp.eq.s32.totalorder %s22, 0
    %s25 = sadd.s32 %s24, 1
    %s26 = scalar_select %p23, %s24, %s25
    %p29 = pneg %p23
    %p30 = scmp.eq.s32.totalorder %s14, 1
    %p31 = por %p29, %p30
    %p32 = scmp.ne.s32.totalorder %s24, %s27
    %p33 = scmp.eq.s32.totalorder %s14, 0
    %p34 = por %p32, %p33
    %p35 = scmp.ne.s32.totalorder %s24, %s27
    %p36 = scmp.eq.s32.totalorder %s19, 1
    %p37 = por %p35, %p36
    %p38 = scmp.ne.s32.totalorder %s27, %s28
    %p39 = scmp.eq.s32.totalorder %s19, 0
    %p40 = por %p38, %p39
    %p41 = scmp.ne.s32.totalorder %s27, %s28
    %p42 = scmp.eq.s32.totalorder %s20, 1
    %p43 = por %p41, %p42
    %p45 = scmp.ne.s32.totalorder %s28, %s44
    %p46 = scmp.eq.s32.totalorder %s20, 0
    %p47 = por %p45, %p46
    %s49 = sadd.s32 %s48, 1
    %p52 = scmp.eq.s32.totalorder %s14, 1
    %p53 = scmp.ne.s32.totalorder %s48, %s50
    %p54 = scmp.eq.s32.totalorder %s14, 0
    %p55 = por %p53, %p54
    %p56 = scmp.ne.s32.totalorder %s48, %s50
    %p57 = scmp.eq.s32.totalorder %s19, 1
    %p58 = por %p56, %p57
    %p59 = scmp.ne.s32.totalorder %s50, %s51
    %p60 = scmp.eq.s32.totalorder %s19, 0
    %p61 = por %p59, %p60
    %p62 = scmp.ne.s32.totalorder %s50, %s51
    %p63 = scmp.eq.s32.totalorder %s20, 1
    %p64 = por %p62, %p63
    %p66 = scmp.ne.s32.totalorder %s51, %s65
    %p67 = scmp.eq.s32.totalorder %s20, 0
    %p68 = por %p66, %p67
    %s70 = sadd.s32 %s69, 1
    %p73 = scmp.eq.s32.totalorder %s14, 1
    %p74 = scmp.ne.s32.totalorder %s69, %s71
    %p75 = scmp.eq.s32.totalorder %s14, 0
    %p76 = por %p74, %p75
    %p77 = scmp.ne.s32.totalorder %s69, %s71
    %p78 = scmp.eq.s32.totalorder %s19, 1
    %p79 = por %p77, %p78
    %p80 = scmp.ne.s32.totalorder %s71, %s72
    %p81 = scmp.eq.s32.totalorder %s19, 0
    %p82 = por %p80, %p81
    %p83 = scmp.ne.s32.totalorder %s71, %s72
    %p84 = scmp.eq.s32.totalorder %s20, 1
    %p85 = por %p83, %p84
    %p87 = scmp.ne.s32.totalorder %s72, %s86
    %p88 = scmp.eq.s32.totalorder %s20, 0
    %p89 = por %p87, %p88
    %s91 = sadd.s32 %s90, 1
    %p94 = scmp.eq.s32.totalorder %s14, 1
    %p95 = scmp.ne.s32.totalorder %s90, %s92
    %p96 = scmp.eq.s32.totalorder %s14, 0
    %p97 = por %p95, %p96
    %p98 = scmp.ne.s32.totalorder %s90, %s92
    %p99 = scmp.eq.s32.totalorder %s19, 1
    %p100 = por %p98, %p99
    %p101 = scmp.ne.s32.totalorder %s92, %s93
    %p102 = scmp.eq.s32.totalorder %s19, 0
    %p103 = por %p101, %p102
    %p104 = scmp.ne.s32.totalorder %s92, %s93
    %p105 = scmp.eq.s32.totalorder %s20, 1
    %p106 = por %p104, %p105
    %p108 = scmp.ne.s32.totalorder %s93, %s107
    %p109 = scmp.eq.s32.totalorder %s20, 0
    %p110 = por %p108, %p109
    %s112 = sadd.s32 %s111, 1
    %p115 = scmp.eq.s32.totalorder %s14, 1
    %p116 = scmp.ne.s32.totalorder %s111, %s113
    %p117 = scmp.eq.s32.totalorder %s14, 0
    %p118 = por %p116, %p117
    %p119 = scmp.ne.s32.totalorder %s111, %s113
    %p120 = scmp.eq.s32.totalorder %s19, 1
    %p121 = por %p119, %p120
    %p122 = scmp.ne.s32.totalorder %s113, %s114
    %p123 = scmp.eq.s32.totalorder %s19, 0
    %p124 = por %p122, %p123
    %p125 = scmp.ne.s32.totalorder %s113, %s114
    %p126 = scmp.eq.s32.totalorder %s20, 1
    %p127 = por %p125, %p126
    %p129 = scmp.ne.s32.totalorder %s114, %s128
    %p130 = scmp.eq.s32.totalorder %s20, 0
    %p131 = por %p129, %p130
    %s132 = ssub.s32 %s14, %s21
    %p133 = scmp.eq.s32.totalorder %s132, 0
    %s135 = sadd.s32 %s134, 1
    %s136 = scalar_select %p133, %s134, %s135
    %p139 = pneg %p133
    %p140 = scmp.eq.s32.totalorder %s14, 1
    %p141 = por %p139, %p140
    %p142 = scmp.ne.s32.totalorder %s134, %s137
    %p143 = scmp.eq.s32.totalorder %s14, 0
    %p144 = por %p142, %p143
    %p145 = scmp.ne.s32.totalorder %s134, %s137
    %p146 = scmp.eq.s32.totalorder %s19, 1
    %p147 = por %p145, %p146
    %p148 = scmp.ne.s32.totalorder %s137, %s138
    %p149 = scmp.eq.s32.totalorder %s19, 0
    %p150 = por %p148, %p149
    %p151 = scmp.ne.s32.totalorder %s137, %s138
    %p152 = scmp.eq.s32.totalorder %s20, 1
    %p153 = por %p151, %p152
    %p155 = scmp.ne.s32.totalorder %s138, %s154
    %p156 = scmp.eq.s32.totalorder %s20, 0
    %p157 = por %p155, %p156
    %s158 = ssub.s32 %s14, %s21
    %p159 = scmp.eq.s32.totalorder %s158, 0
    %s161 = sadd.s32 %s160, 1
    %s162 = scalar_select %p159, %s160, %s161
    %p165 = pneg %p159
    %p166 = scmp.eq.s32.totalorder %s14, 1
    %p167 = por %p165, %p166
    %p168 = scmp.ne.s32.totalorder %s160, %s163
    %p169 = scmp.eq.s32.totalorder %s14, 0
    %p170 = por %p168, %p169
    %p171 = scmp.ne.s32.totalorder %s160, %s163
    %p172 = scmp.eq.s32.totalorder %s19, 1
    %p173 = por %p171, %p172
    %p174 = scmp.ne.s32.totalorder %s163, %s164
    %p175 = scmp.eq.s32.totalorder %s19, 0
    %p176 = por %p174, %p175
    %p177 = scmp.ne.s32.totalorder %s163, %s164
    %p178 = scmp.eq.s32.totalorder %s20, 1
    %p179 = por %p177, %p178
    %p181 = scmp.ne.s32.totalorder %s164, %s180
    %p182 = scmp.eq.s32.totalorder %s20, 0
    %p183 = por %p181, %p182
    %s184 = ssub.s32 %s14, %s21
    %p185 = scmp.eq.s32.totalorder %s184, 0
    %s187 = sadd.s32 %s186, 1
    %s188 = scalar_select %p185, %s186, %s187
    %p191 = pneg %p185
    %p192 = scmp.eq.s32.totalorder %s14, 1
    %p193 = por %p191, %p192
    %p194 = scmp.ne.s32.totalorder %s186, %s189
    %p195 = scmp.eq.s32.totalorder %s14, 0
    %p196 = por %p194, %p195
    %p197 = scmp.ne.s32.totalorder %s186, %s189
    %p198 = scmp.eq.s32.totalorder %s19, 1
    %p199 = por %p197, %p198
    %p200 = scmp.ne.s32.totalorder %s189, %s190
    %p201 = scmp.eq.s32.totalorder %s19, 0
    %p202 = por %p200, %p201
    %p203 = scmp.ne.s32.totalorder %s189, %s190
    %p204 = scmp.eq.s32.totalorder %s20, 1
    %p205 = por %p203, %p204
    %p207 = scmp.ne.s32.totalorder %s190, %s206
    %p208 = scmp.eq.s32.totalorder %s20, 0
    %p209 = por %p207, %p208
    %p210 = scmp.le.s32.totalorder 1, %s14
    %p211 = scmp.lt.s32.totalorder %s14, 3
    %p212 = pnand %p210, %p211
    %p213 = pneg %p212
    // Predicated region
    $region9: #{decoder_block_forward.4} parent=5 // pred_check
      _
    $region10: #{decoder_block_forward.4} parent=5 // pred_check_branch
      %215 = sbr.rel (%p212) target = $region12
    $region11: #{decoder_block_forward.4} parent=5 // pred_region
      %s216 = ssub.s32 %s14, 1
      // Predicated region
      $region13: #{decoder_block_forward.4} parent=11 // pred_check
        %p217 = pneg %p61
      $region14: #{decoder_block_forward.4} parent=11 // pred_check_branch
        %219 = sbr.rel (%p217) target = $region16
      $region15: #{decoder_block_forward.4} parent=11 // pred_region
        _
      $region16: #{decoder_block_forward.4} parent=11 // pred_fallthru
        _
      // Predicated region
      $region17: #{decoder_block_forward.4} parent=11 // pred_check
        %p220 = pneg %p82
      $region18: #{decoder_block_forward.4} parent=11 // pred_check_branch
        %222 = sbr.rel (%p220) target = $region20
      $region19: #{decoder_block_forward.4} parent=11 // pred_region
        _
      $region20: #{decoder_block_forward.4} parent=11 // pred_fallthru
        _
      // Predicated region
      $region21: #{decoder_block_forward.4} parent=11 // pred_check
        %p223 = pneg %p103
      $region22: #{decoder_block_forward.4} parent=11 // pred_check_branch
        %225 = sbr.rel (%p223) target = $region24
      $region23: #{decoder_block_forward.4} parent=11 // pred_region
        _
      $region24: #{decoder_block_forward.4} parent=11 // pred_fallthru
        _
      // Predicated region
      $region25: #{decoder_block_forward.4} parent=11 // pred_check
        %p226 = pneg %p124
      $region26: #{decoder_block_forward.4} parent=11 // pred_check_branch
        %228 = sbr.rel (%p226) target = $region28
      $region27: #{decoder_block_forward.4} parent=11 // pred_region
        _
      $region28: #{decoder_block_forward.4} parent=11 // pred_fallthru
        _
    $region12: #{decoder_block_forward.4} parent=5 // pred_fallthru
      _
    %p229 = scmp.lt.s32.totalorder %s14, 2
    // Predicated region
    $region29: #{decoder_block_forward.4} parent=5 // pred_check
      %p230 = pneg %p229
    $region30: #{decoder_block_forward.4} parent=5 // pred_check_branch
      %232 = sbr.rel (%p230) target = $region32
    $region31: #{decoder_block_forward.4} parent=5 // pred_region
      // Predicated region
      $region33: #{decoder_block_forward.4} parent=31 // pred_check
        %p233 = pneg %p34
      $region34: #{decoder_block_forward.4} parent=31 // pred_check_branch
        %235 = sbr.rel (%p233) target = $region36
      $region35: #{decoder_block_forward.4} parent=31 // pred_region
        %p236 = scmp.lt.s32.totalorder %s14, 1
        %s237 = scalar_select %p236, %s14, 1
        %s238 = smul.addr %s237, 32
        %s239 = smul.addr %s238, 8
        %s240 = scalar_lea.vmem %s0, %s239
      $region36: #{decoder_block_forward.4} parent=31 // pred_fallthru
        _
    $region32: #{decoder_block_forward.4} parent=5 // pred_fallthru
      _
    %p241 = scmp.le.s32.totalorder 1, %s14
    %p242 = scmp.lt.s32.totalorder %s14, 3
    %p243 = pnand %p241, %p242
    %p244 = pneg %p243
    // Predicated region
    $region37: #{decoder_block_forward.4} parent=5 // pred_check
      _
    $region38: #{decoder_block_forward.4} parent=5 // pred_check_branch
      %246 = sbr.rel (%p243) target = $region40
    $region39: #{decoder_block_forward.4} parent=5 // pred_region
      %s247 = ssub.s32 %s14, 1
      %p248 = scmp.lt.s32.totalorder %s19, 1
      %s249 = scalar_select %p248, %s19, 1
      %s250 = smul.addr %s249, 32
      %s251 = smul.addr %s250, 8
      %s252 = scalar_lea.vmem %s0, %s251
      %p253 = pneg %p40
      %p254 = pneg %p37
      %p255 = pneg %p61
      %p256 = pneg %p58
      %p257 = pneg %p82
      %p258 = pneg %p79
      %p259 = pneg %p103
      %p260 = pneg %p100
      %p261 = pneg %p124
      %p262 = pneg %p121
      %p263 = pneg %p150
      %p264 = pneg %p147
      %p265 = scmp.lt.s32.totalorder %s19, 1
      %s266 = scalar_select %p265, %s19, 1
      %s267 = smul.addr %s266, 32
      %s268 = smul.addr %s267, 8
      %s269 = scalar_lea.vmem %s5, %s268
      %p270 = pneg %p176
      %p271 = pneg %p173
      %p272 = scmp.lt.s32.totalorder %s19, 1
      %s273 = scalar_select %p272, %s19, 1
      %s274 = scalar_lea.vmem %s6, %s273
      %p275 = pneg %p202
      %p276 = pneg %p199
      %p277 = scmp.lt.s32.totalorder %s19, 1
      %s278 = scalar_select %p277, %s19, 1
      %s279 = scalar_lea.vmem %s7, %s278
      %p280 = scmp.lt.s32.totalorder %s19, 1
      %s281 = scalar_select %p280, %s19, 1
      %s282 = smul.addr %s281, 32
      %s283 = smul.addr %s282, 8
      %s284 = scalar_lea.vmem %s0, %s283
      %p285 = scmp.lt.s32.totalorder %s19, 1
      %s286 = scalar_select %p285, %s19, 1
      %s287 = smul.addr %s286, 32
      %s288 = smul.addr %s287, 8
      %s289 = scalar_lea.vmem %s5, %s288
      %p290 = scmp.lt.s32.totalorder %s19, 1
      %s291 = scalar_select %p290, %s19, 1
      %s292 = scalar_lea.vmem %s6, %s291
      %p293 = scmp.lt.s32.totalorder %s19, 1
      %s294 = scalar_select %p293, %s19, 1
      %s295 = scalar_lea.vmem %s7, %s294
      %v297 = vld [vmem:[%s284] sm:$0xff]
      %v298 = vld [vmem:[%s284 + $0x8] sm:$0xff]
      %v299 = vld [vmem:[%s284 + $0x10] sm:$0xff]
      %v300 = vld [vmem:[%s284 + $0x18] sm:$0xff]
      %v301 = vld [vmem:[%s284 + $0x20] sm:$0xff]
      %v302 = vld [vmem:[%s284 + $0x28] sm:$0xff]
      %v303 = vld [vmem:[%s284 + $0x30] sm:$0xff]
      %v304 = vld [vmem:[%s284 + $0x38] sm:$0xff]
      %v305 = vld [vmem:[%s284 + $0x40] sm:$0xff]
      %v306 = vld [vmem:[%s284 + $0x48] sm:$0xff]
      %v307 = vld [vmem:[%s284 + $0x50] sm:$0xff]
      %v308 = vld [vmem:[%s284 + $0x58] sm:$0xff]
      %v309 = vld [vmem:[%s284 + $0x60] sm:$0xff]
      %v310 = vld [vmem:[%s284 + $0x68] sm:$0xff]
      %v311 = vld [vmem:[%s284 + $0x70] sm:$0xff]
      %v312 = vld [vmem:[%s284 + $0x78] sm:$0xff]
      %v313 = vld [vmem:[%s284 + $0x80] sm:$0xff]
      %v314 = vld [vmem:[%s284 + $0x88] sm:$0xff]
      %v315 = vld [vmem:[%s284 + $0x90] sm:$0xff]
      %v316 = vld [vmem:[%s284 + $0x98] sm:$0xff]
      %v317 = vld [vmem:[%s284 + $0xa0] sm:$0xff]
      %v318 = vld [vmem:[%s284 + $0xa8] sm:$0xff]
      %v319 = vld [vmem:[%s284 + $0xb0] sm:$0xff]
      %v320 = vld [vmem:[%s284 + $0xb8] sm:$0xff]
      %v321 = vld [vmem:[%s284 + $0xc0] sm:$0xff]
      %v322 = vld [vmem:[%s284 + $0xc8] sm:$0xff]
      %v323 = vld [vmem:[%s284 + $0xd0] sm:$0xff]
      %v324 = vld [vmem:[%s284 + $0xd8] sm:$0xff]
      %v325 = vld [vmem:[%s284 + $0xe0] sm:$0xff]
      %v326 = vld [vmem:[%s284 + $0xe8] sm:$0xff]
      %v327 = vld [vmem:[%s284 + $0xf0] sm:$0xff]
      %v328 = vld [vmem:[%s284 + $0xf8] sm:$0xff]
      %v329 = vld [vmem:[%s1] sm:$0x1]
      %v331 = vlaneseq
      %v332 = vshrl.u32 %v331, 7
      %v333 = vsub.s32 0, %v332
      %v334 = vrot.slane %v329, %v333
      %v336 = vmul.f32 %v297, %v334
      %v337 = vmul.f32 %v298, %v334
      %v338 = vmul.f32 %v299, %v334
      %v339 = vmul.f32 %v300, %v334
      %v340 = vmul.f32 %v301, %v334
      %v341 = vmul.f32 %v302, %v334
      %v342 = vmul.f32 %v303, %v334
      %v343 = vmul.f32 %v304, %v334
      %v344 = vmul.f32 %v305, %v334
      %v345 = vmul.f32 %v306, %v334
      %v346 = vmul.f32 %v307, %v334
      %v347 = vmul.f32 %v308, %v334
      %v348 = vmul.f32 %v309, %v334
      %v349 = vmul.f32 %v310, %v334
      %v350 = vmul.f32 %v311, %v334
      %v351 = vmul.f32 %v312, %v334
      %v352 = vmul.f32 %v313, %v334
      %v353 = vmul.f32 %v314, %v334
      %v354 = vmul.f32 %v315, %v334
      %v355 = vmul.f32 %v316, %v334
      %v356 = vmul.f32 %v317, %v334
      %v357 = vmul.f32 %v318, %v334
      %v358 = vmul.f32 %v319, %v334
      %v359 = vmul.f32 %v320, %v334
      %v360 = vmul.f32 %v321, %v334
      %v361 = vmul.f32 %v322, %v334
      %v362 = vmul.f32 %v323, %v334
      %v363 = vmul.f32 %v324, %v334
      %v364 = vmul.f32 %v325, %v334
      %v365 = vmul.f32 %v326, %v334
      %v366 = vmul.f32 %v327, %v334
      %v367 = vmul.f32 %v328, %v334
      %v368 = vld [vmem:[%s2] sm:$0x1]
      %v370 = vlaneseq
      %v371 = vshrl.u32 %v370, 7
      %v372 = vsub.s32 0, %v371
      %v373 = vrot.slane %v368, %v372
      %v375 = vadd.f32 %v336, %v373
      %v376 = vadd.f32 %v337, %v373
      %v377 = vadd.f32 %v338, %v373
      %v378 = vadd.f32 %v339, %v373
      %v379 = vadd.f32 %v340, %v373
      %v380 = vadd.f32 %v341, %v373
      %v381 = vadd.f32 %v342, %v373
      %v382 = vadd.f32 %v343, %v373
      %v383 = vadd.f32 %v344, %v373
      %v384 = vadd.f32 %v345, %v373
      %v385 = vadd.f32 %v346, %v373
      %v386 = vadd.f32 %v347, %v373
      %v387 = vadd.f32 %v348, %v373
      %v388 = vadd.f32 %v349, %v373
      %v389 = vadd.f32 %v350, %v373
      %v390 = vadd.f32 %v351, %v373
      %v391 = vadd.f32 %v352, %v373
      %v392 = vadd.f32 %v353, %v373
      %v393 = vadd.f32 %v354, %v373
      %v394 = vadd.f32 %v355, %v373
      %v395 = vadd.f32 %v356, %v373
      %v396 = vadd.f32 %v357, %v373
      %v397 = vadd.f32 %v358, %v373
      %v398 = vadd.f32 %v359, %v373
      %v399 = vadd.f32 %v360, %v373
      %v400 = vadd.f32 %v361, %v373
      %v401 = vadd.f32 %v362, %v373
      %v402 = vadd.f32 %v363, %v373
      %v403 = vadd.f32 %v364, %v373
      %v404 = vadd.f32 %v365, %v373
      %v405 = vadd.f32 %v366, %v373
      %v406 = vadd.f32 %v367, %v373
      %v407 = vmax.f32 %v375, 0.0
      %v408 = vmax.f32 %v376, 0.0
      %v409 = vmax.f32 %v377, 0.0
      %v410 = vmax.f32 %v378, 0.0
      %v411 = vmax.f32 %v379, 0.0
      %v412 = vmax.f32 %v380, 0.0
      %v413 = vmax.f32 %v381, 0.0
      %v414 = vmax.f32 %v382, 0.0
      %v415 = vmax.f32 %v383, 0.0
      %v416 = vmax.f32 %v384, 0.0
      %v417 = vmax.f32 %v385, 0.0
      %v418 = vmax.f32 %v386, 0.0
      %v419 = vmax.f32 %v387, 0.0
      %v420 = vmax.f32 %v388, 0.0
      %v421 = vmax.f32 %v389, 0.0
      %v422 = vmax.f32 %v390, 0.0
      %v423 = vmax.f32 %v391, 0.0
      %v424 = vmax.f32 %v392, 0.0
      %v425 = vmax.f32 %v393, 0.0
      %v426 = vmax.f32 %v394, 0.0
      %v427 = vmax.f32 %v395, 0.0
      %v428 = vmax.f32 %v396, 0.0
      %v429 = vmax.f32 %v397, 0.0
      %v430 = vmax.f32 %v398, 0.0
      %v431 = vmax.f32 %v399, 0.0
      %v432 = vmax.f32 %v400, 0.0
      %v433 = vmax.f32 %v401, 0.0
      %v434 = vmax.f32 %v402, 0.0
      %v435 = vmax.f32 %v403, 0.0
      %v436 = vmax.f32 %v404, 0.0
      %v437 = vmax.f32 %v405, 0.0
      %v438 = vmax.f32 %v406, 0.0
      %vm472 = vcmask 1040384
      %v473 = vrot.slane 0.0, 7
      %v474 = vsel %vm472, %v473, %v473
      %v475 = vrot.slane %v407, 7
      %v476 = vrot.slane %v408, 7
      %v477 = vsel %vm472, %v475, %v476
      %v478 = vrot.slane %v409, 7
      %v479 = vrot.slane %v410, 7
      %v480 = vsel %vm472, %v478, %v479
      %v481 = vrot.slane %v411, 7
      %v482 = vrot.slane %v412, 7
      %v483 = vsel %vm472, %v481, %v482
      %v484 = vrot.slane %v413, 7
      %v485 = vrot.slane %v414, 7
      %v486 = vsel %vm472, %v484, %v485
      %v487 = vrot.slane %v415, 7
      %v488 = vrot.slane %v416, 7
      %v489 = vsel %vm472, %v487, %v488
      %v490 = vrot.slane %v417, 7
      %v491 = vrot.slane %v418, 7
      %v492 = vsel %vm472, %v490, %v491
      %v493 = vrot.slane %v419, 7
      %v494 = vrot.slane %v420, 7
      %v495 = vsel %vm472, %v493, %v494
      %v496 = vrot.slane %v421, 7
      %v497 = vrot.slane %v422, 7
      %v498 = vsel %vm472, %v496, %v497
      %v499 = vrot.slane %v423, 7
      %v500 = vrot.slane %v424, 7
      %v501 = vsel %vm472, %v499, %v500
      %v502 = vrot.slane %v425, 7
      %v503 = vrot.slane %v426, 7
      %v504 = vsel %vm472, %v502, %v503
      %v505 = vrot.slane %v427, 7
      %v506 = vrot.slane %v428, 7
      %v507 = vsel %vm472, %v505, %v506
      %v508 = vrot.slane %v429, 7
      %v509 = vrot.slane %v430, 7
      %v510 = vsel %vm472, %v508, %v509
      %v511 = vrot.slane %v431, 7
      %v512 = vrot.slane %v432, 7
      %v513 = vsel %vm472, %v511, %v512
      %v514 = vrot.slane %v433, 7
      %v515 = vrot.slane %v434, 7
      %v516 = vsel %vm472, %v514, %v515
      %v517 = vrot.slane %v435, 7
      %v518 = vrot.slane %v436, 7
      %v519 = vsel %vm472, %v517, %v518
      %v520 = vrot.slane %v437, 7
      %v521 = vrot.slane %v438, 7
      %v522 = vsel %vm472, %v520, %v521
      %v573 = vsel %vm472, 0.0, %v473
      %v574 = vsel %vm472, 0.0, %v475
      %v575 = vsel %vm472, 0.0, %v478
      %v576 = vsel %vm472, 0.0, %v481
      %v577 = vsel %vm472, 0.0, %v484
      %v578 = vsel %vm472, 0.0, %v487
      %v579 = vsel %vm472, 0.0, %v490
      %v580 = vsel %vm472, 0.0, %v493
      %v581 = vsel %vm472, 0.0, %v496
      %v582 = vsel %vm472, 0.0, %v499
      %v583 = vsel %vm472, 0.0, %v502
      %v584 = vsel %vm472, 0.0, %v505
      %v585 = vsel %vm472, 0.0, %v508
      %v586 = vsel %vm472, 0.0, %v511
      %v587 = vsel %vm472, 0.0, %v514
      %v588 = vsel %vm472, 0.0, %v517
      %v589 = vsel %vm472, 0.0, %v520
      %v590 = vsel %vm472, %v473, 0.0
      %v591 = vsel %vm472, %v476, 0.0
      %v592 = vsel %vm472, %v479, 0.0
      %v593 = vsel %vm472, %v482, 0.0
      %v594 = vsel %vm472, %v485, 0.0
      %v595 = vsel %vm472, %v488, 0.0
      %v596 = vsel %vm472, %v491, 0.0
      %v597 = vsel %vm472, %v494, 0.0
      %v598 = vsel %vm472, %v497, 0.0
      %v599 = vsel %vm472, %v500, 0.0
      %v600 = vsel %vm472, %v503, 0.0
      %v601 = vsel %vm472, %v506, 0.0
      %v602 = vsel %vm472, %v509, 0.0
      %v603 = vsel %vm472, %v512, 0.0
      %v604 = vsel %vm472, %v515, 0.0
      %v605 = vsel %vm472, %v518, 0.0
      %v606 = vsel %vm472, %v521, 0.0
      %vm639 = vcmask 1046528
      %v640 = vrot.slane %v573, 1
      %v641 = vrot.slane %v474, 1
      %v642 = vsel %vm639, %v640, %v641
      %v643 = vrot.slane %v590, 1
      %v644 = vsel %vm639, %v641, %v643
      %v645 = vrot.slane %v574, 1
      %v646 = vrot.slane %v477, 1
      %v647 = vsel %vm639, %v645, %v646
      %v648 = vrot.slane %v591, 1
      %v649 = vsel %vm639, %v646, %v648
      %v650 = vrot.slane %v575, 1
      %v651 = vrot.slane %v480, 1
      %v652 = vsel %vm639, %v650, %v651
      %v653 = vrot.slane %v592, 1
      %v654 = vsel %vm639, %v651, %v653
      %v655 = vrot.slane %v576, 1
      %v656 = vrot.slane %v483, 1
      %v657 = vsel %vm639, %v655, %v656
      %v658 = vrot.slane %v593, 1
      %v659 = vsel %vm639, %v656, %v658
      %v660 = vrot.slane %v577, 1
      %v661 = vrot.slane %v486, 1
      %v662 = vsel %vm639, %v660, %v661
      %v663 = vrot.slane %v594, 1
      %v664 = vsel %vm639, %v661, %v663
      %v665 = vrot.slane %v578, 1
      %v666 = vrot.slane %v489, 1
      %v667 = vsel %vm639, %v665, %v666
      %v668 = vrot.slane %v595, 1
      %v669 = vsel %vm639, %v666, %v668
      %v670 = vrot.slane %v579, 1
      %v671 = vrot.slane %v492, 1
      %v672 = vsel %vm639, %v670, %v671
      %v673 = vrot.slane %v596, 1
      %v674 = vsel %vm639, %v671, %v673
      %v675 = vrot.slane %v580, 1
      %v676 = vrot.slane %v495, 1
      %v677 = vsel %vm639, %v675, %v676
      %v678 = vrot.slane %v597, 1
      %v679 = vsel %vm639, %v676, %v678
      %v680 = vrot.slane %v581, 1
      %v681 = vrot.slane %v498, 1
      %v682 = vsel %vm639, %v680, %v681
      %v683 = vrot.slane %v598, 1
      %v684 = vsel %vm639, %v681, %v683
      %v685 = vrot.slane %v582, 1
      %v686 = vrot.slane %v501, 1
      %v687 = vsel %vm639, %v685, %v686
      %v688 = vrot.slane %v599, 1
      %v689 = vsel %vm639, %v686, %v688
      %v690 = vrot.slane %v583, 1
      %v691 = vrot.slane %v504, 1
      %v692 = vsel %vm639, %v690, %v691
      %v693 = vrot.slane %v600, 1
      %v694 = vsel %vm639, %v691, %v693
      %v695 = vrot.slane %v584, 1
      %v696 = vrot.slane %v507, 1
      %v697 = vsel %vm639, %v695, %v696
      %v698 = vrot.slane %v601, 1
      %v699 = vsel %vm639, %v696, %v698
      %v700 = vrot.slane %v585, 1
      %v701 = vrot.slane %v510, 1
      %v702 = vsel %vm639, %v700, %v701
      %v703 = vrot.slane %v602, 1
      %v704 = vsel %vm639, %v701, %v703
      %v705 = vrot.slane %v586, 1
      %v706 = vrot.slane %v513, 1
      %v707 = vsel %vm639, %v705, %v706
      %v708 = vrot.slane %v603, 1
      %v709 = vsel %vm639, %v706, %v708
      %v710 = vrot.slane %v587, 1
      %v711 = vrot.slane %v516, 1
      %v712 = vsel %vm639, %v710, %v711
      %v713 = vrot.slane %v604, 1
      %v714 = vsel %vm639, %v711, %v713
      %v715 = vrot.slane %v588, 1
      %v716 = vrot.slane %v519, 1
      %v717 = vsel %vm639, %v715, %v716
      %v718 = vrot.slane %v605, 1
      %v719 = vsel %vm639, %v716, %v718
      %vm752 = vcmask 1045504
      %v753 = vrot.slane %v573, 2
      %v754 = vrot.slane %v474, 2
      %v755 = vsel %vm752, %v753, %v754
      %v756 = vrot.slane %v590, 2
      %v757 = vsel %vm752, %v754, %v756
      %v758 = vrot.slane %v574, 2
      %v759 = vrot.slane %v477, 2
      %v760 = vsel %vm752, %v758, %v759
      %v761 = vrot.slane %v591, 2
      %v762 = vsel %vm752, %v759, %v761
      %v763 = vrot.slane %v575, 2
      %v764 = vrot.slane %v480, 2
      %v765 = vsel %vm752, %v763, %v764
      %v766 = vrot.slane %v592, 2
      %v767 = vsel %vm752, %v764, %v766
      %v768 = vrot.slane %v576, 2
      %v769 = vrot.slane %v483, 2
      %v770 = vsel %vm752, %v768, %v769
      %v771 = vrot.slane %v593, 2
      %v772 = vsel %vm752, %v769, %v771
      %v773 = vrot.slane %v577, 2
      %v774 = vrot.slane %v486, 2
      %v775 = vsel %vm752, %v773, %v774
      %v776 = vrot.slane %v594, 2
      %v777 = vsel %vm752, %v774, %v776
      %v778 = vrot.slane %v578, 2
      %v779 = vrot.slane %v489, 2
      %v780 = vsel %vm752, %v778, %v779
      %v781 = vrot.slane %v595, 2
      %v782 = vsel %vm752, %v779, %v781
      %v783 = vrot.slane %v579, 2
      %v784 = vrot.slane %v492, 2
      %v785 = vsel %vm752, %v783, %v784
      %v786 = vrot.slane %v596, 2
      %v787 = vsel %vm752, %v784, %v786
      %v788 = vrot.slane %v580, 2
      %v789 = vrot.slane %v495, 2
      %v790 = vsel %vm752, %v788, %v789
      %v791 = vrot.slane %v597, 2
      %v792 = vsel %vm752, %v789, %v791
      %v793 = vrot.slane %v581, 2
      %v794 = vrot.slane %v498, 2
      %v795 = vsel %vm752, %v793, %v794
      %v796 = vrot.slane %v598, 2
      %v797 = vsel %vm752, %v794, %v796
      %v798 = vrot.slane %v582, 2
      %v799 = vrot.slane %v501, 2
      %v800 = vsel %vm752, %v798, %v799
      %v801 = vrot.slane %v599, 2
      %v802 = vsel %vm752, %v799, %v801
      %v803 = vrot.slane %v583, 2
      %v804 = vrot.slane %v504, 2
      %v805 = vsel %vm752, %v803, %v804
      %v806 = vrot.slane %v600, 2
      %v807 = vsel %vm752, %v804, %v806
      %v808 = vrot.slane %v584, 2
      %v809 = vrot.slane %v507, 2
      %v810 = vsel %vm752, %v808, %v809
      %v811 = vrot.slane %v601, 2
      %v812 = vsel %vm752, %v809, %v811
      %v813 = vrot.slane %v585, 2
      %v814 = vrot.slane %v510, 2
      %v815 = vsel %vm752, %v813, %v814
      %v816 = vrot.slane %v602, 2
      %v817 = vsel %vm752, %v814, %v816
      %v818 = vrot.slane %v586, 2
      %v819 = vrot.slane %v513, 2
      %v820 = vsel %vm752, %v818, %v819
      %v821 = vrot.slane %v603, 2
      %v822 = vsel %vm752, %v819, %v821
      %v823 = vrot.slane %v587, 2
      %v824 = vrot.slane %v516, 2
      %v825 = vsel %vm752, %v823, %v824
      %v826 = vrot.slane %v604, 2
      %v827 = vsel %vm752, %v824, %v826
      %v828 = vrot.slane %v588, 2
      %v829 = vrot.slane %v519, 2
      %v830 = vsel %vm752, %v828, %v829
      %v831 = vrot.slane %v605, 2
      %v832 = vsel %vm752, %v829, %v831
      %v867 = vrot.slane %v589, 1
      %v868 = vrot.slane %v522, 1
      %v869 = vsel %vm639, %v867, %v868
      %v870 = vrot.slane %v606, 1
      %v871 = vsel %vm639, %v868, %v870
      %v874 = vrot.slane %v589, 2
      %v875 = vrot.slane %v522, 2
      %v876 = vsel %vm752, %v874, %v875
      %v877 = vrot.slane %v606, 2
      %v878 = vsel %vm752, %v875, %v877
      %v881 = vpack.c.bf16 %v474, %v573
      %v882 = vpack.c.bf16 %v644, %v642
      %v883 = vpack.c.bf16 %v757, %v755
      %v884 = vpack.c.bf16 %v477, %v574
      %v885 = vpack.c.bf16 %v649, %v647
      %v886 = vpack.c.bf16 %v762, %v760
      %v887 = vpack.c.bf16 %v480, %v575
      %v888 = vpack.c.bf16 %v654, %v652
      %v889 = vpack.c.bf16 %v767, %v765
      %v890 = vpack.c.bf16 %v483, %v576
      %v891 = vpack.c.bf16 %v659, %v657
      %v892 = vpack.c.bf16 %v772, %v770
      %v893 = vpack.c.bf16 %v486, %v577
      %v894 = vpack.c.bf16 %v664, %v662
      %v895 = vpack.c.bf16 %v777, %v775
      %v896 = vpack.c.bf16 %v489, %v578
      %v897 = vpack.c.bf16 %v669, %v667
      %v898 = vpack.c.bf16 %v782, %v780
      %v899 = vpack.c.bf16 %v492, %v579
      %v900 = vpack.c.bf16 %v674, %v672
      %v901 = vpack.c.bf16 %v787, %v785
      %v902 = vpack.c.bf16 %v495, %v580
      %v903 = vpack.c.bf16 %v679, %v677
      %v904 = vpack.c.bf16 %v792, %v790
      %v905 = vpack.c.bf16 %v498, %v581
      %v906 = vpack.c.bf16 %v684, %v682
      %v907 = vpack.c.bf16 %v797, %v795
      %v908 = vpack.c.bf16 %v501, %v582
      %v909 = vpack.c.bf16 %v689, %v687
      %v910 = vpack.c.bf16 %v802, %v800
      %v911 = vpack.c.bf16 %v504, %v583
      %v912 = vpack.c.bf16 %v694, %v692
      %v913 = vpack.c.bf16 %v807, %v805
      %v914 = vpack.c.bf16 %v507, %v584
      %v915 = vpack.c.bf16 %v699, %v697
      %v916 = vpack.c.bf16 %v812, %v810
      %v917 = vpack.c.bf16 %v510, %v585
      %v918 = vpack.c.bf16 %v704, %v702
      %v919 = vpack.c.bf16 %v817, %v815
      %v920 = vpack.c.bf16 %v513, %v586
      %v921 = vpack.c.bf16 %v709, %v707
      %v922 = vpack.c.bf16 %v822, %v820
      %v923 = vpack.c.bf16 %v516, %v587
      %v924 = vpack.c.bf16 %v714, %v712
      %v925 = vpack.c.bf16 %v827, %v825
      %v926 = vpack.c.bf16 %v519, %v588
      %v927 = vpack.c.bf16 %v719, %v717
      %v928 = vpack.c.bf16 %v832, %v830
      %v929 = vpack.c.bf16 %v522, %v589
      %v930 = vpack.c.bf16 %v871, %v869
      %v931 = vpack.c.bf16 %v878, %v876
      %v932 = vld [vmem:[%s3] sm:$0xf]
      %v933 = vld [vmem:[%s3 + $0x4] sm:$0xf]
      %v934 = vld [vmem:[%s3 + $0x8] sm:$0xf]
      %v935 = vld [vmem:[%s3 + $0xc] sm:$0xf]
      %v936 = vld [vmem:[%s3 + $0x10] sm:$0xf]
      %v937 = vld [vmem:[%s3 + $0x14] sm:$0xf]
      %v938 = vld [vmem:[%s3 + $0x18] sm:$0xf]
      %v939 = vld [vmem:[%s3 + $0x1c] sm:$0xf]
      %v940 = vld [vmem:[%s3 + $0x20] sm:$0xf]
      %v941 = vld [vmem:[%s3 + $0x24] sm:$0xf]
      %v942 = vld [vmem:[%s3 + $0x28] sm:$0xf]
      %v943 = vld [vmem:[%s3 + $0x2c] sm:$0xf]
      %v944 = vld [vmem:[%s3 + $0x30] sm:$0xf]
      %v945 = vld [vmem:[%s3 + $0x34] sm:$0xf]
      %v946 = vld [vmem:[%s3 + $0x38] sm:$0xf]
      %v947 = vld [vmem:[%s3 + $0x3c] sm:$0xf]
      %v948 = vld [vmem:[%s3 + $0x40] sm:$0xf]
      %v949 = vld [vmem:[%s3 + $0x44] sm:$0xf]
      %v950 = vld [vmem:[%s3 + $0x48] sm:$0xf]
      %v951 = vld [vmem:[%s3 + $0x4c] sm:$0xf]
      %v952 = vld [vmem:[%s3 + $0x50] sm:$0xf]
      %v953 = vld [vmem:[%s3 + $0x54] sm:$0xf]
      %v954 = vld [vmem:[%s3 + $0x58] sm:$0xf]
      %v955 = vld [vmem:[%s3 + $0x5c] sm:$0xf]
      %v956 = vld [vmem:[%s3 + $0x60] sm:$0xf]
      %v957 = vld [vmem:[%s3 + $0x64] sm:$0xf]
      %v958 = vld [vmem:[%s3 + $0x68] sm:$0xf]
      %v959 = vld [vmem:[%s3 + $0x6c] sm:$0xf]
      %v960 = vld [vmem:[%s3 + $0x70] sm:$0xf]
      %v961 = vld [vmem:[%s3 + $0x74] sm:$0xf]
      %v962 = vld [vmem:[%s3 + $0x78] sm:$0xf]
      %v963 = vld [vmem:[%s3 + $0x7c] sm:$0xf]
      %v964 = vld [vmem:[%s3 + $0x80] sm:$0xf]
      %v965 = vld [vmem:[%s3 + $0x84] sm:$0xf]
      %v966 = vld [vmem:[%s3 + $0x88] sm:$0xf]
      %v967 = vld [vmem:[%s3 + $0x8c] sm:$0xf]
      %v968 = vld [vmem:[%s3 + $0x90] sm:$0xf]
      %v969 = vld [vmem:[%s3 + $0x94] sm:$0xf]
      %v970 = vld [vmem:[%s3 + $0x98] sm:$0xf]
      %v971 = vld [vmem:[%s3 + $0x9c] sm:$0xf]
      %v972 = vld [vmem:[%s3 + $0xa0] sm:$0xf]
      %v973 = vld [vmem:[%s3 + $0xa4] sm:$0xf]
      %v974 = vld [vmem:[%s3 + $0xa8] sm:$0xf]
      %v975 = vld [vmem:[%s3 + $0xac] sm:$0xf]
      %v976 = vld [vmem:[%s3 + $0xb0] sm:$0xf]
      %v977 = vld [vmem:[%s3 + $0xb4] sm:$0xf]
      %v978 = vld [vmem:[%s3 + $0xb8] sm:$0xf]
      %v979 = vld [vmem:[%s3 + $0xbc] sm:$0xf]
      %v980 = vld [vmem:[%s3 + $0xc0] sm:$0xf]
      %v981 = vld [vmem:[%s3 + $0xc4] sm:$0xf]
      %v982 = vld [vmem:[%s3 + $0xc8] sm:$0xf]
      %v983 = vld [vmem:[%s3 + $0xcc] sm:$0xf]
      %v984 = vld [vmem:[%s3 + $0xd0] sm:$0xf]
      %v985 = vld [vmem:[%s3 + $0xd4] sm:$0xf]
      %v986 = vld [vmem:[%s3 + $0xd8] sm:$0xf]
      %v987 = vld [vmem:[%s3 + $0xdc] sm:$0xf]
      %v988 = vld [vmem:[%s3 + $0xe0] sm:$0xf]
      %v989 = vld [vmem:[%s3 + $0xe4] sm:$0xf]
      %v990 = vld [vmem:[%s3 + $0xe8] sm:$0xf]
      %v991 = vld [vmem:[%s3 + $0xec] sm:$0xf]
      %v992 = vld [vmem:[%s3 + $0xf0] sm:$0xf]
      %v993 = vld [vmem:[%s3 + $0xf4] sm:$0xf]
      %v994 = vld [vmem:[%s3 + $0xf8] sm:$0xf]
      %v995 = vld [vmem:[%s3 + $0xfc] sm:$0xf]
      %v996 = vld [vmem:[%s3 + $0x100] sm:$0xf]
      %v997 = vld [vmem:[%s3 + $0x104] sm:$0xf]
      %v998 = vld [vmem:[%s3 + $0x108] sm:$0xf]
      %v999 = vld [vmem:[%s3 + $0x10c] sm:$0xf]
      %v1000 = vld [vmem:[%s3 + $0x110] sm:$0xf]
      %v1001 = vld [vmem:[%s3 + $0x114] sm:$0xf]
      %v1002 = vld [vmem:[%s3 + $0x118] sm:$0xf]
      %v1003 = vld [vmem:[%s3 + $0x11c] sm:$0xf]
      %v1004 = vld [vmem:[%s3 + $0x120] sm:$0xf]
      %v1005 = vld [vmem:[%s3 + $0x124] sm:$0xf]
      %v1006 = vld [vmem:[%s3 + $0x128] sm:$0xf]
      %v1007 = vld [vmem:[%s3 + $0x12c] sm:$0xf]
      %v1008 = vld [vmem:[%s3 + $0x130] sm:$0xf]
      %v1009 = vld [vmem:[%s3 + $0x134] sm:$0xf]
      %v1010 = vld [vmem:[%s3 + $0x138] sm:$0xf]
      %v1011 = vld [vmem:[%s3 + $0x13c] sm:$0xf]
      %v1012 = vld [vmem:[%s3 + $0x140] sm:$0xf]
      %v1013 = vld [vmem:[%s3 + $0x144] sm:$0xf]
      %v1014 = vld [vmem:[%s3 + $0x148] sm:$0xf]
      %v1015 = vld [vmem:[%s3 + $0x14c] sm:$0xf]
      %v1016 = vld [vmem:[%s3 + $0x150] sm:$0xf]
      %v1017 = vld [vmem:[%s3 + $0x154] sm:$0xf]
      %v1018 = vld [vmem:[%s3 + $0x158] sm:$0xf]
      %v1019 = vld [vmem:[%s3 + $0x15c] sm:$0xf]
      %v1020 = vld [vmem:[%s3 + $0x160] sm:$0xf]
      %v1021 = vld [vmem:[%s3 + $0x164] sm:$0xf]
      %v1022 = vld [vmem:[%s3 + $0x168] sm:$0xf]
      %v1023 = vld [vmem:[%s3 + $0x16c] sm:$0xf]
      %v1024 = vld [vmem:[%s3 + $0x170] sm:$0xf]
      %v1025 = vld [vmem:[%s3 + $0x174] sm:$0xf]
      %v1026 = vld [vmem:[%s3 + $0x178] sm:$0xf]
      %v1027 = vld [vmem:[%s3 + $0x17c] sm:$0xf]
      %v1028 = vld [vmem:[%s3 + $0x180] sm:$0xf]
      %v1029 = vld [vmem:[%s3 + $0x184] sm:$0xf]
      %v1030 = vld [vmem:[%s3 + $0x188] sm:$0xf]
      %v1031 = vld [vmem:[%s3 + $0x18c] sm:$0xf]
      %v1032 = vld [vmem:[%s3 + $0x190] sm:$0xf]
      %v1033 = vld [vmem:[%s3 + $0x194] sm:$0xf]
      %v1034 = vld [vmem:[%s3 + $0x198] sm:$0xf]
      %v1035 = vld [vmem:[%s3 + $0x19c] sm:$0xf]
      %v1036 = vld [vmem:[%s3 + $0x1a0] sm:$0xf]
      %v1037 = vld [vmem:[%s3 + $0x1a4] sm:$0xf]
      %v1038 = vld [vmem:[%s3 + $0x1a8] sm:$0xf]
      %v1039 = vld [vmem:[%s3 + $0x1ac] sm:$0xf]
      %v1040 = vld [vmem:[%s3 + $0x1b0] sm:$0xf]
      %v1041 = vld [vmem:[%s3 + $0x1b4] sm:$0xf]
      %v1042 = vld [vmem:[%s3 + $0x1b8] sm:$0xf]
      %v1043 = vld [vmem:[%s3 + $0x1bc] sm:$0xf]
      %v1044 = vld [vmem:[%s3 + $0x1c0] sm:$0xf]
      %v1045 = vld [vmem:[%s3 + $0x1c4] sm:$0xf]
      %v1046 = vld [vmem:[%s3 + $0x1c8] sm:$0xf]
      %v1047 = vld [vmem:[%s3 + $0x1cc] sm:$0xf]
      %v1048 = vld [vmem:[%s3 + $0x1d0] sm:$0xf]
      %v1049 = vld [vmem:[%s3 + $0x1d4] sm:$0xf]
      %v1050 = vld [vmem:[%s3 + $0x1d8] sm:$0xf]
      %v1051 = vld [vmem:[%s3 + $0x1dc] sm:$0xf]
      %v1052 = vld [vmem:[%s3 + $0x1e0] sm:$0xf]
      %v1053 = vld [vmem:[%s3 + $0x1e4] sm:$0xf]
      %v1054 = vld [vmem:[%s3 + $0x1e8] sm:$0xf]
      %v1055 = vld [vmem:[%s3 + $0x1ec] sm:$0xf]
      %v1056 = vld [vmem:[%s3 + $0x1f0] sm:$0xf]
      %v1057 = vld [vmem:[%s3 + $0x1f4] sm:$0xf]
      %v1058 = vld [vmem:[%s3 + $0x1f8] sm:$0xf]
      %v1059 = vld [vmem:[%s3 + $0x1fc] sm:$0xf]
      %v1060 = vld [vmem:[%s3 + $0x200] sm:$0xf]
      %v1061 = vld [vmem:[%s3 + $0x204] sm:$0xf]
      %v1062 = vld [vmem:[%s3 + $0x208] sm:$0xf]
      %v1063 = vld [vmem:[%s3 + $0x20c] sm:$0xf]
      %v1064 = vld [vmem:[%s3 + $0x210] sm:$0xf]
      %v1065 = vld [vmem:[%s3 + $0x214] sm:$0xf]
      %v1066 = vld [vmem:[%s3 + $0x218] sm:$0xf]
      %v1067 = vld [vmem:[%s3 + $0x21c] sm:$0xf]
      %v1068 = vld [vmem:[%s3 + $0x220] sm:$0xf]
      %v1069 = vld [vmem:[%s3 + $0x224] sm:$0xf]
      %v1070 = vld [vmem:[%s3 + $0x228] sm:$0xf]
      %v1071 = vld [vmem:[%s3 + $0x22c] sm:$0xf]
      %v1072 = vld [vmem:[%s3 + $0x230] sm:$0xf]
      %v1073 = vld [vmem:[%s3 + $0x234] sm:$0xf]
      %v1074 = vld [vmem:[%s3 + $0x238] sm:$0xf]
      %v1075 = vld [vmem:[%s3 + $0x23c] sm:$0xf]
      %v1076 = vld [vmem:[%s4] sm:$0x1]
      %v1078 = vlaneseq
      %v1079 = vshrl.u32 %v1078, 7
      %v1080 = vsub.s32 0, %v1079
      %v1081 = vrot.slane %v1076, %v1080
      %v1227 = vunpack.c.l.b16 %v932
      %v1228 = vunpack.c.l.b16 %v933
      %v1229 = vunpack.c.l.b16 %v934
      %v1230 = vunpack.c.l.b16 %v935
      %v1231 = vunpack.c.l.b16 %v936
      %v1232 = vunpack.c.l.b16 %v937
      %v1233 = vunpack.c.l.b16 %v938
      %v1234 = vunpack.c.l.b16 %v939
      %v1235 = vunpack.c.l.b16 %v940
      %v1236 = vunpack.c.l.b16 %v941
      %v1237 = vunpack.c.l.b16 %v942
      %v1238 = vunpack.c.l.b16 %v943
      %v1239 = vunpack.c.l.b16 %v944
      %v1240 = vunpack.c.l.b16 %v945
      %v1241 = vunpack.c.l.b16 %v946
      %v1242 = vunpack.c.l.b16 %v947
      %v1243 = vunpack.c.l.b16 %v948
      %v1244 = vunpack.c.l.b16 %v949
      %v1245 = vunpack.c.l.b16 %v950
      %v1246 = vunpack.c.l.b16 %v951
      %v1247 = vunpack.c.l.b16 %v952
      %v1248 = vunpack.c.l.b16 %v953
      %v1249 = vunpack.c.l.b16 %v954
      %v1250 = vunpack.c.l.b16 %v955
      %v1251 = vunpack.c.l.b16 %v956
      %v1252 = vunpack.c.l.b16 %v957
      %v1253 = vunpack.c.l.b16 %v958
      %v1254 = vunpack.c.l.b16 %v959
      %v1255 = vunpack.c.l.b16 %v960
      %v1256 = vunpack.c.l.b16 %v961
      %v1257 = vunpack.c.l.b16 %v962
      %v1258 = vunpack.c.l.b16 %v963
      %v1259 = vunpack.c.l.b16 %v964
      %v1260 = vunpack.c.l.b16 %v965
      %v1261 = vunpack.c.l.b16 %v966
      %v1262 = vunpack.c.l.b16 %v967
      %v1263 = vunpack.c.l.b16 %v968
      %v1264 = vunpack.c.l.b16 %v969
      %v1265 = vunpack.c.l.b16 %v970
      %v1266 = vunpack.c.l.b16 %v971
      %v1267 = vunpack.c.l.b16 %v972
      %v1268 = vunpack.c.l.b16 %v973
      %v1269 = vunpack.c.l.b16 %v974
      %v1270 = vunpack.c.l.b16 %v975
      %v1271 = vunpack.c.l.b16 %v976
      %v1272 = vunpack.c.l.b16 %v977
      %v1273 = vunpack.c.l.b16 %v978
      %v1274 = vunpack.c.l.b16 %v979
      %v1275 = vunpack.c.l.b16 %v980
      %v1276 = vunpack.c.l.b16 %v981
      %v1277 = vunpack.c.l.b16 %v982
      %v1278 = vunpack.c.l.b16 %v983
      %v1279 = vunpack.c.l.b16 %v984
      %v1280 = vunpack.c.l.b16 %v985
      %v1281 = vunpack.c.l.b16 %v986
      %v1282 = vunpack.c.l.b16 %v987
      %v1283 = vunpack.c.l.b16 %v988
      %v1284 = vunpack.c.l.b16 %v989
      %v1285 = vunpack.c.l.b16 %v990
      %v1286 = vunpack.c.l.b16 %v991
      %v1287 = vunpack.c.l.b16 %v992
      %v1288 = vunpack.c.l.b16 %v993
      %v1289 = vunpack.c.l.b16 %v994
      %v1290 = vunpack.c.l.b16 %v995
      %v1291 = vunpack.c.l.b16 %v996
      %v1292 = vunpack.c.l.b16 %v997
      %v1293 = vunpack.c.l.b16 %v998
      %v1294 = vunpack.c.l.b16 %v999
      %v1295 = vunpack.c.l.b16 %v1000
      %v1296 = vunpack.c.l.b16 %v1001
      %v1297 = vunpack.c.l.b16 %v1002
      %v1298 = vunpack.c.l.b16 %v1003
      %v1299 = vunpack.c.l.b16 %v1004
      %v1300 = vunpack.c.l.b16 %v1005
      %v1301 = vunpack.c.l.b16 %v1006
      %v1302 = vunpack.c.l.b16 %v1007
      %v1303 = vunpack.c.l.b16 %v1008
      %v1304 = vunpack.c.l.b16 %v1009
      %v1305 = vunpack.c.l.b16 %v1010
      %v1306 = vunpack.c.l.b16 %v1011
      %v1307 = vunpack.c.l.b16 %v1012
      %v1308 = vunpack.c.l.b16 %v1013
      %v1309 = vunpack.c.l.b16 %v1014
      %v1310 = vunpack.c.l.b16 %v1015
      %v1311 = vunpack.c.l.b16 %v1016
      %v1312 = vunpack.c.l.b16 %v1017
      %v1313 = vunpack.c.l.b16 %v1018
      %v1314 = vunpack.c.l.b16 %v1019
      %v1315 = vunpack.c.l.b16 %v1020
      %v1316 = vunpack.c.l.b16 %v1021
      %v1317 = vunpack.c.l.b16 %v1022
      %v1318 = vunpack.c.l.b16 %v1023
      %v1319 = vunpack.c.l.b16 %v1024
      %v1320 = vunpack.c.l.b16 %v1025
      %v1321 = vunpack.c.l.b16 %v1026
      %v1322 = vunpack.c.l.b16 %v1027
      %v1323 = vunpack.c.l.b16 %v1028
      %v1324 = vunpack.c.l.b16 %v1029
      %v1325 = vunpack.c.l.b16 %v1030
      %v1326 = vunpack.c.l.b16 %v1031
      %v1327 = vunpack.c.l.b16 %v1032
      %v1328 = vunpack.c.l.b16 %v1033
      %v1329 = vunpack.c.l.b16 %v1034
      %v1330 = vunpack.c.l.b16 %v1035
      %v1331 = vunpack.c.l.b16 %v1036
      %v1332 = vunpack.c.l.b16 %v1037
      %v1333 = vunpack.c.l.b16 %v1038
      %v1334 = vunpack.c.l.b16 %v1039
      %v1335 = vunpack.c.l.b16 %v1040
      %v1336 = vunpack.c.l.b16 %v1041
      %v1337 = vunpack.c.l.b16 %v1042
      %v1338 = vunpack.c.l.b16 %v1043
      %v1339 = vunpack.c.l.b16 %v1044
      %v1340 = vunpack.c.l.b16 %v1045
      %v1341 = vunpack.c.l.b16 %v1046
      %v1342 = vunpack.c.l.b16 %v1047
      %v1343 = vunpack.c.l.b16 %v1048
      %v1344 = vunpack.c.l.b16 %v1049
      %v1345 = vunpack.c.l.b16 %v1050
      %v1346 = vunpack.c.l.b16 %v1051
      %v1347 = vunpack.c.l.b16 %v1052
      %v1348 = vunpack.c.l.b16 %v1053
      %v1349 = vunpack.c.l.b16 %v1054
      %v1350 = vunpack.c.l.b16 %v1055
      %v1351 = vunpack.c.l.b16 %v1056
      %v1352 = vunpack.c.l.b16 %v1057
      %v1353 = vunpack.c.l.b16 %v1058
      %v1354 = vunpack.c.l.b16 %v1059
      %v1355 = vunpack.c.l.b16 %v1060
      %v1356 = vunpack.c.l.b16 %v1061
      %v1357 = vunpack.c.l.b16 %v1062
      %v1358 = vunpack.c.l.b16 %v1063
      %v1359 = vunpack.c.l.b16 %v1064
      %v1360 = vunpack.c.l.b16 %v1065
      %v1361 = vunpack.c.l.b16 %v1066
      %v1362 = vunpack.c.l.b16 %v1067
      %v1363 = vunpack.c.l.b16 %v1068
      %v1364 = vunpack.c.l.b16 %v1069
      %v1365 = vunpack.c.l.b16 %v1070
      %v1366 = vunpack.c.l.b16 %v1071
      %v1367 = vunpack.c.l.b16 %v1072
      %v1368 = vunpack.c.l.b16 %v1073
      %v1369 = vunpack.c.l.b16 %v1074
      %v1370 = vunpack.c.l.b16 %v1075
      %v1371 = vpack.c.b16 %v1228, %v1227
      %v1372 = vpack.c.b16 %v1230, %v1229
      %v1373 = vpack.c.b16 %v1232, %v1231
      %v1374 = vpack.c.b16 %v1234, %v1233
      %v1375 = vpack.c.b16 %v1236, %v1235
      %v1376 = vpack.c.b16 %v1238, %v1237
      %v1377 = vpack.c.b16 %v1240, %v1239
      %v1378 = vpack.c.b16 %v1242, %v1241
      %v1379 = vpack.c.b16 %v1244, %v1243
      %v1380 = vpack.c.b16 %v1246, %v1245
      %v1381 = vpack.c.b16 %v1248, %v1247
      %v1382 = vpack.c.b16 %v1250, %v1249
      %v1383 = vpack.c.b16 %v1252, %v1251
      %v1384 = vpack.c.b16 %v1254, %v1253
      %v1385 = vpack.c.b16 %v1256, %v1255
      %v1386 = vpack.c.b16 %v1258, %v1257
      %v1387 = vpack.c.b16 %v1260, %v1259
      %v1388 = vpack.c.b16 %v1262, %v1261
      %v1389 = vpack.c.b16 %v1264, %v1263
      %v1390 = vpack.c.b16 %v1266, %v1265
      %v1391 = vpack.c.b16 %v1268, %v1267
      %v1392 = vpack.c.b16 %v1270, %v1269
      %v1393 = vpack.c.b16 %v1272, %v1271
      %v1394 = vpack.c.b16 %v1274, %v1273
      %v1395 = vpack.c.b16 %v1276, %v1275
      %v1396 = vpack.c.b16 %v1278, %v1277
      %v1397 = vpack.c.b16 %v1280, %v1279
      %v1398 = vpack.c.b16 %v1282, %v1281
      %v1399 = vpack.c.b16 %v1284, %v1283
      %v1400 = vpack.c.b16 %v1286, %v1285
      %v1401 = vpack.c.b16 %v1288, %v1287
      %v1402 = vpack.c.b16 %v1290, %v1289
      %v1403 = vpack.c.b16 %v1292, %v1291
      %v1404 = vpack.c.b16 %v1294, %v1293
      %v1405 = vpack.c.b16 %v1296, %v1295
      %v1406 = vpack.c.b16 %v1298, %v1297
      %v1407 = vpack.c.b16 %v1300, %v1299
      %v1408 = vpack.c.b16 %v1302, %v1301
      %v1409 = vpack.c.b16 %v1304, %v1303
      %v1410 = vpack.c.b16 %v1306, %v1305
      %v1411 = vpack.c.b16 %v1308, %v1307
      %v1412 = vpack.c.b16 %v1310, %v1309
      %v1413 = vpack.c.b16 %v1312, %v1311
      %v1414 = vpack.c.b16 %v1314, %v1313
      %v1415 = vpack.c.b16 %v1316, %v1315
      %v1416 = vpack.c.b16 %v1318, %v1317
      %v1417 = vpack.c.b16 %v1320, %v1319
      %v1418 = vpack.c.b16 %v1322, %v1321
      %v1419 = vpack.c.b16 %v1324, %v1323
      %v1420 = vpack.c.b16 %v1326, %v1325
      %v1421 = vpack.c.b16 %v1328, %v1327
      %v1422 = vpack.c.b16 %v1330, %v1329
      %v1423 = vpack.c.b16 %v1332, %v1331
      %v1424 = vpack.c.b16 %v1334, %v1333
      %v1425 = vpack.c.b16 %v1336, %v1335
      %v1426 = vpack.c.b16 %v1338, %v1337
      %v1427 = vpack.c.b16 %v1340, %v1339
      %v1428 = vpack.c.b16 %v1342, %v1341
      %v1429 = vpack.c.b16 %v1344, %v1343
      %v1430 = vpack.c.b16 %v1346, %v1345
      %v1431 = vpack.c.b16 %v1348, %v1347
      %v1432 = vpack.c.b16 %v1350, %v1349
      %v1433 = vpack.c.b16 %v1352, %v1351
      %v1434 = vpack.c.b16 %v1354, %v1353
      %v1435 = vpack.c.b16 %v1356, %v1355
      %v1436 = vpack.c.b16 %v1358, %v1357
      %v1437 = vpack.c.b16 %v1360, %v1359
      %v1438 = vpack.c.b16 %v1362, %v1361
      %v1439 = vpack.c.b16 %v1364, %v1363
      %v1440 = vpack.c.b16 %v1366, %v1365
      %v1441 = vpack.c.b16 %v1368, %v1367
      %v1442 = vpack.c.b16 %v1370, %v1369
      %1515 = vmatprep.subr.bf16.mxu0 0
      %1516 = vmatpush1.bf16.msra.mxu0 %v1371
      %1517 = vmatprep.subr.bf16.mxu0 0
      %1518 = vmatpush1.bf16.msra.mxu0 %v1372
      %1519 = vmatprep.subr.bf16.mxu0 0
      %1520 = vmatpush1.bf16.msra.mxu0 %v1373
      %1521 = vmatprep.subr.bf16.mxu0 0
      %1522 = vmatpush1.bf16.msra.mxu0 %v1374
      %1523 = vmatprep.subr.bf16.mxu0 0
      %1524 = vmatpush1.bf16.msra.mxu0 %v1375
      %1525 = vmatprep.subr.bf16.mxu0 0
      %1526 = vmatpush1.bf16.msra.mxu0 %v1376
      %1527 = vmatprep.subr.bf16.mxu0 0
      %1528 = vmatpush1.bf16.msra.mxu0 %v1377
      %1529 = vmatprep.subr.bf16.mxu0 0
      %1530 = vmatpush1.bf16.msra.mxu0 %v1378
      %1531 = vmatprep.subr.bf16.mxu0 0
      %1532 = vmatpush1.bf16.msra.mxu0 %v1379
      %1533 = vmatprep.subr.bf16.mxu0 0
      %1534 = vmatpush1.bf16.msra.mxu0 %v1380
      %1535 = vmatprep.subr.bf16.mxu0 0
      %1536 = vmatpush1.bf16.msra.mxu0 %v1381
      %1537 = vmatprep.subr.bf16.mxu0 0
      %1538 = vmatpush1.bf16.msra.mxu0 %v1382
      %1539 = vmatprep.subr.bf16.mxu0 0
      %1540 = vmatpush1.bf16.msra.mxu0 %v1383
      %1541 = vmatprep.subr.bf16.mxu0 0
      %1542 = vmatpush1.bf16.msra.mxu0 %v1384
      %1543 = vmatprep.subr.bf16.mxu0 0
      %1544 = vmatpush1.bf16.msra.mxu0 %v1385
      %1545 = vmatprep.subr.bf16.mxu0 0
      %1546 = vmatpush1.bf16.msra.mxu0 %v1386
      %1547 = vmatprep.mubr.bf16.mxu0 %v882
      %1548 = vmatmul.mubr.bf16.gmra.mrb[0].mxu0 %v881
      %v1549 = vpop.f32.mrb[0].mxu0
      %v1550 = vadd.f32 %v1081, %v1549
      %v1551 = vpop.f32.mrb[0].mxu0
      %v1552 = vpop.f32.mrb[0].mxu0
      %v1553 = vadd.f32 %v1081, %v1552
      %v1554 = vpop.f32.mrb[0].mxu0
      %1555 = vmatprep.mubr.bf16.mxu0 %v885
      %1556 = vmatmul.mubr.bf16.gmra.mrb[0].mxu0 %v884
      %v1557 = vpop.f32.mrb[0].mxu0
      %v1558 = vadd.f32 %v1081, %v1557
      %v1559 = vpop.f32.mrb[0].mxu0
      %v1560 = vpop.f32.mrb[0].mxu0
      %v1561 = vadd.f32 %v1081, %v1560
      %v1562 = vpop.f32.mrb[0].mxu0
      %1563 = vmatprep.mubr.bf16.mxu0 %v888
      %1564 = vmatmul.mubr.bf16.gmra.mrb[0].mxu0 %v887
      %v1565 = vpop.f32.mrb[0].mxu0
      %v1566 = vadd.f32 %v1081, %v1565
      %v1567 = vpop.f32.mrb[0].mxu0
      %v1568 = vpop.f32.mrb[0].mxu0
      %v1569 = vadd.f32 %v1081, %v1568
      %v1570 = vpop.f32.mrb[0].mxu0
      %1571 = vmatprep.mubr.bf16.mxu0 %v891
      %1572 = vmatmul.mubr.bf16.gmra.mrb[0].mxu0 %v890
      %v1573 = vpop.f32.mrb[0].mxu0
      %v1574 = vadd.f32 %v1081, %v1573
      %v1575 = vpop.f32.mrb[0].mxu0
      %v1576 = vpop.f32.mrb[0].mxu0
      %v1577 = vadd.f32 %v1081, %v1576
      %v1578 = vpop.f32.mrb[0].mxu0
      %1579 = vmatprep.mubr.bf16.mxu0 %v894
      %1580 = vmatmul.mubr.bf16.gmra.mrb[0].mxu0 %v893
      %v1581 = vpop.f32.mrb[0].mxu0
      %v1582 = vadd.f32 %v1081, %v1581
      %v1583 = vpop.f32.mrb[0].mxu0
      %v1584 = vpop.f32.mrb[0].mxu0
      %v1585 = vadd.f32 %v1081, %v1584
      %v1586 = vpop.f32.mrb[0].mxu0
      %1587 = vmatprep.mubr.bf16.mxu0 %v897
      %1588 = vmatmul.mubr.bf16.gmra.mrb[0].mxu0 %v896
      %v1589 = vpop.f32.mrb[0].mxu0
      %v1590 = vadd.f32 %v1081, %v1589
      %v1591 = vpop.f32.mrb[0].mxu0
      %v1592 = vpop.f32.mrb[0].mxu0
      %v1593 = vadd.f32 %v1081, %v1592
      %v1594 = vpop.f32.mrb[0].mxu0
      %1595 = vmatprep.mubr.bf16.mxu0 %v900
      %1596 = vmatmul.mubr.bf16.gmra.mrb[0].mxu0 %v899
      %v1597 = vpop.f32.mrb[0].mxu0
      %v1598 = vadd.f32 %v1081, %v1597
      %v1599 = vpop.f32.mrb[0].mxu0
      %v1600 = vpop.f32.mrb[0].mxu0
      %v1601 = vadd.f32 %v1081, %v1600
      %v1602 = vpop.f32.mrb[0].mxu0
      %1603 = vmatprep.mubr.bf16.mxu0 %v903
      %1604 = vmatmul.mubr.bf16.gmra.mrb[0].mxu0 %v902
      %v1605 = vpop.f32.mrb[0].mxu0
      %v1606 = vadd.f32 %v1081, %v1605
      %v1607 = vpop.f32.mrb[0].mxu0
      %v1608 = vpop.f32.mrb[0].mxu0
      %v1609 = vadd.f32 %v1081, %v1608
      %v1610 = vpop.f32.mrb[0].mxu0
      %1611 = vmatprep.mubr.bf16.mxu0 %v906
      %1612 = vmatmul.mubr.bf16.gmra.mrb[0].mxu0 %v905
      %v1613 = vpop.f32.mrb[0].mxu0
      %v1614 = vadd.f32 %v1081, %v1613
      %v1615 = vpop.f32.mrb[0].mxu0
      %v1616 = vpop.f32.mrb[0].mxu0
      %v1617 = vadd.f32 %v1081, %v1616
      %v1618 = vpop.f32.mrb[0].mxu0
      %1619 = vmatprep.mubr.bf16.mxu0 %v909
      %1620 = vmatmul.mubr.bf16.gmra.mrb[0].mxu0 %v908
      %v1621 = vpop.f32.mrb[0].mxu0
      %v1622 = vadd.f32 %v1081, %v1621
      %v1623 = vpop.f32.mrb[0].mxu0
      %v1624 = vpop.f32.mrb[0].mxu0
      %v1625 = vadd.f32 %v1081, %v1624
      %v1626 = vpop.f32.mrb[0].mxu0
      %1627 = vmatprep.mubr.bf16.mxu0 %v912
      %1628 = vmatmul.mubr.bf16.gmra.mrb[0].mxu0 %v911
      %v1629 = vpop.f32.mrb[0].mxu0
      %v1630 = vadd.f32 %v1081, %v1629
      %v1631 = vpop.f32.mrb[0].mxu0
      %v1632 = vpop.f32.mrb[0].mxu0
      %v1633 = vadd.f32 %v1081, %v1632
      %v1634 = vpop.f32.mrb[0].mxu0
      %1635 = vmatprep.mubr.bf16.mxu0 %v915
      %1636 = vmatmul.mubr.bf16.gmra.mrb[0].mxu0 %v914
      %v1637 = vpop.f32.mrb[0].mxu0
      %v1638 = vadd.f32 %v1081, %v1637
      %v1639 = vpop.f32.mrb[0].mxu0
      %v1640 = vpop.f32.mrb[0].mxu0
      %v1641 = vadd.f32 %v1081, %v1640
      %v1642 = vpop.f32.mrb[0].mxu0
      %1643 = vmatprep.mubr.bf16.mxu0 %v918
      %1644 = vmatmul.mubr.bf16.gmra.mrb[0].mxu0 %v917
      %v1645 = vpop.f32.mrb[0].mxu0
      %v1646 = vadd.f32 %v1081, %v1645
      %v1647 = vpop.f32.mrb[0].mxu0
      %v1648 = vpop.f32.mrb[0].mxu0
      %v1649 = vadd.f32 %v1081, %v1648
      %v1650 = vpop.f32.mrb[0].mxu0
      %1651 = vmatprep.mubr.bf16.mxu0 %v921
      %1652 = vmatmul.mubr.bf16.gmra.mrb[0].mxu0 %v920
      %v1653 = vpop.f32.mrb[0].mxu0
      %v1654 = vadd.f32 %v1081, %v1653
      %v1655 = vpop.f32.mrb[0].mxu0
      %v1656 = vpop.f32.mrb[0].mxu0
      %v1657 = vadd.f32 %v1081, %v1656
      %v1658 = vpop.f32.mrb[0].mxu0
      %1659 = vmatprep.mubr.bf16.mxu0 %v924
      %1660 = vmatmul.mubr.bf16.gmra.mrb[0].mxu0 %v923
      %v1661 = vpop.f32.mrb[0].mxu0
      %v1662 = vadd.f32 %v1081, %v1661
      %v1663 = vpop.f32.mrb[0].mxu0
      %v1664 = vpop.f32.mrb[0].mxu0
      %v1665 = vadd.f32 %v1081, %v1664
      %v1666 = vpop.f32.mrb[0].mxu0
      %1667 = vmatprep.mubr.bf16.mxu0 %v927
      %1668 = vmatmul.mubr.bf16.gmra.mrb[0].mxu0 %v926
      %v1669 = vpop.f32.mrb[0].mxu0
      %v1670 = vadd.f32 %v1081, %v1669
      %v1671 = vpop.f32.mrb[0].mxu0
      %v1672 = vpop.f32.mrb[0].mxu0
      %v1673 = vadd.f32 %v1081, %v1672
      %v1674 = vpop.f32.mrb[0].mxu0
      %1675 = vdwg.mxu0
      %1676 = vmatprep.subr.bf16.mxu0 0
      %1677 = vmatpush1.bf16.msra.mxu0 %v1387
      %1678 = vmatprep.subr.bf16.mxu0 0
      %1679 = vmatpush1.bf16.msra.mxu0 %v1388
      %1680 = vmatprep.subr.bf16.mxu0 0
      %1681 = vmatpush1.bf16.msra.mxu0 %v1389
      %1682 = vmatprep.subr.bf16.mxu0 0
      %1683 = vmatpush1.bf16.msra.mxu0 %v1390
      %1684 = vmatprep.subr.bf16.mxu0 0
      %1685 = vmatpush1.bf16.msra.mxu0 %v1391
      %1686 = vmatprep.subr.bf16.mxu0 0
      %1687 = vmatpush1.bf16.msra.mxu0 %v1392
      %1688 = vmatprep.subr.bf16.mxu0 0
      %1689 = vmatpush1.bf16.msra.mxu0 %v1393
      %1690 = vmatprep.subr.bf16.mxu0 0
      %1691 = vmatpush1.bf16.msra.mxu0 %v1394
      %1692 = vmatprep.subr.bf16.mxu0 0
      %1693 = vmatpush1.bf16.msra.mxu0 %v1395
      %1694 = vmatprep.subr.bf16.mxu0 0
      %1695 = vmatpush1.bf16.msra.mxu0 %v1396
      %1696 = vmatprep.subr.bf16.mxu0 0
      %1697 = vmatpush1.bf16.msra.mxu0 %v1397
      %1698 = vmatprep.subr.bf16.mxu0 0
      %1699 = vmatpush1.bf16.msra.mxu0 %v1398
      %1700 = vmatprep.subr.bf16.mxu0 0
      %1701 = vmatpush1.bf16.msra.mxu0 %v1399
      %1702 = vmatprep.subr.bf16.mxu0 0
      %1703 = vmatpush1.bf16.msra.mxu0 %v1400
      %1704 = vmatprep.subr.bf16.mxu0 0
      %1705 = vmatpush1.bf16.msra.mxu0 %v1401
      %1706 = vmatprep.subr.bf16.mxu0 0
      %1707 = vmatpush1.bf16.msra.mxu0 %v1402
      %1708 = vmatprep.mubr.bf16.mxu0 %v884
      %1709 = vmatmul.mubr.bf16.gmra.mrb[0].mxu0 %v883
      %v1710 = vpop.f32.mrb[0].mxu0
      %v1711 = vadd.f32 %v1550, %v1710
      %v1712 = vpop.f32.mrb[0].mxu0
      %v1713 = vpop.f32.mrb[0].mxu0
      %v1714 = vadd.f32 %v1553, %v1713
      %v1715 = vpop.f32.mrb[0].mxu0
      %1716 = vmatprep.mubr.bf16.mxu0 %v887
      %1717 = vmatmul.mubr.bf16.gmra.mrb[0].mxu0 %v886
      %v1718 = vpop.f32.mrb[0].mxu0
      %v1719 = vadd.f32 %v1558, %v1718
      %v1720 = vpop.f32.mrb[0].mxu0
      %v1721 = vpop.f32.mrb[0].mxu0
      %v1722 = vadd.f32 %v1561, %v1721
      %v1723 = vpop.f32.mrb[0].mxu0
      %1724 = vmatprep.mubr.bf16.mxu0 %v890
      %1725 = vmatmul.mubr.bf16.gmra.mrb[0].mxu0 %v889
      %v1726 = vpop.f32.mrb[0].mxu0
      %v1727 = vadd.f32 %v1566, %v1726
      %v1728 = vpop.f32.mrb[0].mxu0
      %v1729 = vpop.f32.mrb[0].mxu0
      %v1730 = vadd.f32 %v1569, %v1729
      %v1731 = vpop.f32.mrb[0].mxu0
      %1732 = vmatprep.mubr.bf16.mxu0 %v893
      %1733 = vmatmul.mubr.bf16.gmra.mrb[0].mxu0 %v892
      %v1734 = vpop.f32.mrb[0].mxu0
      %v1735 = vadd.f32 %v1574, %v1734
      %v1736 = vpop.f32.mrb[0].mxu0
      %v1737 = vpop.f32.mrb[0].mxu0
      %v1738 = vadd.f32 %v1577, %v1737
      %v1739 = vpop.f32.mrb[0].mxu0
      %1740 = vmatprep.mubr.bf16.mxu0 %v896
      %1741 = vmatmul.mubr.bf16.gmra.mrb[0].mxu0 %v895
      %v1742 = vpop.f32.mrb[0].mxu0
      %v1743 = vadd.f32 %v1582, %v1742
      %v1744 = vpop.f32.mrb[0].mxu0
      %v1745 = vpop.f32.mrb[0].mxu0
      %v1746 = vadd.f32 %v1585, %v1745
      %v1747 = vpop.f32.mrb[0].mxu0
      %1748 = vmatprep.mubr.bf16.mxu0 %v899
      %1749 = vmatmul.mubr.bf16.gmra.mrb[0].mxu0 %v898
      %v1750 = vpop.f32.mrb[0].mxu0
      %v1751 = vadd.f32 %v1590, %v1750
      %v1752 = vpop.f32.mrb[0].mxu0
      %v1753 = vpop.f32.mrb[0].mxu0
      %v1754 = vadd.f32 %v1593, %v1753
      %v1755 = vpop.f32.mrb[0].mxu0
      %1756 = vmatprep.mubr.bf16.mxu0 %v902
      %1757 = vmatmul.mubr.bf16.gmra.mrb[0].mxu0 %v901
      %v1758 = vpop.f32.mrb[0].mxu0
      %v1759 = vadd.f32 %v1598, %v1758
      %v1760 = vpop.f32.mrb[0].mxu0
      %v1761 = vpop.f32.mrb[0].mxu0
      %v1762 = vadd.f32 %v1601, %v1761
      %v1763 = vpop.f32.mrb[0].mxu0
      %1764 = vmatprep.mubr.bf16.mxu0 %v905
      %1765 = vmatmul.mubr.bf16.gmra.mrb[0].mxu0 %v904
      %v1766 = vpop.f32.mrb[0].mxu0
      %v1767 = vadd.f32 %v1606, %v1766
      %v1768 = vpop.f32.mrb[0].mxu0
      %v1769 = vpop.f32.mrb[0].mxu0
      %v1770 = vadd.f32 %v1609, %v1769
      %v1771 = vpop.f32.mrb[0].mxu0
      %1772 = vmatprep.mubr.bf16.mxu0 %v908
      %1773 = vmatmul.mubr.bf16.gmra.mrb[0].mxu0 %v907
      %v1774 = vpop.f32.mrb[0].mxu0
      %v1775 = vadd.f32 %v1614, %v1774
      %v1776 = vpop.f32.mrb[0].mxu0
      %v1777 = vpop.f32.mrb[0].mxu0
      %v1778 = vadd.f32 %v1617, %v1777
      %v1779 = vpop.f32.mrb[0].mxu0
      %1780 = vmatprep.mubr.bf16.mxu0 %v911
      %1781 = vmatmul.mubr.bf16.gmra.mrb[0].mxu0 %v910
      %v1782 = vpop.f32.mrb[0].mxu0
      %v1783 = vadd.f32 %v1622, %v1782
      %v1784 = vpop.f32.mrb[0].mxu0
      %v1785 = vpop.f32.mrb[0].mxu0
      %v1786 = vadd.f32 %v1625, %v1785
      %v1787 = vpop.f32.mrb[0].mxu0
      %1788 = vmatprep.mubr.bf16.mxu0 %v914
      %1789 = vmatmul.mubr.bf16.gmra.mrb[0].mxu0 %v913
      %v1790 = vpop.f32.mrb[0].mxu0
      %v1791 = vadd.f32 %v1630, %v1790
      %v1792 = vpop.f32.mrb[0].mxu0
      %v1793 = vpop.f32.mrb[0].mxu0
      %v1794 = vadd.f32 %v1633, %v1793
      %v1795 = vpop.f32.mrb[0].mxu0
      %1796 = vmatprep.mubr.bf16.mxu0 %v917
      %1797 = vmatmul.mubr.bf16.gmra.mrb[0].mxu0 %v916
      %v1798 = vpop.f32.mrb[0].mxu0
      %v1799 = vadd.f32 %v1638, %v1798
      %v1800 = vpop.f32.mrb[0].mxu0
      %v1801 = vpop.f32.mrb[0].mxu0
      %v1802 = vadd.f32 %v1641, %v1801
      %v1803 = vpop.f32.mrb[0].mxu0
      %1804 = vmatprep.mubr.bf16.mxu0 %v920
      %1805 = vmatmul.mubr.bf16.gmra.mrb[0].mxu0 %v919
      %v1806 = vpop.f32.mrb[0].mxu0
      %v1807 = vadd.f32 %v1646, %v1806
      %v1808 = vpop.f32.mrb[0].mxu0
      %v1809 = vpop.f32.mrb[0].mxu0
      %v1810 = vadd.f32 %v1649, %v1809
      %v1811 = vpop.f32.mrb[0].mxu0
      %1812 = vmatprep.mubr.bf16.mxu0 %v923
      %1813 = vmatmul.mubr.bf16.gmra.mrb[0].mxu0 %v922
      %v1814 = vpop.f32.mrb[0].mxu0
      %v1815 = vadd.f32 %v1654, %v1814
      %v1816 = vpop.f32.mrb[0].mxu0
      %v1817 = vpop.f32.mrb[0].mxu0
      %v1818 = vadd.f32 %v1657, %v1817
      %v1819 = vpop.f32.mrb[0].mxu0
      %1820 = vmatprep.mubr.bf16.mxu0 %v926
      %1821 = vmatmul.mubr.bf16.gmra.mrb[0].mxu0 %v925
      %v1822 = vpop.f32.mrb[0].mxu0
      %v1823 = vadd.f32 %v1662, %v1822
      %v1824 = vpop.f32.mrb[0].mxu0
      %v1825 = vpop.f32.mrb[0].mxu0
      %v1826 = vadd.f32 %v1665, %v1825
      %v1827 = vpop.f32.mrb[0].mxu0
      %1828 = vmatprep.mubr.bf16.mxu0 %v929
      %1829 = vmatmul.mubr.bf16.gmra.mrb[0].mxu0 %v928
      %v1830 = vpop.f32.mrb[0].mxu0
      %v1831 = vadd.f32 %v1670, %v1830
      %v1832 = vpop.f32.mrb[0].mxu0
      %v1833 = vpop.f32.mrb[0].mxu0
      %v1834 = vadd.f32 %v1673, %v1833
      %v1835 = vpop.f32.mrb[0].mxu0
      %1836 = vdwg.mxu0
      %1837 = vmatprep.subr.bf16.mxu0 0
      %1838 = vmatpush1.bf16.msra.mxu0 %v1403
      %1839 = vmatprep.subr.bf16.mxu0 0
      %1840 = vmatpush1.bf16.msra.mxu0 %v1404
      %1841 = vmatprep.subr.bf16.mxu0 0
      %1842 = vmatpush1.bf16.msra.mxu0 %v1405
      %1843 = vmatprep.subr.bf16.mxu0 0
      %1844 = vmatpush1.bf16.msra.mxu0 %v1406
      %1845 = vmatprep.subr.bf16.mxu0 0
      %1846 = vmatpush1.bf16.msra.mxu0 %v1407
      %1847 = vmatprep.subr.bf16.mxu0 0
      %1848 = vmatpush1.bf16.msra.mxu0 %v1408
      %1849 = vmatprep.subr.bf16.mxu0 0
      %1850 = vmatpush1.bf16.msra.mxu0 %v1409
      %1851 = vmatprep.subr.bf16.mxu0 0
      %1852 = vmatpush1.bf16.msra.mxu0 %v1410
      %1853 = vmatprep.subr.bf16.mxu0 0
      %1854 = vmatpush1.bf16.msra.mxu0 %v1411
      %1855 = vmatprep.subr.bf16.mxu0 0
      %1856 = vmatpush1.bf16.msra.mxu0 %v1412
      %1857 = vmatprep.subr.bf16.mxu0 0
      %1858 = vmatpush1.bf16.msra.mxu0 %v1413
      %1859 = vmatprep.subr.bf16.mxu0 0
      %1860 = vmatpush1.bf16.msra.mxu0 %v1414
      %1861 = vmatprep.subr.bf16.mxu0 0
      %1862 = vmatpush1.bf16.msra.mxu0 %v1415
      %1863 = vmatprep.subr.bf16.mxu0 0
      %1864 = vmatpush1.bf16.msra.mxu0 %v1416
      %1865 = vmatprep.subr.bf16.mxu0 0
      %1866 = vmatpush1.bf16.msra.mxu0 %v1417
      %1867 = vmatprep.subr.bf16.mxu0 0
      %1868 = vmatpush1.bf16.msra.mxu0 %v1418
      %1869 = vmatprep.mubr.bf16.mxu0 %v886
      %1870 = vmatmul.mubr.bf16.gmra.mrb[0].mxu0 %v885
      %v1871 = vpop.f32.mrb[0].mxu0
      %v1872 = vadd.f32 %v1711, %v1871
      %v1873 = vpop.f32.mrb[0].mxu0
      %v1874 = vpop.f32.mrb[0].mxu0
      %v1875 = vadd.f32 %v1714, %v1874
      %v1876 = vpop.f32.mrb[0].mxu0
      %1877 = vmatprep.mubr.bf16.mxu0 %v889
      %1878 = vmatmul.mubr.bf16.gmra.mrb[0].mxu0 %v888
      %v1879 = vpop.f32.mrb[0].mxu0
      %v1880 = vadd.f32 %v1719, %v1879
      %v1881 = vpop.f32.mrb[0].mxu0
      %v1882 = vpop.f32.mrb[0].mxu0
      %v1883 = vadd.f32 %v1722, %v1882
      %v1884 = vpop.f32.mrb[0].mxu0
      %1885 = vmatprep.mubr.bf16.mxu0 %v892
      %1886 = vmatmul.mubr.bf16.gmra.mrb[0].mxu0 %v891
      %v1887 = vpop.f32.mrb[0].mxu0
      %v1888 = vadd.f32 %v1727, %v1887
      %v1889 = vpop.f32.mrb[0].mxu0
      %v1890 = vpop.f32.mrb[0].mxu0
      %v1891 = vadd.f32 %v1730, %v1890
      %v1892 = vpop.f32.mrb[0].mxu0
      %1893 = vmatprep.mubr.bf16.mxu0 %v895
      %1894 = vmatmul.mubr.bf16.gmra.mrb[0].mxu0 %v894
      %v1895 = vpop.f32.mrb[0].mxu0
      %v1896 = vadd.f32 %v1735, %v1895
      %v1897 = vpop.f32.mrb[0].mxu0
      %v1898 = vpop.f32.mrb[0].mxu0
      %v1899 = vadd.f32 %v1738, %v1898
      %v1900 = vpop.f32.mrb[0].mxu0
      %1901 = vmatprep.mubr.bf16.mxu0 %v898
      %1902 = vmatmul.mubr.bf16.gmra.mrb[0].mxu0 %v897
      %v1903 = vpop.f32.mrb[0].mxu0
      %v1904 = vadd.f32 %v1743, %v1903
      %v1905 = vpop.f32.mrb[0].mxu0
      %v1906 = vpop.f32.mrb[0].mxu0
      %v1907 = vadd.f32 %v1746, %v1906
      %v1908 = vpop.f32.mrb[0].mxu0
      %1909 = vmatprep.mubr.bf16.mxu0 %v901
      %1910 = vmatmul.mubr.bf16.gmra.mrb[0].mxu0 %v900
      %v1911 = vpop.f32.mrb[0].mxu0
      %v1912 = vadd.f32 %v1751, %v1911
      %v1913 = vpop.f32.mrb[0].mxu0
      %v1914 = vpop.f32.mrb[0].mxu0
      %v1915 = vadd.f32 %v1754, %v1914
      %v1916 = vpop.f32.mrb[0].mxu0
      %1917 = vmatprep.mubr.bf16.mxu0 %v904
      %1918 = vmatmul.mubr.bf16.gmra.mrb[0].mxu0 %v903
      %v1919 = vpop.f32.mrb[0].mxu0
      %v1920 = vadd.f32 %v1759, %v1919
      %v1921 = vpop.f32.mrb[0].mxu0
      %v1922 = vpop.f32.mrb[0].mxu0
      %v1923 = vadd.f32 %v1762, %v1922
      %v1924 = vpop.f32.mrb[0].mxu0
      %1925 = vmatprep.mubr.bf16.mxu0 %v907
      %1926 = vmatmul.mubr.bf16.gmra.mrb[0].mxu0 %v906
      %v1927 = vpop.f32.mrb[0].mxu0
      %v1928 = vadd.f32 %v1767, %v1927
      %v1929 = vpop.f32.mrb[0].mxu0
      %v1930 = vpop.f32.mrb[0].mxu0
      %v1931 = vadd.f32 %v1770, %v1930
      %v1932 = vpop.f32.mrb[0].mxu0
      %1933 = vmatprep.mubr.bf16.mxu0 %v910
      %1934 = vmatmul.mubr.bf16.gmra.mrb[0].mxu0 %v909
      %v1935 = vpop.f32.mrb[0].mxu0
      %v1936 = vadd.f32 %v1775, %v1935
      %v1937 = vpop.f32.mrb[0].mxu0
      %v1938 = vpop.f32.mrb[0].mxu0
      %v1939 = vadd.f32 %v1778, %v1938
      %v1940 = vpop.f32.mrb[0].mxu0
      %1941 = vmatprep.mubr.bf16.mxu0 %v913
      %1942 = vmatmul.mubr.bf16.gmra.mrb[0].mxu0 %v912
      %v1943 = vpop.f32.mrb[0].mxu0
      %v1944 = vadd.f32 %v1783, %v1943
      %v1945 = vpop.f32.mrb[0].mxu0
      %v1946 = vpop.f32.mrb[0].mxu0
      %v1947 = vadd.f32 %v1786, %v1946
      %v1948 = vpop.f32.mrb[0].mxu0
      %1949 = vmatprep.mubr.bf16.mxu0 %v916
      %1950 = vmatmul.mubr.bf16.gmra.mrb[0].mxu0 %v915
      %v1951 = vpop.f32.mrb[0].mxu0
      %v1952 = vadd.f32 %v1791, %v1951
      %v1953 = vpop.f32.mrb[0].mxu0
      %v1954 = vpop.f32.mrb[0].mxu0
      %v1955 = vadd.f32 %v1794, %v1954
      %v1956 = vpop.f32.mrb[0].mxu0
      %1957 = vmatprep.mubr.bf16.mxu0 %v919
      %1958 = vmatmul.mubr.bf16.gmra.mrb[0].mxu0 %v918
      %v1959 = vpop.f32.mrb[0].mxu0
      %v1960 = vadd.f32 %v1799, %v1959
      %v1961 = vpop.f32.mrb[0].mxu0
      %v1962 = vpop.f32.mrb[0].mxu0
      %v1963 = vadd.f32 %v1802, %v1962
      %v1964 = vpop.f32.mrb[0].mxu0
      %1965 = vmatprep.mubr.bf16.mxu0 %v922
      %1966 = vmatmul.mubr.bf16.gmra.mrb[0].mxu0 %v921
      %v1967 = vpop.f32.mrb[0].mxu0
      %v1968 = vadd.f32 %v1807, %v1967
      %v1969 = vpop.f32.mrb[0].mxu0
      %v1970 = vpop.f32.mrb[0].mxu0
      %v1971 = vadd.f32 %v1810, %v1970
      %v1972 = vpop.f32.mrb[0].mxu0
      %1973 = vmatprep.mubr.bf16.mxu0 %v925
      %1974 = vmatmul.mubr.bf16.gmra.mrb[0].mxu0 %v924
      %v1975 = vpop.f32.mrb[0].mxu0
      %v1976 = vadd.f32 %v1815, %v1975
      %v1977 = vpop.f32.mrb[0].mxu0
      %v1978 = vpop.f32.mrb[0].mxu0
      %v1979 = vadd.f32 %v1818, %v1978
      %v1980 = vpop.f32.mrb[0].mxu0
      %1981 = vmatprep.mubr.bf16.mxu0 %v928
      %1982 = vmatmul.mubr.bf16.gmra.mrb[0].mxu0 %v927
      %v1983 = vpop.f32.mrb[0].mxu0
      %v1984 = vadd.f32 %v1823, %v1983
      %v1985 = vpop.f32.mrb[0].mxu0
      %v1986 = vpop.f32.mrb[0].mxu0
      %v1987 = vadd.f32 %v1826, %v1986
      %v1988 = vpop.f32.mrb[0].mxu0
      %1989 = vmatprep.mubr.bf16.mxu0 %v931
      %1990 = vmatmul.mubr.bf16.gmra.mrb[0].mxu0 %v930
      %v1991 = vpop.f32.mrb[0].mxu0
      %v1992 = vadd.f32 %v1831, %v1991
      %v1993 = vpop.f32.mrb[0].mxu0
      %v1994 = vpop.f32.mrb[0].mxu0
      %v1995 = vadd.f32 %v1834, %v1994
      %v1996 = vpop.f32.mrb[0].mxu0
      %1997 = vdwg.mxu0
      %1998 = vmatprep.subr.bf16.mxu0 0
      %1999 = vmatpush1.bf16.msra.mxu0 %v1419
      %2000 = vmatprep.subr.bf16.mxu0 0
      %2001 = vmatpush1.bf16.msra.mxu0 %v1420
      %2002 = vmatprep.subr.bf16.mxu0 0
      %2003 = vmatpush1.bf16.msra.mxu0 %v1421
      %2004 = vmatprep.subr.bf16.mxu0 0
      %2005 = vmatpush1.bf16.msra.mxu0 %v1422
      %2006 = vmatprep.subr.bf16.mxu0 0
      %2007 = vmatpush1.bf16.msra.mxu0 %v1423
      %2008 = vmatprep.subr.bf16.mxu0 0
      %2009 = vmatpush1.bf16.msra.mxu0 %v1424
      %2010 = vmatprep.subr.bf16.mxu0 0
      %2011 = vmatpush1.bf16.msra.mxu0 %v1425
      %2012 = vmatprep.subr.bf16.mxu0 0
      %2013 = vmatpush1.bf16.msra.mxu0 %v1426
      %2014 = vmatprep.subr.bf16.mxu0 0
      %2015 = vmatpush1.bf16.msra.mxu0 %v1427
      %2016 = vmatprep.subr.bf16.mxu0 0
      %2017 = vmatpush1.bf16.msra.mxu0 %v1428
      %2018 = vmatprep.subr.bf16.mxu0 0
      %2019 = vmatpush1.bf16.msra.mxu0 %v1429
      %2020 = vmatprep.subr.bf16.mxu0 0
      %2021 = vmatpush1.bf16.msra.mxu0 %v1430
      %2022 = vmatprep.subr.bf16.mxu0 0
      %2023 = vmatpush1.bf16.msra.mxu0 %v1431
      %2024 = vmatprep.subr.bf16.mxu0 0
      %2025 = vmatpush1.bf16.msra.mxu0 %v1432
      %2026 = vmatprep.subr.bf16.mxu0 0
      %2027 = vmatpush1.bf16.msra.mxu0 %v1433
      %2028 = vmatprep.subr.bf16.mxu0 0
      %2029 = vmatpush1.bf16.msra.mxu0 %v1434
      %2030 = vmatprep.mubr.bf16.mxu0 %v888
      %2031 = vmatmul.mubr.bf16.gmra.mrb[0].mxu0 %v887
      %v2032 = vpop.f32.mrb[0].mxu0
      %v2033 = vadd.f32 %v1872, %v2032
      %v2034 = vpop.f32.mrb[0].mxu0
      %v2035 = vpop.f32.mrb[0].mxu0
      %v2036 = vadd.f32 %v1875, %v2035
      %v2037 = vpop.f32.mrb[0].mxu0
      %2038 = vmatprep.mubr.bf16.mxu0 %v891
      %2039 = vmatmul.mubr.bf16.gmra.mrb[0].mxu0 %v890
      %v2040 = vpop.f32.mrb[0].mxu0
      %v2041 = vadd.f32 %v1880, %v2040
      %v2042 = vpop.f32.mrb[0].mxu0
      %v2043 = vpop.f32.mrb[0].mxu0
      %v2044 = vadd.f32 %v1883, %v2043
      %v2045 = vpop.f32.mrb[0].mxu0
      %2046 = vmatprep.mubr.bf16.mxu0 %v894
      %2047 = vmatmul.mubr.bf16.gmra.mrb[0].mxu0 %v893
      %v2048 = vpop.f32.mrb[0].mxu0
      %v2049 = vadd.f32 %v1888, %v2048
      %v2050 = vpop.f32.mrb[0].mxu0
      %v2051 = vpop.f32.mrb[0].mxu0
      %v2052 = vadd.f32 %v1891, %v2051
      %v2053 = vpop.f32.mrb[0].mxu0
      %2054 = vmatprep.mubr.bf16.mxu0 %v897
      %2055 = vmatmul.mubr.bf16.gmra.mrb[0].mxu0 %v896
      %v2056 = vpop.f32.mrb[0].mxu0
      %v2057 = vadd.f32 %v1896, %v2056
      %v2058 = vpop.f32.mrb[0].mxu0
      %v2059 = vpop.f32.mrb[0].mxu0
      %v2060 = vadd.f32 %v1899, %v2059
      %v2061 = vpop.f32.mrb[0].mxu0
      %2062 = vmatprep.mubr.bf16.mxu0 %v900
      %2063 = vmatmul.mubr.bf16.gmra.mrb[0].mxu0 %v899
      %v2064 = vpop.f32.mrb[0].mxu0
      %v2065 = vadd.f32 %v1904, %v2064
      %v2066 = vpop.f32.mrb[0].mxu0
      %v2067 = vpop.f32.mrb[0].mxu0
      %v2068 = vadd.f32 %v1907, %v2067
      %v2069 = vpop.f32.mrb[0].mxu0
      %2070 = vmatprep.mubr.bf16.mxu0 %v903
      %2071 = vmatmul.mubr.bf16.gmra.mrb[0].mxu0 %v902
      %v2072 = vpop.f32.mrb[0].mxu0
      %v2073 = vadd.f32 %v1912, %v2072
      %v2074 = vpop.f32.mrb[0].mxu0
      %v2075 = vpop.f32.mrb[0].mxu0
      %v2076 = vadd.f32 %v1915, %v2075
      %v2077 = vpop.f32.mrb[0].mxu0
      %2078 = vmatprep.mubr.bf16.mxu0 %v906
      %2079 = vmatmul.mubr.bf16.gmra.mrb[0].mxu0 %v905
      %v2080 = vpop.f32.mrb[0].mxu0
      %v2081 = vadd.f32 %v1920, %v2080
      %v2082 = vpop.f32.mrb[0].mxu0
      %v2083 = vpop.f32.mrb[0].mxu0
      %v2084 = vadd.f32 %v1923, %v2083
      %v2085 = vpop.f32.mrb[0].mxu0
      %2086 = vmatprep.mubr.bf16.mxu0 %v909
      %2087 = vmatmul.mubr.bf16.gmra.mrb[0].mxu0 %v908
      %v2088 = vpop.f32.mrb[0].mxu0
      %v2089 = vadd.f32 %v1928, %v2088
      %v2090 = vpop.f32.mrb[0].mxu0
      %v2091 = vpop.f32.mrb[0].mxu0
      %v2092 = vadd.f32 %v1931, %v2091
      %v2093 = vpop.f32.mrb[0].mxu0
      %2094 = vmatprep.mubr.bf16.mxu0 %v912
      %2095 = vmatmul.mubr.bf16.gmra.mrb[0].mxu0 %v911
      %v2096 = vpop.f32.mrb[0].mxu0
      %v2097 = vadd.f32 %v1936, %v2096
      %v2098 = vpop.f32.mrb[0].mxu0
      %v2099 = vpop.f32.mrb[0].mxu0
      %v2100 = vadd.f32 %v1939, %v2099
      %v2101 = vpop.f32.mrb[0].mxu0
      %2102 = vmatprep.mubr.bf16.mxu0 %v915
      %2103 = vmatmul.mubr.bf16.gmra.mrb[0].mxu0 %v914
      %v2104 = vpop.f32.mrb[0].mxu0
      %v2105 = vadd.f32 %v1944, %v2104
      %v2106 = vpop.f32.mrb[0].mxu0
      %v2107 = vpop.f32.mrb[0].mxu0
      %v2108 = vadd.f32 %v1947, %v2107
      %v2109 = vpop.f32.mrb[0].mxu0
      %2110 = vmatprep.mubr.bf16.mxu0 %v918
      %2111 = vmatmul.mubr.bf16.gmra.mrb[0].mxu0 %v917
      %v2112 = vpop.f32.mrb[0].mxu0
      %v2113 = vadd.f32 %v1952, %v2112
      %v2114 = vpop.f32.mrb[0].mxu0
      %v2115 = vpop.f32.mrb[0].mxu0
      %v2116 = vadd.f32 %v1955, %v2115
      %v2117 = vpop.f32.mrb[0].mxu0
      %2118 = vmatprep.mubr.bf16.mxu0 %v921
      %2119 = vmatmul.mubr.bf16.gmra.mrb[0].mxu0 %v920
      %v2120 = vpop.f32.mrb[0].mxu0
      %v2121 = vadd.f32 %v1960, %v2120
      %v2122 = vpop.f32.mrb[0].mxu0
      %v2123 = vpop.f32.mrb[0].mxu0
      %v2124 = vadd.f32 %v1963, %v2123
      %v2125 = vpop.f32.mrb[0].mxu0
      %2126 = vmatprep.mubr.bf16.mxu0 %v924
      %2127 = vmatmul.mubr.bf16.gmra.mrb[0].mxu0 %v923
      %v2128 = vpop.f32.mrb[0].mxu0
      %v2129 = vadd.f32 %v1968, %v2128
      %v2130 = vpop.f32.mrb[0].mxu0
      %v2131 = vpop.f32.mrb[0].mxu0
      %v2132 = vadd.f32 %v1971, %v2131
      %v2133 = vpop.f32.mrb[0].mxu0
      %2134 = vmatprep.mubr.bf16.mxu0 %v927
      %2135 = vmatmul.mubr.bf16.gmra.mrb[0].mxu0 %v926
      %v2136 = vpop.f32.mrb[0].mxu0
      %v2137 = vadd.f32 %v1976, %v2136
      %v2138 = vpop.f32.mrb[0].mxu0
      %v2139 = vpop.f32.mrb[0].mxu0
      %v2140 = vadd.f32 %v1979, %v2139
      %v2141 = vpop.f32.mrb[0].mxu0
      %2142 = vmatprep.mubr.bf16.mxu0 %v930
      %2143 = vmatmul.mubr.bf16.gmra.mrb[0].mxu0 %v929
      %v2144 = vpop.f32.mrb[0].mxu0
      %v2145 = vadd.f32 %v1984, %v2144
      %v2146 = vpop.f32.mrb[0].mxu0
      %v2147 = vpop.f32.mrb[0].mxu0
      %v2148 = vadd.f32 %v1987, %v2147
      %v2149 = vpop.f32.mrb[0].mxu0
      %2150 = vmatprep.mubr.bf16.mxu0 %v882
      %2151 = vmatmul.mubr.bf16.gmra.mrb[0].mxu0 %v881
      %v2152 = vpop.f32.mrb[0].mxu0
      %v2153 = vadd.f32 %v1992, %v2152
      %v2154 = vpop.f32.mrb[0].mxu0
      %v2155 = vpop.f32.mrb[0].mxu0
      %v2156 = vadd.f32 %v1995, %v2155
      %v2157 = vpop.f32.mrb[0].mxu0
      %2158 = vdwg.mxu0
      %2159 = vmatprep.subr.bf16.mxu0 0
      %2160 = vmatpush1.bf16.msra.mxu0 %v1435
      %2161 = vmatprep.subr.bf16.mxu0 0
      %2162 = vmatpush1.bf16.msra.mxu0 %v1436
      %2163 = vmatprep.subr.bf16.mxu0 0
      %2164 = vmatpush1.bf16.msra.mxu0 %v1437
      %2165 = vmatprep.subr.bf16.mxu0 0
      %2166 = vmatpush1.bf16.msra.mxu0 %v1438
      %2167 = vmatprep.subr.bf16.mxu0 0
      %2168 = vmatpush1.bf16.msra.mxu0 %v1439
      %2169 = vmatprep.subr.bf16.mxu0 0
      %2170 = vmatpush1.bf16.msra.mxu0 %v1440
      %2171 = vmatprep.subr.bf16.mxu0 0
      %2172 = vmatpush1.bf16.msra.mxu0 %v1441
      %2173 = vmatprep.subr.bf16.mxu0 0
      %2174 = vmatpush1.bf16.msra.mxu0 %v1442
      %2175 = vmatprep.subr.bf16.mxu0 0
      %2176 = vmatpush1.bf16.msra.mxu0 0
      %2177 = vmatprep.subr.bf16.mxu0 0
      %2178 = vmatpush1.bf16.msra.mxu0 0
      %2179 = vmatprep.subr.bf16.mxu0 0
      %2180 = vmatpush1.bf16.msra.mxu0 0
      %2181 = vmatprep.subr.bf16.mxu0 0
      %2182 = vmatpush1.bf16.msra.mxu0 0
      %2183 = vmatprep.subr.bf16.mxu0 0
      %2184 = vmatpush1.bf16.msra.mxu0 0
      %2185 = vmatprep.subr.bf16.mxu0 0
      %2186 = vmatpush1.bf16.msra.mxu0 0
      %2187 = vmatprep.subr.bf16.mxu0 0
      %2188 = vmatpush1.bf16.msra.mxu0 0
      %2189 = vmatprep.subr.bf16.mxu0 0
      %2190 = vmatpush1.bf16.msra.mxu0 0
      %2191 = vmatprep.mubr.bf16.mxu0 0
      %2192 = vmatmul.mubr.bf16.gmra.mrb[0].mxu0 %v889
      %v2193 = vpop.f32.mrb[0].mxu0
      %v2194 = vadd.f32 %v2033, %v2193
      %v2195 = vpop.f32.mrb[0].mxu0
      %v2196 = vpop.f32.mrb[0].mxu0
      %v2197 = vadd.f32 %v2036, %v2196
      %v2198 = vpop.f32.mrb[0].mxu0
      %2199 = vmatprep.mubr.bf16.mxu0 0
      %2200 = vmatmul.mubr.bf16.gmra.mrb[0].mxu0 %v892
      %v2201 = vpop.f32.mrb[0].mxu0
      %v2202 = vadd.f32 %v2041, %v2201
      %v2203 = vpop.f32.mrb[0].mxu0
      %v2204 = vpop.f32.mrb[0].mxu0
      %v2205 = vadd.f32 %v2044, %v2204
      %v2206 = vpop.f32.mrb[0].mxu0
      %2207 = vmatprep.mubr.bf16.mxu0 0
      %2208 = vmatmul.mubr.bf16.gmra.mrb[0].mxu0 %v895
      %v2209 = vpop.f32.mrb[0].mxu0
      %v2210 = vadd.f32 %v2049, %v2209
      %v2211 = vpop.f32.mrb[0].mxu0
      %v2212 = vpop.f32.mrb[0].mxu0
      %v2213 = vadd.f32 %v2052, %v2212
      %v2214 = vpop.f32.mrb[0].mxu0
      %2215 = vmatprep.mubr.bf16.mxu0 0
      %2216 = vmatmul.mubr.bf16.gmra.mrb[0].mxu0 %v898
      %v2217 = vpop.f32.mrb[0].mxu0
      %v2218 = vadd.f32 %v2057, %v2217
      %v2219 = vpop.f32.mrb[0].mxu0
      %v2220 = vpop.f32.mrb[0].mxu0
      %v2221 = vadd.f32 %v2060, %v2220
      %v2222 = vpop.f32.mrb[0].mxu0
      %2223 = vmatprep.mubr.bf16.mxu0 0
      %2224 = vmatmul.mubr.bf16.gmra.mrb[0].mxu0 %v901
      %v2225 = vpop.f32.mrb[0].mxu0
      %v2226 = vadd.f32 %v2065, %v2225
      %v2227 = vpop.f32.mrb[0].mxu0
      %v2228 = vpop.f32.mrb[0].mxu0
      %v2229 = vadd.f32 %v2068, %v2228
      %v2230 = vpop.f32.mrb[0].mxu0
      %2231 = vmatprep.mubr.bf16.mxu0 0
      %2232 = vmatmul.mubr.bf16.gmra.mrb[0].mxu0 %v904
      %v2233 = vpop.f32.mrb[0].mxu0
      %v2234 = vadd.f32 %v2073, %v2233
      %v2235 = vpop.f32.mrb[0].mxu0
      %v2236 = vpop.f32.mrb[0].mxu0
      %v2237 = vadd.f32 %v2076, %v2236
      %v2238 = vpop.f32.mrb[0].mxu0
      %2239 = vmatprep.mubr.bf16.mxu0 0
      %2240 = vmatmul.mubr.bf16.gmra.mrb[0].mxu0 %v907
      %v2241 = vpop.f32.mrb[0].mxu0
      %v2242 = vadd.f32 %v2081, %v2241
      %v2243 = vpop.f32.mrb[0].mxu0
      %v2244 = vpop.f32.mrb[0].mxu0
      %v2245 = vadd.f32 %v2084, %v2244
      %v2246 = vpop.f32.mrb[0].mxu0
      %2247 = vmatprep.mubr.bf16.mxu0 0
      %2248 = vmatmul.mubr.bf16.gmra.mrb[0].mxu0 %v910
      %v2249 = vpop.f32.mrb[0].mxu0
      %v2250 = vadd.f32 %v2089, %v2249
      %v2251 = vpop.f32.mrb[0].mxu0
      %v2252 = vpop.f32.mrb[0].mxu0
      %v2253 = vadd.f32 %v2092, %v2252
      %v2254 = vpop.f32.mrb[0].mxu0
      %2255 = vmatprep.mubr.bf16.mxu0 0
      %2256 = vmatmul.mubr.bf16.gmra.mrb[0].mxu0 %v913
      %v2257 = vpop.f32.mrb[0].mxu0
      %v2258 = vadd.f32 %v2097, %v2257
      %v2259 = vpop.f32.mrb[0].mxu0
      %v2260 = vpop.f32.mrb[0].mxu0
      %v2261 = vadd.f32 %v2100, %v2260
      %v2262 = vpop.f32.mrb[0].mxu0
      %2263 = vmatprep.mubr.bf16.mxu0 0
      %2264 = vmatmul.mubr.bf16.gmra.mrb[0].mxu0 %v916
      %v2265 = vpop.f32.mrb[0].mxu0
      %v2266 = vadd.f32 %v2105, %v2265
      %v2267 = vpop.f32.mrb[0].mxu0
      %v2268 = vpop.f32.mrb[0].mxu0
      %v2269 = vadd.f32 %v2108, %v2268
      %v2270 = vpop.f32.mrb[0].mxu0
      %2271 = vmatprep.mubr.bf16.mxu0 0
      %2272 = vmatmul.mubr.bf16.gmra.mrb[0].mxu0 %v919
      %v2273 = vpop.f32.mrb[0].mxu0
      %v2274 = vadd.f32 %v2113, %v2273
      %v2275 = vpop.f32.mrb[0].mxu0
      %v2276 = vpop.f32.mrb[0].mxu0
      %v2277 = vadd.f32 %v2116, %v2276
      %v2278 = vpop.f32.mrb[0].mxu0
      %2279 = vmatprep.mubr.bf16.mxu0 0
      %2280 = vmatmul.mubr.bf16.gmra.mrb[0].mxu0 %v922
      %v2281 = vpop.f32.mrb[0].mxu0
      %v2282 = vadd.f32 %v2121, %v2281
      %v2283 = vpop.f32.mrb[0].mxu0
      %v2284 = vpop.f32.mrb[0].mxu0
      %v2285 = vadd.f32 %v2124, %v2284
      %v2286 = vpop.f32.mrb[0].mxu0
      %2287 = vmatprep.mubr.bf16.mxu0 0
      %2288 = vmatmul.mubr.bf16.gmra.mrb[0].mxu0 %v925
      %v2289 = vpop.f32.mrb[0].mxu0
      %v2290 = vadd.f32 %v2129, %v2289
      %v2291 = vpop.f32.mrb[0].mxu0
      %v2292 = vpop.f32.mrb[0].mxu0
      %v2293 = vadd.f32 %v2132, %v2292
      %v2294 = vpop.f32.mrb[0].mxu0
      %2295 = vmatprep.mubr.bf16.mxu0 0
      %2296 = vmatmul.mubr.bf16.gmra.mrb[0].mxu0 %v928
      %v2297 = vpop.f32.mrb[0].mxu0
      %v2298 = vadd.f32 %v2137, %v2297
      %v2299 = vpop.f32.mrb[0].mxu0
      %v2300 = vpop.f32.mrb[0].mxu0
      %v2301 = vadd.f32 %v2140, %v2300
      %v2302 = vpop.f32.mrb[0].mxu0
      %2303 = vmatprep.mubr.bf16.mxu0 0
      %2304 = vmatmul.mubr.bf16.gmra.mrb[0].mxu0 %v931
      %v2305 = vpop.f32.mrb[0].mxu0
      %v2306 = vadd.f32 %v2145, %v2305
      %v2307 = vpop.f32.mrb[0].mxu0
      %v2308 = vpop.f32.mrb[0].mxu0
      %v2309 = vadd.f32 %v2148, %v2308
      %v2310 = vpop.f32.mrb[0].mxu0
      %2311 = vmatprep.mubr.bf16.mxu0 0
      %2312 = vmatmul.mubr.bf16.gmra.mrb[0].mxu0 %v883
      %v2313 = vpop.f32.mrb[0].mxu0
      %v2314 = vadd.f32 %v2153, %v2313
      %v2315 = vpop.f32.mrb[0].mxu0
      %v2316 = vpop.f32.mrb[0].mxu0
      %v2317 = vadd.f32 %v2156, %v2316
      %v2318 = vpop.f32.mrb[0].mxu0
      %2319 = vdwg.mxu0
      %2320 = vst [vmem:[%s289] sm:$0xff] %v2194
      %2321 = vst [vmem:[%s289 + $0x8] sm:$0xff] %v2197
      %2322 = vst [vmem:[%s289 + $0x10] sm:$0xff] %v2202
      %2323 = vst [vmem:[%s289 + $0x18] sm:$0xff] %v2205
      %2324 = vst [vmem:[%s289 + $0x20] sm:$0xff] %v2210
      %2325 = vst [vmem:[%s289 + $0x28] sm:$0xff] %v2213
      %2326 = vst [vmem:[%s289 + $0x30] sm:$0xff] %v2218
      %2327 = vst [vmem:[%s289 + $0x38] sm:$0xff] %v2221
      %2328 = vst [vmem:[%s289 + $0x40] sm:$0xff] %v2226
      %2329 = vst [vmem:[%s289 + $0x48] sm:$0xff] %v2229
      %2330 = vst [vmem:[%s289 + $0x50] sm:$0xff] %v2234
      %2331 = vst [vmem:[%s289 + $0x58] sm:$0xff] %v2237
      %2332 = vst [vmem:[%s289 + $0x60] sm:$0xff] %v2242
      %2333 = vst [vmem:[%s289 + $0x68] sm:$0xff] %v2245
      %2334 = vst [vmem:[%s289 + $0x70] sm:$0xff] %v2250
      %2335 = vst [vmem:[%s289 + $0x78] sm:$0xff] %v2253
      %2336 = vst [vmem:[%s289 + $0x80] sm:$0xff] %v2258
      %2337 = vst [vmem:[%s289 + $0x88] sm:$0xff] %v2261
      %2338 = vst [vmem:[%s289 + $0x90] sm:$0xff] %v2266
      %2339 = vst [vmem:[%s289 + $0x98] sm:$0xff] %v2269
      %2340 = vst [vmem:[%s289 + $0xa0] sm:$0xff] %v2274
      %2341 = vst [vmem:[%s289 + $0xa8] sm:$0xff] %v2277
      %2342 = vst [vmem:[%s289 + $0xb0] sm:$0xff] %v2282
      %2343 = vst [vmem:[%s289 + $0xb8] sm:$0xff] %v2285
      %2344 = vst [vmem:[%s289 + $0xc0] sm:$0xff] %v2290
      %2345 = vst [vmem:[%s289 + $0xc8] sm:$0xff] %v2293
      %2346 = vst [vmem:[%s289 + $0xd0] sm:$0xff] %v2298
      %2347 = vst [vmem:[%s289 + $0xd8] sm:$0xff] %v2301
      %2348 = vst [vmem:[%s289 + $0xe0] sm:$0xff] %v2306
      %2349 = vst [vmem:[%s289 + $0xe8] sm:$0xff] %v2309
      %2350 = vst [vmem:[%s289 + $0xf0] sm:$0xff] %v2314
      %2351 = vst [vmem:[%s289 + $0xf8] sm:$0xff] %v2317
      %v2352 = vadd.f32 %v2194, %v2197
      %v2353 = vadd.f32 %v2352, %v2202
      %v2354 = vadd.f32 %v2353, %v2205
      %v2355 = vadd.f32 %v2354, %v2210
      %v2356 = vadd.f32 %v2355, %v2213
      %v2357 = vadd.f32 %v2356, %v2218
      %v2358 = vadd.f32 %v2357, %v2221
      %v2359 = vadd.f32 %v2358, %v2226
      %v2360 = vadd.f32 %v2359, %v2229
      %v2361 = vadd.f32 %v2360, %v2234
      %v2362 = vadd.f32 %v2361, %v2237
      %v2363 = vadd.f32 %v2362, %v2242
      %v2364 = vadd.f32 %v2363, %v2245
      %v2365 = vadd.f32 %v2364, %v2250
      %v2366 = vadd.f32 %v2365, %v2253
      %v2367 = vadd.f32 %v2366, %v2258
      %v2368 = vadd.f32 %v2367, %v2261
      %v2369 = vadd.f32 %v2368, %v2266
      %v2370 = vadd.f32 %v2369, %v2269
      %v2371 = vadd.f32 %v2370, %v2274
      %v2372 = vadd.f32 %v2371, %v2277
      %v2373 = vadd.f32 %v2372, %v2282
      %v2374 = vadd.f32 %v2373, %v2285
      %v2375 = vadd.f32 %v2374, %v2290
      %v2376 = vadd.f32 %v2375, %v2293
      %v2377 = vadd.f32 %v2376, %v2298
      %v2378 = vadd.f32 %v2377, %v2301
      %v2379 = vadd.f32 %v2378, %v2306
      %v2380 = vadd.f32 %v2379, %v2309
      %v2381 = vadd.f32 %v2380, %v2314
      %v2382 = vadd.f32 %v2381, %v2317
      %v2383 = vrot.slane %v2382, 4
      %v2384 = vadd.f32 %v2382, %v2383
      %v2385 = vrot.slane %v2384, 2
      %v2386 = vadd.f32 %v2384, %v2385
      %v2387 = vrot.slane %v2386, 1
      %v2388 = vadd.f32 %v2386, %v2387
      %2389 = vst [vmem:[%s292] sm:$0x1] %v2388
      %v2390 = vmul.f32 %v2194, %v2194
      %v2391 = vmul.f32 %v2197, %v2197
      %v2392 = vmul.f32 %v2202, %v2202
      %v2393 = vmul.f32 %v2205, %v2205
      %v2394 = vmul.f32 %v2210, %v2210
      %v2395 = vmul.f32 %v2213, %v2213
      %v2396 = vmul.f32 %v2218, %v2218
      %v2397 = vmul.f32 %v2221, %v2221
      %v2398 = vmul.f32 %v2226, %v2226
      %v2399 = vmul.f32 %v2229, %v2229
      %v2400 = vmul.f32 %v2234, %v2234
      %v2401 = vmul.f32 %v2237, %v2237
      %v2402 = vmul.f32 %v2242, %v2242
      %v2403 = vmul.f32 %v2245, %v2245
      %v2404 = vmul.f32 %v2250, %v2250
      %v2405 = vmul.f32 %v2253, %v2253
      %v2406 = vmul.f32 %v2258, %v2258
      %v2407 = vmul.f32 %v2261, %v2261
      %v2408 = vmul.f32 %v2266, %v2266
      %v2409 = vmul.f32 %v2269, %v2269
      %v2410 = vmul.f32 %v2274, %v2274
      %v2411 = vmul.f32 %v2277, %v2277
      %v2412 = vmul.f32 %v2282, %v2282
      %v2413 = vmul.f32 %v2285, %v2285
      %v2414 = vmul.f32 %v2290, %v2290
      %v2415 = vmul.f32 %v2293, %v2293
      %v2416 = vmul.f32 %v2298, %v2298
      %v2417 = vmul.f32 %v2301, %v2301
      %v2418 = vmul.f32 %v2306, %v2306
      %v2419 = vmul.f32 %v2309, %v2309
      %v2420 = vmul.f32 %v2314, %v2314
      %v2421 = vmul.f32 %v2317, %v2317
      %v2422 = vadd.f32 %v2390, %v2391
      %v2423 = vadd.f32 %v2422, %v2392
      %v2424 = vadd.f32 %v2423, %v2393
      %v2425 = vadd.f32 %v2424, %v2394
      %v2426 = vadd.f32 %v2425, %v2395
      %v2427 = vadd.f32 %v2426, %v2396
      %v2428 = vadd.f32 %v2427, %v2397
      %v2429 = vadd.f32 %v2428, %v2398
      %v2430 = vadd.f32 %v2429, %v2399
      %v2431 = vadd.f32 %v2430, %v2400
      %v2432 = vadd.f32 %v2431, %v2401
      %v2433 = vadd.f32 %v2432, %v2402
      %v2434 = vadd.f32 %v2433, %v2403
      %v2435 = vadd.f32 %v2434, %v2404
      %v2436 = vadd.f32 %v2435, %v2405
      %v2437 = vadd.f32 %v2436, %v2406
      %v2438 = vadd.f32 %v2437, %v2407
      %v2439 = vadd.f32 %v2438, %v2408
      %v2440 = vadd.f32 %v2439, %v2409
      %v2441 = vadd.f32 %v2440, %v2410
      %v2442 = vadd.f32 %v2441, %v2411
      %v2443 = vadd.f32 %v2442, %v2412
      %v2444 = vadd.f32 %v2443, %v2413
      %v2445 = vadd.f32 %v2444, %v2414
      %v2446 = vadd.f32 %v2445, %v2415
      %v2447 = vadd.f32 %v2446, %v2416
      %v2448 = vadd.f32 %v2447, %v2417
      %v2449 = vadd.f32 %v2448, %v2418
      %v2450 = vadd.f32 %v2449, %v2419
      %v2451 = vadd.f32 %v2450, %v2420
      %v2452 = vadd.f32 %v2451, %v2421
      %v2453 = vrot.slane %v2452, 4
      %v2454 = vadd.f32 %v2452, %v2453
      %v2455 = vrot.slane %v2454, 2
      %v2456 = vadd.f32 %v2454, %v2455
      %v2457 = vrot.slane %v2456, 1
      %v2458 = vadd.f32 %v2456, %v2457
      %2459 = vst [vmem:[%s295] sm:$0x1] %v2458
      %p2460 = scmp.lt.s32.totalorder %s19, 1
      %s2461 = scalar_select %p2460, %s19, 1
      %s2462 = smul.addr %s2461, 32
      %s2463 = smul.addr %s2462, 8
      %s2464 = scalar_lea.vmem %s5, %s2463
      %p2465 = scmp.lt.s32.totalorder %s19, 1
      %s2466 = scalar_select %p2465, %s19, 1
      %s2467 = scalar_lea.vmem %s6, %s2466
      %p2468 = scmp.lt.s32.totalorder %s19, 1
      %s2469 = scalar_select %p2468, %s19, 1
      %s2470 = scalar_lea.vmem %s7, %s2469
      // Predicated region
      $region41: #{decoder_block_forward.4} parent=39 // pred_check
        %p2471 = pneg %p147
      $region42: #{decoder_block_forward.4} parent=39 // pred_check_branch
        %2473 = sbr.rel (%p2471) target = $region44
      $region43: #{decoder_block_forward.4} parent=39 // pred_region
        _
      $region44: #{decoder_block_forward.4} parent=39 // pred_fallthru
        _
      // Predicated region
      $region45: #{decoder_block_forward.4} parent=39 // pred_check
        %p2474 = pneg %p173
      $region46: #{decoder_block_forward.4} parent=39 // pred_check_branch
        %2476 = sbr.rel (%p2474) target = $region48
      $region47: #{decoder_block_forward.4} parent=39 // pred_region
        _
      $region48: #{decoder_block_forward.4} parent=39 // pred_fallthru
        _
      // Predicated region
      $region49: #{decoder_block_forward.4} parent=39 // pred_check
        %p2477 = pneg %p199
      $region50: #{decoder_block_forward.4} parent=39 // pred_check_branch
        %2479 = sbr.rel (%p2477) target = $region52
      $region51: #{decoder_block_forward.4} parent=39 // pred_region
        _
      $region52: #{decoder_block_forward.4} parent=39 // pred_fallthru
        _
    $region40: #{decoder_block_forward.4} parent=5 // pred_fallthru
      _
    %p2480 = scmp.le.s32.totalorder 2, %s14
    // Predicated region
    $region53: #{decoder_block_forward.4} parent=5 // pred_check
      %p2481 = pneg %p2480
    $region54: #{decoder_block_forward.4} parent=5 // pred_check_branch
      %2483 = sbr.rel (%p2481) target = $region56
    $region55: #{decoder_block_forward.4} parent=5 // pred_region
      %s2484 = ssub.s32 %s14, 2
      // Predicated region
      $region57: #{decoder_block_forward.4} parent=55 // pred_check
        %p2485 = pneg %p153
      $region58: #{decoder_block_forward.4} parent=55 // pred_check_branch
        %2487 = sbr.rel (%p2485) target = $region60
      $region59: #{decoder_block_forward.4} parent=55 // pred_region
        %p2488 = scmp.lt.s32.totalorder %s20, 1
        %s2489 = scalar_select %p2488, %s20, 1
        %s2490 = smul.addr %s2489, 32
        %s2491 = smul.addr %s2490, 8
        %s2492 = scalar_lea.vmem %s5, %s2491
      $region60: #{decoder_block_forward.4} parent=55 // pred_fallthru
        _
      // Predicated region
      $region61: #{decoder_block_forward.4} parent=55 // pred_check
        %p2493 = pneg %p179
      $region62: #{decoder_block_forward.4} parent=55 // pred_check_branch
        %2495 = sbr.rel (%p2493) target = $region64
      $region63: #{decoder_block_forward.4} parent=55 // pred_region
        %p2496 = scmp.lt.s32.totalorder %s20, 1
        %s2497 = scalar_select %p2496, %s20, 1
        %s2498 = scalar_lea.vmem %s6, %s2497
      $region64: #{decoder_block_forward.4} parent=55 // pred_fallthru
        _
      // Predicated region
      $region65: #{decoder_block_forward.4} parent=55 // pred_check
        %p2499 = pneg %p205
      $region66: #{decoder_block_forward.4} parent=55 // pred_check_branch
        %2501 = sbr.rel (%p2499) target = $region68
      $region67: #{decoder_block_forward.4} parent=55 // pred_region
        %p2502 = scmp.lt.s32.totalorder %s20, 1
        %s2503 = scalar_select %p2502, %s20, 1
        %s2504 = scalar_lea.vmem %s7, %s2503
      $region68: #{decoder_block_forward.4} parent=55 // pred_fallthru
        _
    $region56: #{decoder_block_forward.4} parent=5 // pred_fallthru
      _
  $region6: #{decoder_block_forward.4} parent=0 // loop_footer
    %s18 = sadd.s32 1, %s14
  $region7: #{decoder_block_forward.4} parent=0 // loop_footer_branch
    %13 = sbr.rel target = $region3
  $region8: #{decoder_block_forward.4} parent=0 // loop_exit
    _

</llo_original>
